<compile_context>
chip_gen: v7x
topology: tpu7x:2x2x1
jax: 0.10.0
libtpu: 0.0.40
codegen_flags: <defaults>
</compile_context>

<pallas_src>
import functools

import jax
import jax.numpy as jnp
from jax.experimental import pallas as pl
from jax.experimental.pallas import tpu as pltpu

_VAR_EPS = 1e-6


def _elu_plus_one(x):
    # elu(x) + 1 with an eps floor; exp argument clamped so the dead branch
    # cannot produce inf (keeps a potential autodiff pass NaN-free).
    return jnp.where(x > 0.0, x + 1.0, jnp.exp(jnp.minimum(x, 0.0))) + _VAR_EPS


# ----------------------------------------------------------------------------
# Fused MTS3 kernel: one grid step == one episode (manager update + H-step
# worker scan).  All rows of per-window tensors are time-major: row = t*B + b.
# ----------------------------------------------------------------------------
def _mts3_fused_kernel(
        # per-episode tensor blocks
        obs_ref, actw_ref, actm_ref, valid_ref,
        # manager: abstract obs encoder (time embedding folded into mo_b1t)
        mo_w1, mo_b1t, mo_w2, mo_b2,
        # manager: abstract act encoder (time embedding folded into ma_b1t)
        ma_w1, ma_b1t, ma_w2, ma_b2,
        # manager: band-diagonal task transition / action coupling / noise
        tA, tC, tQ,
        # worker: obs encoder
        wo_w1, wo_b1, wo_w2, wo_b2,
        # worker: state transition / task coupling / control matrix / noise
        sA, sD, sB, sQ,
        # worker: SplitDiagGaussianDecoder (mean net + var net)
        dm_w1, dm_b1, dm_w2, dm_b2,
        dv_w1, dv_b1, dv_w2, dv_b2,
        # outputs
        pom_ref, pov_ref, ptm_ref, ptc_ref, prm_ref, prc_ref, aam_ref,
        # scratch: manager carry, worker carry, per-window decoder staging
        t_mu_u, t_mu_l, t_cu, t_cl, t_cs,
        s_mu_u, s_mu_l, s_cu, s_cl, s_cs,
        dmu_scr, dml_scr, dcu_scr, dcl_scr, dcs_scr,
        *, lod, H, B, init_covar_m, init_covar_w):
    f32, bf16 = jnp.float32, jnp.bfloat16
    lsd = 2 * lod
    k = pl.program_id(0)

    @pl.when(k == 0)
    def _():
        t_mu_u[...] = jnp.zeros_like(t_mu_u)
        t_mu_l[...] = jnp.zeros_like(t_mu_l)
        t_cu[...] = jnp.full_like(t_cu, init_covar_m)
        t_cl[...] = jnp.full_like(t_cl, init_covar_m)
        t_cs[...] = jnp.ones_like(t_cs)
        s_mu_u[...] = jnp.zeros_like(s_mu_u)
        s_mu_l[...] = jnp.zeros_like(s_mu_l)
        s_cu[...] = jnp.full_like(s_cu, init_covar_w)
        s_cl[...] = jnp.full_like(s_cl, init_covar_w)
        s_cs[...] = jnp.ones_like(s_cs)

    # shared per-window loads (rows are time-major: row = t*B + b)
    obs_bf = obs_ref[0].astype(bf16)                       # (H*B, OBS)
    valid = valid_ref[0]                                   # (H*B, 1)

    # ===================== MANAGER (one update per episode) =================
    # abstract obs encoder, batched over the H*B window rows
    ho = jnp.maximum(
        jnp.dot(obs_bf, mo_w1[...], preferred_element_type=f32)
        + mo_b1t[...], 0.0)
    zo = (jnp.dot(ho.astype(bf16), mo_w2[...], preferred_element_type=f32)
          + mo_b2[...])
    beta_mean = zo[:, :lod]
    beta_var = _elu_plus_one(zo[:, lod:])

    # masked Bayesian aggregation of the H latent observations
    prec_o = jnp.where(valid > 0.5, 1.0 / beta_var, 0.0)   # (H*B, lod)
    wmean_o = prec_o * beta_mean
    s_obs = prec_o[0:B]
    m_obs = wmean_o[0:B]
    for h in range(1, H):
        s_obs = s_obs + prec_o[h * B:(h + 1) * B]
        m_obs = m_obs + wmean_o[h * B:(h + 1) * B]

    # task update: split-covariance Kalman conditioning (memory=True)
    mu_u, mu_l = t_mu_u[...], t_mu_l[...]
    cu, cl, cs = t_cu[...], t_cl[...], t_cs[...]
    inv_den = 1.0 / (1.0 + cu * s_obs)
    gain = (m_obs - s_obs * mu_u) * inv_den
    post_u = mu_u + cu * gain
    post_l = mu_l + cs * gain
    pcov_u = cu * inv_den
    pcov_s = cs * inv_den
    pcov_l = cl - cs * cs * s_obs * inv_den

    ptm_ref[0] = jnp.concatenate([post_u, post_l], axis=-1)
    ptc_ref[0] = jnp.concatenate([pcov_u, pcov_l, pcov_s], axis=-1)

    # abstract action encoder on the NEXT window's actions + skill inference
    act_bf = actm_ref[0].astype(bf16)
    ha = jnp.maximum(
        jnp.dot(act_bf, ma_w1[...], preferred_element_type=f32)
        + ma_b1t[...], 0.0)
    za = (jnp.dot(ha.astype(bf16), ma_w2[...], preferred_element_type=f32)
          + ma_b2[...])
    alpha_mean = za[:, :lsd]
    alpha_var = _elu_plus_one(za[:, lsd:])
    prec_a = 1.0 / alpha_var                               # (H*B, lsd)
    wmean_a = prec_a * alpha_mean
    s_act = prec_a[0:B]
    m_act = wmean_a[0:B]
    for h in range(1, H):
        s_act = s_act + prec_a[h * B:(h + 1) * B]
        m_act = m_act + wmean_a[h * B:(h + 1) * B]
    inv_da = 1.0 / (1.0 + s_act)            # N(0, I) skill prior, memory=False
    abs_act_mean = m_act * inv_da
    abs_act_var = inv_da
    aam_ref[0] = abs_act_mean

    # manager predict: band-diagonal transition + abstract-action coupling
    a11, a12, a21, a22 = tA[0], tA[1], tA[2], tA[3]
    c11, c12, c21, c22 = tC[0], tC[1], tC[2], tC[3]
    qmu, qml = tQ[0], tQ[1]
    au, al = abs_act_mean[:, :lod], abs_act_mean[:, lod:]
    qau, qal = abs_act_var[:, :lod], abs_act_var[:, lod:]
    nmu_u = a11 * post_u + a12 * post_l + c11 * au + c12 * al
    nmu_l = a21 * post_u + a22 * post_l + c21 * au + c22 * al
    ncov_u = (a11 * a11 * pcov_u + 2.0 * a11 * a12 * pcov_s
              + a12 * a12 * pcov_l + c11 * c11 * qau + c12 * c12 * qal + qmu)
    ncov_l = (a21 * a21 * pcov_u + 2.0 * a21 * a22 * pcov_s
              + a22 * a22 * pcov_l + c21 * c21 * qau + c22 * c22 * qal + qml)
    ncov_s = (a11 * a21 * pcov_u + (a11 * a22 + a12 * a21) * pcov_s
              + a12 * a22 * pcov_l + c11 * c21 * qau + c12 * c22 * qal)

    prm_ref[0] = jnp.concatenate([nmu_u, nmu_l], axis=-1)
    prc_ref[0] = jnp.concatenate([ncov_u, ncov_l, ncov_s], axis=-1)

    t_mu_u[...] = nmu_u
    t_mu_l[...] = nmu_l
    t_cu[...] = ncov_u
    t_cl[...] = ncov_l
    t_cs[...] = ncov_s

    # ===================== WORKER (H-step scan per episode) =================
    # batched obs encoder + control projection for the whole window
    hz = jnp.maximum(
        jnp.dot(obs_bf, wo_w1[...], preferred_element_type=f32)
        + wo_b1[...], 0.0)
    z = (jnp.dot(hz.astype(bf16), wo_w2[...], preferred_element_type=f32)
         + wo_b2[...])
    om_all = z[:, :lod]
    prec_all = jnp.where(valid > 0.5, 1.0 / _elu_plus_one(z[:, lod:]), 0.0)
    ctrl_all = jnp.dot(actw_ref[0].astype(bf16), sB[...],
                       preferred_element_type=f32)         # (H*B, lsd)

    # per-window task coupling from this episode's task POSTERIOR (in-register)
    d11, d12, d21, d22 = sD[0], sD[1], sD[2], sD[3]
    qwu, qwl = sQ[0], sQ[1]
    add_mu_u = d11 * post_u + d12 * post_l
    add_mu_l = d21 * post_u + d22 * post_l
    add_cu = (d11 * d11 * pcov_u + 2.0 * d11 * d12 * pcov_s
              + d12 * d12 * pcov_l + qwu)
    add_cl = (d21 * d21 * pcov_u + 2.0 * d21 * d22 * pcov_s
              + d22 * d22 * pcov_l + qwl)
    add_cs = (d11 * d21 * pcov_u + (d11 * d22 + d12 * d21) * pcov_s
              + d12 * d22 * pcov_l)

    b11, b12, b21, b22 = sA[0], sA[1], sA[2], sA[3]

    smu_u, smu_l = s_mu_u[...], s_mu_l[...]
    scu, scl, scs = s_cu[...], s_cl[...], s_cs[...]

    # TODO(synk): for large H (MTS3 typically ~30+) switch this unrolled loop
    #             to lax.fori_loop with pl.ds slices to bound live ranges.
    for t in range(H):
        r0, r1 = t * B, (t + 1) * B
        prec_t = prec_all[r0:r1]
        om_t = om_all[r0:r1]
        # obs update (split-covariance Kalman conditioning)
        inv_d = 1.0 / (1.0 + scu * prec_t)
        gain = prec_t * (om_t - smu_u) * inv_d
        wpost_u = smu_u + scu * gain
        wpost_l = smu_l + scs * gain
        wcov_u = scu * inv_d
        wcov_s = scs * inv_d
        wcov_l = scl - scs * scs * prec_t * inv_d
        # state predict (band-diagonal + control + task coupling)
        ctrl_t = ctrl_all[r0:r1]
        smu_u = b11 * wpost_u + b12 * wpost_l + ctrl_t[:, :lod] + add_mu_u
        smu_l = b21 * wpost_u + b22 * wpost_l + ctrl_t[:, lod:] + add_mu_l
        scu = (b11 * b11 * wcov_u + 2.0 * b11 * b12 * wcov_s
               + b12 * b12 * wcov_l + add_cu)
        scl = (b21 * b21 * wcov_u + 2.0 * b21 * b22 * wcov_s
               + b22 * b22 * wcov_l + add_cl)
        scs = (b11 * b21 * wcov_u + (b11 * b22 + b12 * b21) * wcov_s
               + b12 * b22 * wcov_l + add_cs)
        # stage the new prior belief for the batched decoder
        dmu_scr[r0:r1, :] = smu_u
        dml_scr[r0:r1, :] = smu_l
        dcu_scr[r0:r1, :] = scu
        dcl_scr[r0:r1, :] = scl
        dcs_scr[r0:r1, :] = scs

    s_mu_u[...] = smu_u
    s_mu_l[...] = smu_l
    s_cu[...] = scu
    s_cl[...] = scl
    s_cs[...] = scs

    # batched SplitDiagGaussianDecoder over the whole window (4 matmuls)
    mean_in = jnp.concatenate([dmu_scr[...], dml_scr[...]], axis=-1)
    hm = jnp.maximum(
        jnp.dot(mean_in.astype(bf16), dm_w1[...], preferred_element_type=f32)
        + dm_b1[...], 0.0)
    pom_ref[0] = (jnp.dot(hm.astype(bf16), dm_w2[...],
                          preferred_element_type=f32) + dm_b2[...])

    var_in = jnp.concatenate([dcu_scr[...], dcl_scr[...], dcs_scr[...]],
                             axis=-1)
    hv = jnp.maximum(
        jnp.dot(var_in.astype(bf16), dv_w1[...], preferred_element_type=f32)
        + dv_b1[...], 0.0)
    pov_ref[0] = _elu_plus_one(
        jnp.dot(hv.astype(bf16), dv_w2[...], preferred_element_type=f32)
        + dv_b2[...])


# ----------------------------------------------------------------------------
# Parameter init (deterministic, synthetic)
# ----------------------------------------------------------------------------
def init_params(key, obs_dim, act_dim, lod, hidden):
    lsd = 2 * lod
    ks = jax.random.split(key, 8)

    def enc(k, din, dout):
        k1, k2 = jax.random.split(k)
        # fused output head: [mean | pre-var] in one (hidden, 2*dout) matmul
        return dict(
            w1=0.3 * jax.random.normal(k1, (din, hidden), jnp.float32),
            b1=jnp.zeros((1, hidden), jnp.float32),
            w2=0.3 * jax.random.normal(k2, (hidden, 2 * dout), jnp.float32),
            b2=jnp.zeros((1, 2 * dout), jnp.float32))

    def dec(k, dmean_in, dvar_in, dout):
        k1, k2, k3, k4 = jax.random.split(k, 4)
        return dict(
            w1m=0.3 * jax.random.normal(k1, (dmean_in, hidden), jnp.float32),
            b1m=jnp.zeros((1, hidden), jnp.float32),
            w2m=0.3 * jax.random.normal(k2, (hidden, dout), jnp.float32),
            b2m=jnp.zeros((1, dout), jnp.float32),
            w1v=0.3 * jax.random.normal(k3, (dvar_in, hidden), jnp.float32),
            b1v=jnp.zeros((1, hidden), jnp.float32),
            w2v=0.3 * jax.random.normal(k4, (hidden, dout), jnp.float32),
            b2v=jnp.zeros((1, dout), jnp.float32))

    ones = jnp.ones((lod,), jnp.float32)

    def band(d11, d12, d21, d22):
        return jnp.stack([d11 * ones, d12 * ones, d21 * ones, d22 * ones])

    return dict(
        lod=lod,
        abs_obs_enc=enc(ks[0], obs_dim + 1, lod),       # + time_embed_dim(=1)
        abs_act_enc=enc(ks[1], act_dim + 1, lsd),
        obs_enc=enc(ks[2], obs_dim, lod),
        obs_dec=dec(ks[3], lsd, 3 * lod, obs_dim),
        A_m=band(0.95, 0.05, -0.05, 0.95),
        C_m=band(0.2, 0.0, 0.0, 0.2),
        Q_m=jnp.full((2, lod), 0.05, jnp.float32),
        A_w=band(0.9, 0.1, -0.1, 0.9),
        D_w=band(0.1, 0.0, 0.0, 0.1),
        Bc_w=0.1 * jax.random.normal(ks[4], (act_dim, lsd), jnp.float32),
        Q_w=jnp.full((2, lod), 0.02, jnp.float32),
        init_covar_m=10.0,     # c.mts3.manager.initial_state_covar
        init_covar_w=10.0,     # c.mts3.worker.initial_state_covar
    )


# ----------------------------------------------------------------------------
# Full MTS3 forward (layout prep + one fused pallas_call + output unpacking)
# ----------------------------------------------------------------------------
def mts3_forward(params, obs_seqs, action_seqs, obs_valid_seqs, H):
    B, T, OBS = obs_seqs.shape
    ADIM = action_seqs.shape[-1]
    lod = params["lod"]
    lsd = 2 * lod
    K = T // H
    HB = H * B

    bf = lambda w: w.astype(jnp.bfloat16)

    # window-flattened, time-major layout: (K, H*B, D), row = t*B + b
    def to_windows(x):
        d = x.shape[-1]
        return x.reshape(B, K, H, d).transpose(1, 2, 0, 3).reshape(K, HB, d)

    obs_w = to_windows(obs_seqs)
    act_w = to_windows(action_seqs)
    valid_w = to_windows(obs_valid_seqs.astype(jnp.float32))

    # fold the time embedding (i/H) into per-row first-layer bias tables
    eo, ea = params["abs_obs_enc"], params["abs_act_enc"]
    temb = jnp.arange(H, dtype=jnp.float32)[:, None] / H             # (H, 1)
    mo_b1t = jnp.repeat(eo["b1"] + temb * eo["w1"][OBS:], B, axis=0)  # (HB,hid)
    ma_b1t = jnp.repeat(ea["b1"] + temb * ea["w1"][ADIM:], B, axis=0)
    mo_w1b, mo_w2b = bf(eo["w1"][:OBS]), bf(eo["w2"])
    ma_w1b, ma_w2b = bf(ea["w1"][:ADIM]), bf(ea["w2"])

    we, dec = params["obs_enc"], params["obs_dec"]
    wo_w1b, wo_w2b = bf(we["w1"]), bf(we["w2"])
    dm_w1b, dm_w2b = bf(dec["w1m"]), bf(dec["w2m"])
    dv_w1b, dv_w2b = bf(dec["w1v"]), bf(dec["w2v"])
    bc_b = bf(params["Bc_w"])

    def win(d):
        return pl.BlockSpec((1, HB, d), lambda k: (k, 0, 0))

    def win_next(d):
        # manager reads the NEXT window's actions (clamped; last one discarded)
        return pl.BlockSpec((1, HB, d),
                            lambda k: (jnp.minimum(k + 1, K - 1), 0, 0))

    def epi(d):
        return pl.BlockSpec((1, B, d), lambda k: (k, 0, 0))

    def full(a):
        return pl.BlockSpec(a.shape, lambda k: (0,) * a.ndim)

    kernel = functools.partial(
        _mts3_fused_kernel, lod=lod, H=H, B=B,
        init_covar_m=float(params["init_covar_m"]),
        init_covar_w=float(params["init_covar_w"]))

    outs = pl.pallas_call(
        kernel,
        out_shape=(
            jax.ShapeDtypeStruct((K, HB, OBS), jnp.float32),     # pred obs mean
            jax.ShapeDtypeStruct((K, HB, OBS), jnp.float32),     # pred obs var
            jax.ShapeDtypeStruct((K, B, lsd), jnp.float32),      # post task mu
            jax.ShapeDtypeStruct((K, B, 3 * lod), jnp.float32),  # post task cov
            jax.ShapeDtypeStruct((K, B, lsd), jnp.float32),      # prior task mu
            jax.ShapeDtypeStruct((K, B, 3 * lod), jnp.float32),  # prior task cov
            jax.ShapeDtypeStruct((K, B, lsd), jnp.float32),      # abstract act
        ),
        grid_spec=pltpu.PrefetchScalarGridSpec(
            num_scalar_prefetch=0, grid=(K,),
            in_specs=[
                win(OBS), win(ADIM), win_next(ADIM), win(1),
                full(mo_w1b), full(mo_b1t), full(mo_w2b), full(eo["b2"]),
                full(ma_w1b), full(ma_b1t), full(ma_w2b), full(ea["b2"]),
                full(params["A_m"]), full(params["C_m"]), full(params["Q_m"]),
                full(wo_w1b), full(we["b1"]), full(wo_w2b), full(we["b2"]),
                full(params["A_w"]), full(params["D_w"]), full(bc_b),
                full(params["Q_w"]),
                full(dm_w1b), full(dec["b1m"]), full(dm_w2b), full(dec["b2m"]),
                full(dv_w1b), full(dec["b1v"]), full(dv_w2b), full(dec["b2v"]),
            ],
            out_specs=[
                win(OBS), win(OBS),
                epi(lsd), epi(3 * lod), epi(lsd), epi(3 * lod), epi(lsd),
            ],
            scratch_shapes=(
                [pltpu.VMEM((B, lod), jnp.float32) for _ in range(10)]
                + [pltpu.VMEM((HB, lod), jnp.float32) for _ in range(5)])),
        # The K axis must stay "arbitrary": both Kalman carries persist in
        # VMEM scratch across grid steps (never shard it across TensorCores).
        compiler_params=pltpu.CompilerParams(
            dimension_semantics=("arbitrary",)),
    )(obs_w, act_w, act_w, valid_w,
      mo_w1b, mo_b1t, mo_w2b, eo["b2"],
      ma_w1b, ma_b1t, ma_w2b, ea["b2"],
      params["A_m"], params["C_m"], params["Q_m"],
      wo_w1b, we["b1"], wo_w2b, we["b2"],
      params["A_w"], params["D_w"], bc_b, params["Q_w"],
      dm_w1b, dec["b1m"], dm_w2b, dec["b2m"],
      dv_w1b, dec["b1v"], dv_w2b, dec["b2v"])

    (pred_m_w, pred_v_w, post_tm, post_tc,
     prior_tm, prior_tc, abs_act) = outs

    def from_windows(y):
        return (y.reshape(K, H, B, OBS).transpose(2, 0, 1, 3)
                .reshape(B, T, OBS))

    pred_obs_means = from_windows(pred_m_w)
    pred_obs_covs = from_windows(pred_v_w)
    post_task_means = post_tm.transpose(1, 0, 2)
    post_task_covs = post_tc.transpose(1, 0, 2)
    # the torch loop skips the manager prediction for the last window
    prior_task_means = prior_tm[:K - 1].transpose(1, 0, 2)
    prior_task_covs = prior_tc[:K - 1].transpose(1, 0, 2)
    abs_acts = abs_act[:K - 1].transpose(1, 0, 2)

    # TODO(synk): reward decoder branch (decode.reward) omitted (config False).
    return (pred_obs_means, pred_obs_covs, prior_task_means, prior_task_covs,
            post_task_means, post_task_covs, abs_acts)


if __name__ == "__main__":
    B, T, OBS, ADIM = 2, 12, 6, 3
    LOD, H, HIDDEN = 8, 4, 32          # lsd = 16, K = 3 episodes

    key = jax.random.PRNGKey(0)
    k1, k2, k3, kp = jax.random.split(key, 4)
    obs_seqs = jax.random.normal(k1, (B, T, OBS), jnp.float32)
    action_seqs = jax.random.normal(k2, (B, T, ADIM), jnp.float32)
    obs_valid_seqs = (jax.random.uniform(k3, (B, T, 1)) > 0.2)

    params = init_params(kp, OBS, ADIM, LOD, HIDDEN)

    outs = mts3_forward(params, obs_seqs, action_seqs, obs_valid_seqs, H)
    outs = jax.block_until_ready(outs)

    (pred_obs_means, pred_obs_covs, prior_task_means, prior_task_covs,
     post_task_means, post_task_covs, abs_acts) = outs

    K = T // H
    assert pred_obs_means.shape == (B, T, OBS)
    assert pred_obs_covs.shape == (B, T, OBS)
    assert prior_task_means.shape == (B, K - 1, 2 * LOD)
    assert prior_task_covs.shape == (B, K - 1, 3 * LOD)
    assert post_task_means.shape == (B, K, 2 * LOD)
    assert post_task_covs.shape == (B, K, 3 * LOD)
    assert abs_acts.shape == (B, K - 1, 2 * LOD)
    for o in outs:
        assert bool(jnp.all(jnp.isfinite(o)))
    assert bool(jnp.all(pred_obs_covs > 0.0))

    print("KERNEL_OK")
</pallas_src>

<mosaic_0001>
module attributes {stable_mosaic.version = 11 : i64} {
  func.func @_mts3_fused_kernel(%arg0: i32, %arg1: memref<1x8x6xf32, #tpu.memory_space<vmem>>, %arg2: memref<1x8x3xf32, #tpu.memory_space<vmem>>, %arg3: memref<1x8x3xf32, #tpu.memory_space<vmem>>, %arg4: memref<1x8x1xf32, #tpu.memory_space<vmem>>, %arg5: memref<6x32xbf16, #tpu.memory_space<vmem>>, %arg6: memref<8x32xf32, #tpu.memory_space<vmem>>, %arg7: memref<32x16xbf16, #tpu.memory_space<vmem>>, %arg8: memref<1x16xf32, #tpu.memory_space<vmem>>, %arg9: memref<3x32xbf16, #tpu.memory_space<vmem>>, %arg10: memref<8x32xf32, #tpu.memory_space<vmem>>, %arg11: memref<32x32xbf16, #tpu.memory_space<vmem>>, %arg12: memref<1x32xf32, #tpu.memory_space<vmem>>, %arg13: memref<4x8xf32, #tpu.memory_space<vmem>>, %arg14: memref<4x8xf32, #tpu.memory_space<vmem>>, %arg15: memref<2x8xf32, #tpu.memory_space<vmem>>, %arg16: memref<6x32xbf16, #tpu.memory_space<vmem>>, %arg17: memref<1x32xf32, #tpu.memory_space<vmem>>, %arg18: memref<32x16xbf16, #tpu.memory_space<vmem>>, %arg19: memref<1x16xf32, #tpu.memory_space<vmem>>, %arg20: memref<4x8xf32, #tpu.memory_space<vmem>>, %arg21: memref<4x8xf32, #tpu.memory_space<vmem>>, %arg22: memref<3x16xbf16, #tpu.memory_space<vmem>>, %arg23: memref<2x8xf32, #tpu.memory_space<vmem>>, %arg24: memref<16x32xbf16, #tpu.memory_space<vmem>>, %arg25: memref<1x32xf32, #tpu.memory_space<vmem>>, %arg26: memref<32x6xbf16, #tpu.memory_space<vmem>>, %arg27: memref<1x6xf32, #tpu.memory_space<vmem>>, %arg28: memref<24x32xbf16, #tpu.memory_space<vmem>>, %arg29: memref<1x32xf32, #tpu.memory_space<vmem>>, %arg30: memref<32x6xbf16, #tpu.memory_space<vmem>>, %arg31: memref<1x6xf32, #tpu.memory_space<vmem>>, %arg32: memref<1x8x6xf32, #tpu.memory_space<vmem>>, %arg33: memref<1x8x6xf32, #tpu.memory_space<vmem>>, %arg34: memref<1x2x16xf32, #tpu.memory_space<vmem>>, %arg35: memref<1x2x24xf32, #tpu.memory_space<vmem>>, %arg36: memref<1x2x16xf32, #tpu.memory_space<vmem>>, %arg37: memref<1x2x24xf32, #tpu.memory_space<vmem>>, %arg38: memref<1x2x16xf32, #tpu.memory_space<vmem>>, %arg39: memref<2x8xf32, #tpu.memory_space<vmem>>, %arg40: memref<2x8xf32, #tpu.memory_space<vmem>>, %arg41: memref<2x8xf32, #tpu.memory_space<vmem>>, %arg42: memref<2x8xf32, #tpu.memory_space<vmem>>, %arg43: memref<2x8xf32, #tpu.memory_space<vmem>>, %arg44: memref<2x8xf32, #tpu.memory_space<vmem>>, %arg45: memref<2x8xf32, #tpu.memory_space<vmem>>, %arg46: memref<2x8xf32, #tpu.memory_space<vmem>>, %arg47: memref<2x8xf32, #tpu.memory_space<vmem>>, %arg48: memref<2x8xf32, #tpu.memory_space<vmem>>, %arg49: memref<8x8xf32, #tpu.memory_space<vmem>>, %arg50: memref<8x8xf32, #tpu.memory_space<vmem>>, %arg51: memref<8x8xf32, #tpu.memory_space<vmem>>, %arg52: memref<8x8xf32, #tpu.memory_space<vmem>>, %arg53: memref<8x8xf32, #tpu.memory_space<vmem>>) attributes {dimension_semantics = [#tpu.dimension_semantics<arbitrary>], iteration_bounds = array<i64: 3>, scalar_prefetch = 0 : i64, scratch_operands = 15 : i64, tpu.core_type = #tpu.core_type<tc>, window_params = [{transform_indices = @transform_0, window_bounds = array<i64: 1, 8, 6>}, {transform_indices = @transform_1, window_bounds = array<i64: 1, 8, 3>}, {transform_indices = @transform_2, window_bounds = array<i64: 1, 8, 3>}, {transform_indices = @transform_3, window_bounds = array<i64: 1, 8, 1>}, {pipeline_mode = #tpu.pipeline_mode<synchronous>, transform_indices = @transform_4, window_bounds = array<i64: 6, 32>}, {pipeline_mode = #tpu.pipeline_mode<synchronous>, transform_indices = @transform_5, window_bounds = array<i64: 8, 32>}, {pipeline_mode = #tpu.pipeline_mode<synchronous>, transform_indices = @transform_6, window_bounds = array<i64: 32, 16>}, {pipeline_mode = #tpu.pipeline_mode<synchronous>, transform_indices = @transform_7, window_bounds = array<i64: 1, 16>}, {pipeline_mode = #tpu.pipeline_mode<synchronous>, transform_indices = @transform_8, window_bounds = array<i64: 3, 32>}, {pipeline_mode = #tpu.pipeline_mode<synchronous>, transform_indices = @transform_9, window_bounds = array<i64: 8, 32>}, {pipeline_mode = #tpu.pipeline_mode<synchronous>, transform_indices = @transform_10, window_bounds = array<i64: 32, 32>}, {pipeline_mode = #tpu.pipeline_mode<synchronous>, transform_indices = @transform_11, window_bounds = array<i64: 1, 32>}, {pipeline_mode = #tpu.pipeline_mode<synchronous>, transform_indices = @transform_12, window_bounds = array<i64: 4, 8>}, {pipeline_mode = #tpu.pipeline_mode<synchronous>, transform_indices = @transform_13, window_bounds = array<i64: 4, 8>}, {pipeline_mode = #tpu.pipeline_mode<synchronous>, transform_indices = @transform_14, window_bounds = array<i64: 2, 8>}, {pipeline_mode = #tpu.pipeline_mode<synchronous>, transform_indices = @transform_15, window_bounds = array<i64: 6, 32>}, {pipeline_mode = #tpu.pipeline_mode<synchronous>, transform_indices = @transform_16, window_bounds = array<i64: 1, 32>}, {pipeline_mode = #tpu.pipeline_mode<synchronous>, transform_indices = @transform_17, window_bounds = array<i64: 32, 16>}, {pipeline_mode = #tpu.pipeline_mode<synchronous>, transform_indices = @transform_18, window_bounds = array<i64: 1, 16>}, {pipeline_mode = #tpu.pipeline_mode<synchronous>, transform_indices = @transform_19, window_bounds = array<i64: 4, 8>}, {pipeline_mode = #tpu.pipeline_mode<synchronous>, transform_indices = @transform_20, window_bounds = array<i64: 4, 8>}, {pipeline_mode = #tpu.pipeline_mode<synchronous>, transform_indices = @transform_21, window_bounds = array<i64: 3, 16>}, {pipeline_mode = #tpu.pipeline_mode<synchronous>, transform_indices = @transform_22, window_bounds = array<i64: 2, 8>}, {pipeline_mode = #tpu.pipeline_mode<synchronous>, transform_indices = @transform_23, window_bounds = array<i64: 16, 32>}, {pipeline_mode = #tpu.pipeline_mode<synchronous>, transform_indices = @transform_24, window_bounds = array<i64: 1, 32>}, {pipeline_mode = #tpu.pipeline_mode<synchronous>, transform_indices = @transform_25, window_bounds = array<i64: 32, 6>}, {pipeline_mode = #tpu.pipeline_mode<synchronous>, transform_indices = @transform_26, window_bounds = array<i64: 1, 6>}, {pipeline_mode = #tpu.pipeline_mode<synchronous>, transform_indices = @transform_27, window_bounds = array<i64: 24, 32>}, {pipeline_mode = #tpu.pipeline_mode<synchronous>, transform_indices = @transform_28, window_bounds = array<i64: 1, 32>}, {pipeline_mode = #tpu.pipeline_mode<synchronous>, transform_indices = @transform_29, window_bounds = array<i64: 32, 6>}, {pipeline_mode = #tpu.pipeline_mode<synchronous>, transform_indices = @transform_30, window_bounds = array<i64: 1, 6>}, {transform_indices = @transform_31, window_bounds = array<i64: 1, 8, 6>}, {transform_indices = @transform_32, window_bounds = array<i64: 1, 8, 6>}, {transform_indices = @transform_33, window_bounds = array<i64: 1, 2, 16>}, {transform_indices = @transform_34, window_bounds = array<i64: 1, 2, 24>}, {transform_indices = @transform_35, window_bounds = array<i64: 1, 2, 16>}, {transform_indices = @transform_36, window_bounds = array<i64: 1, 2, 24>}, {transform_indices = @transform_37, window_bounds = array<i64: 1, 2, 16>}]} {
    %c0_i32 = arith.constant 0 : i32
    %0 = arith.cmpi eq, %arg0, %c0_i32 : i32
    %1 = arith.extui %0 : i1 to i32
    %c0_i32_0 = arith.constant 0 : i32
    %2 = arith.cmpi ne, %1, %c0_i32_0 : i32
    scf.if %2 {
      %cst_262 = arith.constant 0.000000e+00 : f32
      %864 = vector.broadcast %cst_262 : f32 to vector<2x8xf32>
      %c0_263 = arith.constant 0 : index
      %c0_264 = arith.constant 0 : index
      %865 = vector.load %arg39[%c0_263, %c0_264] : memref<2x8xf32, #tpu.memory_space<vmem>>, vector<2x8xf32>
      tpu.vector_store %arg39[%c0_263, %c0_264], %864 {strides = array<i32>} : memref<2x8xf32, #tpu.memory_space<vmem>>, vector<2x8xf32>,
      %cst_265 = arith.constant 0.000000e+00 : f32
      %866 = vector.broadcast %cst_265 : f32 to vector<2x8xf32>
      %c0_266 = arith.constant 0 : index
      %c0_267 = arith.constant 0 : index
      %867 = vector.load %arg40[%c0_266, %c0_267] : memref<2x8xf32, #tpu.memory_space<vmem>>, vector<2x8xf32>
      tpu.vector_store %arg40[%c0_266, %c0_267], %866 {strides = array<i32>} : memref<2x8xf32, #tpu.memory_space<vmem>>, vector<2x8xf32>,
      %cst_268 = arith.constant 1.000000e+01 : f32
      %868 = vector.broadcast %cst_268 : f32 to vector<2x8xf32>
      %c0_269 = arith.constant 0 : index
      %c0_270 = arith.constant 0 : index
      %869 = vector.load %arg41[%c0_269, %c0_270] : memref<2x8xf32, #tpu.memory_space<vmem>>, vector<2x8xf32>
      tpu.vector_store %arg41[%c0_269, %c0_270], %868 {strides = array<i32>} : memref<2x8xf32, #tpu.memory_space<vmem>>, vector<2x8xf32>,
      %cst_271 = arith.constant 1.000000e+01 : f32
      %870 = vector.broadcast %cst_271 : f32 to vector<2x8xf32>
      %c0_272 = arith.constant 0 : index
      %c0_273 = arith.constant 0 : index
      %871 = vector.load %arg42[%c0_272, %c0_273] : memref<2x8xf32, #tpu.memory_space<vmem>>, vector<2x8xf32>
      tpu.vector_store %arg42[%c0_272, %c0_273], %870 {strides = array<i32>} : memref<2x8xf32, #tpu.memory_space<vmem>>, vector<2x8xf32>,
      %cst_274 = arith.constant 1.000000e+00 : f32
      %872 = vector.broadcast %cst_274 : f32 to vector<2x8xf32>
      %c0_275 = arith.constant 0 : index
      %c0_276 = arith.constant 0 : index
      %873 = vector.load %arg43[%c0_275, %c0_276] : memref<2x8xf32, #tpu.memory_space<vmem>>, vector<2x8xf32>
      tpu.vector_store %arg43[%c0_275, %c0_276], %872 {strides = array<i32>} : memref<2x8xf32, #tpu.memory_space<vmem>>, vector<2x8xf32>,
      %cst_277 = arith.constant 0.000000e+00 : f32
      %874 = vector.broadcast %cst_277 : f32 to vector<2x8xf32>
      %c0_278 = arith.constant 0 : index
      %c0_279 = arith.constant 0 : index
      %875 = vector.load %arg44[%c0_278, %c0_279] : memref<2x8xf32, #tpu.memory_space<vmem>>, vector<2x8xf32>
      tpu.vector_store %arg44[%c0_278, %c0_279], %874 {strides = array<i32>} : memref<2x8xf32, #tpu.memory_space<vmem>>, vector<2x8xf32>,
      %cst_280 = arith.constant 0.000000e+00 : f32
      %876 = vector.broadcast %cst_280 : f32 to vector<2x8xf32>
      %c0_281 = arith.constant 0 : index
      %c0_282 = arith.constant 0 : index
      %877 = vector.load %arg45[%c0_281, %c0_282] : memref<2x8xf32, #tpu.memory_space<vmem>>, vector<2x8xf32>
      tpu.vector_store %arg45[%c0_281, %c0_282], %876 {strides = array<i32>} : memref<2x8xf32, #tpu.memory_space<vmem>>, vector<2x8xf32>,
      %cst_283 = arith.constant 1.000000e+01 : f32
      %878 = vector.broadcast %cst_283 : f32 to vector<2x8xf32>
      %c0_284 = arith.constant 0 : index
      %c0_285 = arith.constant 0 : index
      %879 = vector.load %arg46[%c0_284, %c0_285] : memref<2x8xf32, #tpu.memory_space<vmem>>, vector<2x8xf32>
      tpu.vector_store %arg46[%c0_284, %c0_285], %878 {strides = array<i32>} : memref<2x8xf32, #tpu.memory_space<vmem>>, vector<2x8xf32>,
      %cst_286 = arith.constant 1.000000e+01 : f32
      %880 = vector.broadcast %cst_286 : f32 to vector<2x8xf32>
      %c0_287 = arith.constant 0 : index
      %c0_288 = arith.constant 0 : index
      %881 = vector.load %arg47[%c0_287, %c0_288] : memref<2x8xf32, #tpu.memory_space<vmem>>, vector<2x8xf32>
      tpu.vector_store %arg47[%c0_287, %c0_288], %880 {strides = array<i32>} : memref<2x8xf32, #tpu.memory_space<vmem>>, vector<2x8xf32>,
      %cst_289 = arith.constant 1.000000e+00 : f32
      %882 = vector.broadcast %cst_289 : f32 to vector<2x8xf32>
      %c0_290 = arith.constant 0 : index
      %c0_291 = arith.constant 0 : index
      %883 = vector.load %arg48[%c0_290, %c0_291] : memref<2x8xf32, #tpu.memory_space<vmem>>, vector<2x8xf32>
      tpu.vector_store %arg48[%c0_290, %c0_291], %882 {strides = array<i32>} : memref<2x8xf32, #tpu.memory_space<vmem>>, vector<2x8xf32>,
    } else {
    }
    %c0 = arith.constant 0 : index
    %c0_1 = arith.constant 0 : index
    %c0_2 = arith.constant 0 : index
    %3 = vector.load %arg1[%c0, %c0_1, %c0_2] : memref<1x8x6xf32, #tpu.memory_space<vmem>>, vector<1x8x6xf32>
    %4 = vector.shape_cast %3 : vector<1x8x6xf32> to vector<8x6xf32>
    %5 = arith.truncf %4 : vector<8x6xf32> to vector<8x6xbf16>
    %c0_3 = arith.constant 0 : index
    %c0_4 = arith.constant 0 : index
    %c0_5 = arith.constant 0 : index
    %6 = vector.load %arg4[%c0_3, %c0_4, %c0_5] : memref<1x8x1xf32, #tpu.memory_space<vmem>>, vector<1x8x1xf32>
    %7 = vector.shape_cast %6 : vector<1x8x1xf32> to vector<8x1xf32>
    %c0_6 = arith.constant 0 : index
    %c0_7 = arith.constant 0 : index
    %8 = vector.load %arg5[%c0_6, %c0_7] : memref<6x32xbf16, #tpu.memory_space<vmem>>, vector<6x32xbf16>
    %cst = arith.constant dense<0.000000e+00> : vector<8x32xf32>
    %9 = tpu.matmul %5, %8, %cst {dimension_numbers = #tpu.dot_dimension_numbers<[1], [0], [0], [1], [0, 0, 1, 1], [], []>} : vector<8x6xbf16>, vector<6x32xbf16>, vector<8x32xf32> -> vector<8x32xf32>
    %c0_8 = arith.constant 0 : index
    %c0_9 = arith.constant 0 : index
    %10 = vector.load %arg6[%c0_8, %c0_9] : memref<8x32xf32, #tpu.memory_space<vmem>>, vector<8x32xf32>
    %11 = arith.addf %9, %10 : vector<8x32xf32>
    %cst_10 = arith.constant 0.000000e+00 : f32
    %12 = vector.broadcast %cst_10 : f32 to vector<8x32xf32>
    %13 = arith.maximumf %11, %12 : vector<8x32xf32>
    %14 = arith.truncf %13 : vector<8x32xf32> to vector<8x32xbf16>
    %c0_11 = arith.constant 0 : index
    %c0_12 = arith.constant 0 : index
    %15 = vector.load %arg7[%c0_11, %c0_12] : memref<32x16xbf16, #tpu.memory_space<vmem>>, vector<32x16xbf16>
    %cst_13 = arith.constant dense<0.000000e+00> : vector<8x16xf32>
    %16 = tpu.matmul %14, %15, %cst_13 {dimension_numbers = #tpu.dot_dimension_numbers<[1], [0], [0], [1], [0, 0, 1, 1], [], []>} : vector<8x32xbf16>, vector<32x16xbf16>, vector<8x16xf32> -> vector<8x16xf32>
    %c0_14 = arith.constant 0 : index
    %c0_15 = arith.constant 0 : index
    %17 = vector.load %arg8[%c0_14, %c0_15] : memref<1x16xf32, #tpu.memory_space<vmem>>, vector<1x16xf32>
    %18 = vector.broadcast %17 : vector<1x16xf32> to vector<8x16xf32>
    %19 = arith.addf %16, %18 : vector<8x16xf32>
    %20 = vector.extract_strided_slice %19 {offsets = [0, 0], sizes = [8, 8], strides = [1, 1]} : vector<8x16xf32> to vector<8x8xf32>
    %21 = vector.extract_strided_slice %19 {offsets = [0, 8], sizes = [8, 8], strides = [1, 1]} : vector<8x16xf32> to vector<8x8xf32>
    %cst_16 = arith.constant 0.000000e+00 : f32
    %22 = vector.broadcast %cst_16 : f32 to vector<8x8xf32>
    %23 = arith.cmpf ogt, %21, %22 : vector<8x8xf32>
    %cst_17 = arith.constant 1.000000e+00 : f32
    %24 = vector.broadcast %cst_17 : f32 to vector<8x8xf32>
    %25 = arith.addf %21, %24 : vector<8x8xf32>
    %cst_18 = arith.constant 0.000000e+00 : f32
    %26 = vector.broadcast %cst_18 : f32 to vector<8x8xf32>
    %27 = arith.minimumf %21, %26 : vector<8x8xf32>
    %28 = math.exp %27 : vector<8x8xf32>
    %29 = arith.select %23, %25, %28 : vector<8x8xi1>, vector<8x8xf32>
    %cst_19 = arith.constant 9.99999997E-7 : f32
    %30 = vector.broadcast %cst_19 : f32 to vector<8x8xf32>
    %31 = arith.addf %29, %30 : vector<8x8xf32>
    %cst_20 = arith.constant 5.000000e-01 : f32
    %32 = vector.broadcast %cst_20 : f32 to vector<8x1xf32>
    %33 = arith.cmpf ogt, %7, %32 : vector<8x1xf32>
    %cst_21 = arith.constant 1.000000e+00 : f32
    %34 = vector.broadcast %cst_21 : f32 to vector<8x8xf32>
    %35 = arith.divf %34, %31 : vector<8x8xf32>
    %cst_22 = arith.constant 0.000000e+00 : f32
    %36 = vector.shape_cast %33 : vector<8x1xi1> to vector<8x1xi1>
    %37 = vector.broadcast %36 : vector<8x1xi1> to vector<8x8xi1>
    %38 = vector.broadcast %cst_22 : f32 to vector<8x8xf32>
    %39 = arith.select %37, %35, %38 : vector<8x8xi1>, vector<8x8xf32>
    %40 = arith.mulf %39, %20 : vector<8x8xf32>
    %41 = vector.extract_strided_slice %39 {offsets = [0, 0], sizes = [2, 8], strides = [1, 1]} : vector<8x8xf32> to vector<2x8xf32>
    %42 = vector.extract_strided_slice %40 {offsets = [0, 0], sizes = [2, 8], strides = [1, 1]} : vector<8x8xf32> to vector<2x8xf32>
    %43 = vector.extract_strided_slice %39 {offsets = [2, 0], sizes = [2, 8], strides = [1, 1]} : vector<8x8xf32> to vector<2x8xf32>
    %44 = arith.addf %41, %43 : vector<2x8xf32>
    %45 = vector.extract_strided_slice %40 {offsets = [2, 0], sizes = [2, 8], strides = [1, 1]} : vector<8x8xf32> to vector<2x8xf32>
    %46 = arith.addf %42, %45 : vector<2x8xf32>
    %47 = vector.extract_strided_slice %39 {offsets = [4, 0], sizes = [2, 8], strides = [1, 1]} : vector<8x8xf32> to vector<2x8xf32>
    %48 = arith.addf %44, %47 : vector<2x8xf32>
    %49 = vector.extract_strided_slice %40 {offsets = [4, 0], sizes = [2, 8], strides = [1, 1]} : vector<8x8xf32> to vector<2x8xf32>
    %50 = arith.addf %46, %49 : vector<2x8xf32>
    %51 = vector.extract_strided_slice %39 {offsets = [6, 0], sizes = [2, 8], strides = [1, 1]} : vector<8x8xf32> to vector<2x8xf32>
    %52 = arith.addf %48, %51 : vector<2x8xf32>
    %53 = vector.extract_strided_slice %40 {offsets = [6, 0], sizes = [2, 8], strides = [1, 1]} : vector<8x8xf32> to vector<2x8xf32>
    %54 = arith.addf %50, %53 : vector<2x8xf32>
    %c0_23 = arith.constant 0 : index
    %c0_24 = arith.constant 0 : index
    %55 = vector.load %arg39[%c0_23, %c0_24] : memref<2x8xf32, #tpu.memory_space<vmem>>, vector<2x8xf32>
    %c0_25 = arith.constant 0 : index
    %c0_26 = arith.constant 0 : index
    %56 = vector.load %arg40[%c0_25, %c0_26] : memref<2x8xf32, #tpu.memory_space<vmem>>, vector<2x8xf32>
    %c0_27 = arith.constant 0 : index
    %c0_28 = arith.constant 0 : index
    %57 = vector.load %arg41[%c0_27, %c0_28] : memref<2x8xf32, #tpu.memory_space<vmem>>, vector<2x8xf32>
    %c0_29 = arith.constant 0 : index
    %c0_30 = arith.constant 0 : index
    %58 = vector.load %arg42[%c0_29, %c0_30] : memref<2x8xf32, #tpu.memory_space<vmem>>, vector<2x8xf32>
    %c0_31 = arith.constant 0 : index
    %c0_32 = arith.constant 0 : index
    %59 = vector.load %arg43[%c0_31, %c0_32] : memref<2x8xf32, #tpu.memory_space<vmem>>, vector<2x8xf32>
    %60 = arith.mulf %57, %52 : vector<2x8xf32>
    %cst_33 = arith.constant 1.000000e+00 : f32
    %61 = vector.broadcast %cst_33 : f32 to vector<2x8xf32>
    %62 = arith.addf %61, %60 : vector<2x8xf32>
    %cst_34 = arith.constant 1.000000e+00 : f32
    %63 = vector.broadcast %cst_34 : f32 to vector<2x8xf32>
    %64 = arith.divf %63, %62 : vector<2x8xf32>
    %65 = arith.mulf %52, %55 : vector<2x8xf32>
    %66 = arith.subf %54, %65 : vector<2x8xf32>
    %67 = arith.mulf %66, %64 : vector<2x8xf32>
    %68 = arith.mulf %57, %67 : vector<2x8xf32>
    %69 = arith.addf %55, %68 : vector<2x8xf32>
    %70 = arith.mulf %59, %67 : vector<2x8xf32>
    %71 = arith.addf %56, %70 : vector<2x8xf32>
    %72 = arith.mulf %57, %64 : vector<2x8xf32>
    %73 = arith.mulf %59, %64 : vector<2x8xf32>
    %74 = arith.mulf %59, %59 : vector<2x8xf32>
    %75 = arith.mulf %74, %52 : vector<2x8xf32>
    %76 = arith.mulf %75, %64 : vector<2x8xf32>
    %77 = arith.subf %58, %76 : vector<2x8xf32>
    %78 = tpu.concatenate %69, %71 in 1 : vector<2x8xf32>, vector<2x8xf32> -> vector<2x16xf32>
    %c0_35 = arith.constant 0 : index
    %c0_36 = arith.constant 0 : index
    %c0_37 = arith.constant 0 : index
    %79 = vector.load %arg34[%c0_35, %c0_36, %c0_37] : memref<1x2x16xf32, #tpu.memory_space<vmem>>, vector<1x2x16xf32>
    %80 = vector.shape_cast %79 : vector<1x2x16xf32> to vector<2x16xf32>
    %81 = vector.shape_cast %78 : vector<2x16xf32> to vector<1x2x16xf32>
    tpu.vector_store %arg34[%c0_35, %c0_36, %c0_37], %81 {strides = array<i32>} : memref<1x2x16xf32, #tpu.memory_space<vmem>>, vector<1x2x16xf32>,
    %82 = tpu.concatenate %72, %77, %73 in 1 : vector<2x8xf32>, vector<2x8xf32>, vector<2x8xf32> -> vector<2x24xf32>
    %c0_38 = arith.constant 0 : index
    %c0_39 = arith.constant 0 : index
    %c0_40 = arith.constant 0 : index
    %83 = vector.load %arg35[%c0_38, %c0_39, %c0_40] : memref<1x2x24xf32, #tpu.memory_space<vmem>>, vector<1x2x24xf32>
    %84 = vector.shape_cast %83 : vector<1x2x24xf32> to vector<2x24xf32>
    %85 = vector.shape_cast %82 : vector<2x24xf32> to vector<1x2x24xf32>
    tpu.vector_store %arg35[%c0_38, %c0_39, %c0_40], %85 {strides = array<i32>} : memref<1x2x24xf32, #tpu.memory_space<vmem>>, vector<1x2x24xf32>,
    %c0_41 = arith.constant 0 : index
    %c0_42 = arith.constant 0 : index
    %c0_43 = arith.constant 0 : index
    %86 = vector.load %arg3[%c0_41, %c0_42, %c0_43] : memref<1x8x3xf32, #tpu.memory_space<vmem>>, vector<1x8x3xf32>
    %87 = vector.shape_cast %86 : vector<1x8x3xf32> to vector<8x3xf32>
    %88 = arith.truncf %87 : vector<8x3xf32> to vector<8x3xbf16>
    %c0_44 = arith.constant 0 : index
    %c0_45 = arith.constant 0 : index
    %89 = vector.load %arg9[%c0_44, %c0_45] : memref<3x32xbf16, #tpu.memory_space<vmem>>, vector<3x32xbf16>
    %cst_46 = arith.constant dense<0.000000e+00> : vector<8x32xf32>
    %90 = tpu.matmul %88, %89, %cst_46 {dimension_numbers = #tpu.dot_dimension_numbers<[1], [0], [0], [1], [0, 0, 1, 1], [], []>} : vector<8x3xbf16>, vector<3x32xbf16>, vector<8x32xf32> -> vector<8x32xf32>
    %c0_47 = arith.constant 0 : index
    %c0_48 = arith.constant 0 : index
    %91 = vector.load %arg10[%c0_47, %c0_48] : memref<8x32xf32, #tpu.memory_space<vmem>>, vector<8x32xf32>
    %92 = arith.addf %90, %91 : vector<8x32xf32>
    %cst_49 = arith.constant 0.000000e+00 : f32
    %93 = vector.broadcast %cst_49 : f32 to vector<8x32xf32>
    %94 = arith.maximumf %92, %93 : vector<8x32xf32>
    %95 = arith.truncf %94 : vector<8x32xf32> to vector<8x32xbf16>
    %c0_50 = arith.constant 0 : index
    %c0_51 = arith.constant 0 : index
    %96 = vector.load %arg11[%c0_50, %c0_51] : memref<32x32xbf16, #tpu.memory_space<vmem>>, vector<32x32xbf16>
    %cst_52 = arith.constant dense<0.000000e+00> : vector<8x32xf32>
    %97 = tpu.matmul %95, %96, %cst_52 {dimension_numbers = #tpu.dot_dimension_numbers<[1], [0], [0], [1], [0, 0, 1, 1], [], []>} : vector<8x32xbf16>, vector<32x32xbf16>, vector<8x32xf32> -> vector<8x32xf32>
    %c0_53 = arith.constant 0 : index
    %c0_54 = arith.constant 0 : index
    %98 = vector.load %arg12[%c0_53, %c0_54] : memref<1x32xf32, #tpu.memory_space<vmem>>, vector<1x32xf32>
    %99 = vector.broadcast %98 : vector<1x32xf32> to vector<8x32xf32>
    %100 = arith.addf %97, %99 : vector<8x32xf32>
    %101 = vector.extract_strided_slice %100 {offsets = [0, 0], sizes = [8, 16], strides = [1, 1]} : vector<8x32xf32> to vector<8x16xf32>
    %102 = vector.extract_strided_slice %100 {offsets = [0, 16], sizes = [8, 16], strides = [1, 1]} : vector<8x32xf32> to vector<8x16xf32>
    %cst_55 = arith.constant 0.000000e+00 : f32
    %103 = vector.broadcast %cst_55 : f32 to vector<8x16xf32>
    %104 = arith.cmpf ogt, %102, %103 : vector<8x16xf32>
    %cst_56 = arith.constant 1.000000e+00 : f32
    %105 = vector.broadcast %cst_56 : f32 to vector<8x16xf32>
    %106 = arith.addf %102, %105 : vector<8x16xf32>
    %cst_57 = arith.constant 0.000000e+00 : f32
    %107 = vector.broadcast %cst_57 : f32 to vector<8x16xf32>
    %108 = arith.minimumf %102, %107 : vector<8x16xf32>
    %109 = math.exp %108 : vector<8x16xf32>
    %110 = arith.select %104, %106, %109 : vector<8x16xi1>, vector<8x16xf32>
    %cst_58 = arith.constant 9.99999997E-7 : f32
    %111 = vector.broadcast %cst_58 : f32 to vector<8x16xf32>
    %112 = arith.addf %110, %111 : vector<8x16xf32>
    %cst_59 = arith.constant 1.000000e+00 : f32
    %113 = vector.broadcast %cst_59 : f32 to vector<8x16xf32>
    %114 = arith.divf %113, %112 : vector<8x16xf32>
    %115 = arith.mulf %114, %101 : vector<8x16xf32>
    %116 = vector.extract_strided_slice %114 {offsets = [0, 0], sizes = [2, 16], strides = [1, 1]} : vector<8x16xf32> to vector<2x16xf32>
    %117 = vector.extract_strided_slice %115 {offsets = [0, 0], sizes = [2, 16], strides = [1, 1]} : vector<8x16xf32> to vector<2x16xf32>
    %118 = vector.extract_strided_slice %114 {offsets = [2, 0], sizes = [2, 16], strides = [1, 1]} : vector<8x16xf32> to vector<2x16xf32>
    %119 = arith.addf %116, %118 : vector<2x16xf32>
    %120 = vector.extract_strided_slice %115 {offsets = [2, 0], sizes = [2, 16], strides = [1, 1]} : vector<8x16xf32> to vector<2x16xf32>
    %121 = arith.addf %117, %120 : vector<2x16xf32>
    %122 = vector.extract_strided_slice %114 {offsets = [4, 0], sizes = [2, 16], strides = [1, 1]} : vector<8x16xf32> to vector<2x16xf32>
    %123 = arith.addf %119, %122 : vector<2x16xf32>
    %124 = vector.extract_strided_slice %115 {offsets = [4, 0], sizes = [2, 16], strides = [1, 1]} : vector<8x16xf32> to vector<2x16xf32>
    %125 = arith.addf %121, %124 : vector<2x16xf32>
    %126 = vector.extract_strided_slice %114 {offsets = [6, 0], sizes = [2, 16], strides = [1, 1]} : vector<8x16xf32> to vector<2x16xf32>
    %127 = arith.addf %123, %126 : vector<2x16xf32>
    %128 = vector.extract_strided_slice %115 {offsets = [6, 0], sizes = [2, 16], strides = [1, 1]} : vector<8x16xf32> to vector<2x16xf32>
    %129 = arith.addf %125, %128 : vector<2x16xf32>
    %cst_60 = arith.constant 1.000000e+00 : f32
    %130 = vector.broadcast %cst_60 : f32 to vector<2x16xf32>
    %131 = arith.addf %130, %127 : vector<2x16xf32>
    %cst_61 = arith.constant 1.000000e+00 : f32
    %132 = vector.broadcast %cst_61 : f32 to vector<2x16xf32>
    %133 = arith.divf %132, %131 : vector<2x16xf32>
    %134 = arith.mulf %129, %133 : vector<2x16xf32>
    %c0_62 = arith.constant 0 : index
    %c0_63 = arith.constant 0 : index
    %c0_64 = arith.constant 0 : index
    %135 = vector.load %arg38[%c0_62, %c0_63, %c0_64] : memref<1x2x16xf32, #tpu.memory_space<vmem>>, vector<1x2x16xf32>
    %136 = vector.shape_cast %135 : vector<1x2x16xf32> to vector<2x16xf32>
    %137 = vector.shape_cast %134 : vector<2x16xf32> to vector<1x2x16xf32>
    tpu.vector_store %arg38[%c0_62, %c0_63, %c0_64], %137 {strides = array<i32>} : memref<1x2x16xf32, #tpu.memory_space<vmem>>, vector<1x2x16xf32>,
    %c0_65 = arith.constant 0 : index
    %c0_66 = arith.constant 0 : index
    %138 = vector.load %arg13[%c0_65, %c0_66] : memref<4x8xf32, #tpu.memory_space<vmem>>, vector<1x8xf32>
    %139 = vector.shape_cast %138 : vector<1x8xf32> to vector<8xf32>
    %c1 = arith.constant 1 : index
    %c0_67 = arith.constant 0 : index
    %140 = vector.load %arg13[%c1, %c0_67] : memref<4x8xf32, #tpu.memory_space<vmem>>, vector<1x8xf32>
    %141 = vector.shape_cast %140 : vector<1x8xf32> to vector<8xf32>
    %c2 = arith.constant 2 : index
    %c0_68 = arith.constant 0 : index
    %142 = vector.load %arg13[%c2, %c0_68] : memref<4x8xf32, #tpu.memory_space<vmem>>, vector<1x8xf32>
    %143 = vector.shape_cast %142 : vector<1x8xf32> to vector<8xf32>
    %c3 = arith.constant 3 : index
    %c0_69 = arith.constant 0 : index
    %144 = vector.load %arg13[%c3, %c0_69] : memref<4x8xf32, #tpu.memory_space<vmem>>, vector<1x8xf32>
    %145 = vector.shape_cast %144 : vector<1x8xf32> to vector<8xf32>
    %c0_70 = arith.constant 0 : index
    %c0_71 = arith.constant 0 : index
    %146 = vector.load %arg14[%c0_70, %c0_71] : memref<4x8xf32, #tpu.memory_space<vmem>>, vector<1x8xf32>
    %147 = vector.shape_cast %146 : vector<1x8xf32> to vector<8xf32>
    %c1_72 = arith.constant 1 : index
    %c0_73 = arith.constant 0 : index
    %148 = vector.load %arg14[%c1_72, %c0_73] : memref<4x8xf32, #tpu.memory_space<vmem>>, vector<1x8xf32>
    %149 = vector.shape_cast %148 : vector<1x8xf32> to vector<8xf32>
    %c2_74 = arith.constant 2 : index
    %c0_75 = arith.constant 0 : index
    %150 = vector.load %arg14[%c2_74, %c0_75] : memref<4x8xf32, #tpu.memory_space<vmem>>, vector<1x8xf32>
    %151 = vector.shape_cast %150 : vector<1x8xf32> to vector<8xf32>
    %c3_76 = arith.constant 3 : index
    %c0_77 = arith.constant 0 : index
    %152 = vector.load %arg14[%c3_76, %c0_77] : memref<4x8xf32, #tpu.memory_space<vmem>>, vector<1x8xf32>
    %153 = vector.shape_cast %152 : vector<1x8xf32> to vector<8xf32>
    %c0_78 = arith.constant 0 : index
    %c0_79 = arith.constant 0 : index
    %154 = vector.load %arg15[%c0_78, %c0_79] : memref<2x8xf32, #tpu.memory_space<vmem>>, vector<1x8xf32>
    %155 = vector.shape_cast %154 : vector<1x8xf32> to vector<8xf32>
    %c1_80 = arith.constant 1 : index
    %c0_81 = arith.constant 0 : index
    %156 = vector.load %arg15[%c1_80, %c0_81] : memref<2x8xf32, #tpu.memory_space<vmem>>, vector<1x8xf32>
    %157 = vector.shape_cast %156 : vector<1x8xf32> to vector<8xf32>
    %158 = vector.extract_strided_slice %134 {offsets = [0, 0], sizes = [2, 8], strides = [1, 1]} : vector<2x16xf32> to vector<2x8xf32>
    %159 = vector.extract_strided_slice %134 {offsets = [0, 8], sizes = [2, 8], strides = [1, 1]} : vector<2x16xf32> to vector<2x8xf32>
    %160 = vector.extract_strided_slice %133 {offsets = [0, 0], sizes = [2, 8], strides = [1, 1]} : vector<2x16xf32> to vector<2x8xf32>
    %161 = vector.extract_strided_slice %133 {offsets = [0, 8], sizes = [2, 8], strides = [1, 1]} : vector<2x16xf32> to vector<2x8xf32>
    %162 = vector.shape_cast %139 : vector<8xf32> to vector<1x8xf32>
    %163 = vector.broadcast %162 : vector<1x8xf32> to vector<2x8xf32>
    %164 = arith.mulf %163, %69 : vector<2x8xf32>
    %165 = vector.shape_cast %141 : vector<8xf32> to vector<1x8xf32>
    %166 = vector.broadcast %165 : vector<1x8xf32> to vector<2x8xf32>
    %167 = arith.mulf %166, %71 : vector<2x8xf32>
    %168 = arith.addf %164, %167 : vector<2x8xf32>
    %169 = vector.shape_cast %147 : vector<8xf32> to vector<1x8xf32>
    %170 = vector.broadcast %169 : vector<1x8xf32> to vector<2x8xf32>
    %171 = arith.mulf %170, %158 : vector<2x8xf32>
    %172 = arith.addf %168, %171 : vector<2x8xf32>
    %173 = vector.shape_cast %149 : vector<8xf32> to vector<1x8xf32>
    %174 = vector.broadcast %173 : vector<1x8xf32> to vector<2x8xf32>
    %175 = arith.mulf %174, %159 : vector<2x8xf32>
    %176 = arith.addf %172, %175 : vector<2x8xf32>
    %177 = vector.shape_cast %143 : vector<8xf32> to vector<1x8xf32>
    %178 = vector.broadcast %177 : vector<1x8xf32> to vector<2x8xf32>
    %179 = arith.mulf %178, %69 : vector<2x8xf32>
    %180 = vector.shape_cast %145 : vector<8xf32> to vector<1x8xf32>
    %181 = vector.broadcast %180 : vector<1x8xf32> to vector<2x8xf32>
    %182 = arith.mulf %181, %71 : vector<2x8xf32>
    %183 = arith.addf %179, %182 : vector<2x8xf32>
    %184 = vector.shape_cast %151 : vector<8xf32> to vector<1x8xf32>
    %185 = vector.broadcast %184 : vector<1x8xf32> to vector<2x8xf32>
    %186 = arith.mulf %185, %158 : vector<2x8xf32>
    %187 = arith.addf %183, %186 : vector<2x8xf32>
    %188 = vector.shape_cast %153 : vector<8xf32> to vector<1x8xf32>
    %189 = vector.broadcast %188 : vector<1x8xf32> to vector<2x8xf32>
    %190 = arith.mulf %189, %159 : vector<2x8xf32>
    %191 = arith.addf %187, %190 : vector<2x8xf32>
    %192 = arith.mulf %139, %139 : vector<8xf32>
    %193 = vector.shape_cast %192 : vector<8xf32> to vector<1x8xf32>
    %194 = vector.broadcast %193 : vector<1x8xf32> to vector<2x8xf32>
    %195 = arith.mulf %194, %72 : vector<2x8xf32>
    %cst_82 = arith.constant 2.000000e+00 : f32
    %196 = vector.broadcast %cst_82 : f32 to vector<8xf32>
    %197 = arith.mulf %196, %139 : vector<8xf32>
    %198 = arith.mulf %197, %141 : vector<8xf32>
    %199 = vector.shape_cast %198 : vector<8xf32> to vector<1x8xf32>
    %200 = vector.broadcast %199 : vector<1x8xf32> to vector<2x8xf32>
    %201 = arith.mulf %200, %73 : vector<2x8xf32>
    %202 = arith.addf %195, %201 : vector<2x8xf32>
    %203 = arith.mulf %141, %141 : vector<8xf32>
    %204 = vector.shape_cast %203 : vector<8xf32> to vector<1x8xf32>
    %205 = vector.broadcast %204 : vector<1x8xf32> to vector<2x8xf32>
    %206 = arith.mulf %205, %77 : vector<2x8xf32>
    %207 = arith.addf %202, %206 : vector<2x8xf32>
    %208 = arith.mulf %147, %147 : vector<8xf32>
    %209 = vector.shape_cast %208 : vector<8xf32> to vector<1x8xf32>
    %210 = vector.broadcast %209 : vector<1x8xf32> to vector<2x8xf32>
    %211 = arith.mulf %210, %160 : vector<2x8xf32>
    %212 = arith.addf %207, %211 : vector<2x8xf32>
    %213 = arith.mulf %149, %149 : vector<8xf32>
    %214 = vector.shape_cast %213 : vector<8xf32> to vector<1x8xf32>
    %215 = vector.broadcast %214 : vector<1x8xf32> to vector<2x8xf32>
    %216 = arith.mulf %215, %161 : vector<2x8xf32>
    %217 = arith.addf %212, %216 : vector<2x8xf32>
    %218 = vector.shape_cast %155 : vector<8xf32> to vector<1x8xf32>
    %219 = vector.broadcast %218 : vector<1x8xf32> to vector<2x8xf32>
    %220 = arith.addf %217, %219 : vector<2x8xf32>
    %221 = arith.mulf %143, %143 : vector<8xf32>
    %222 = vector.shape_cast %221 : vector<8xf32> to vector<1x8xf32>
    %223 = vector.broadcast %222 : vector<1x8xf32> to vector<2x8xf32>
    %224 = arith.mulf %223, %72 : vector<2x8xf32>
    %cst_83 = arith.constant 2.000000e+00 : f32
    %225 = vector.broadcast %cst_83 : f32 to vector<8xf32>
    %226 = arith.mulf %225, %143 : vector<8xf32>
    %227 = arith.mulf %226, %145 : vector<8xf32>
    %228 = vector.shape_cast %227 : vector<8xf32> to vector<1x8xf32>
    %229 = vector.broadcast %228 : vector<1x8xf32> to vector<2x8xf32>
    %230 = arith.mulf %229, %73 : vector<2x8xf32>
    %231 = arith.addf %224, %230 : vector<2x8xf32>
    %232 = arith.mulf %145, %145 : vector<8xf32>
    %233 = vector.shape_cast %232 : vector<8xf32> to vector<1x8xf32>
    %234 = vector.broadcast %233 : vector<1x8xf32> to vector<2x8xf32>
    %235 = arith.mulf %234, %77 : vector<2x8xf32>
    %236 = arith.addf %231, %235 : vector<2x8xf32>
    %237 = arith.mulf %151, %151 : vector<8xf32>
    %238 = vector.shape_cast %237 : vector<8xf32> to vector<1x8xf32>
    %239 = vector.broadcast %238 : vector<1x8xf32> to vector<2x8xf32>
    %240 = arith.mulf %239, %160 : vector<2x8xf32>
    %241 = arith.addf %236, %240 : vector<2x8xf32>
    %242 = arith.mulf %153, %153 : vector<8xf32>
    %243 = vector.shape_cast %242 : vector<8xf32> to vector<1x8xf32>
    %244 = vector.broadcast %243 : vector<1x8xf32> to vector<2x8xf32>
    %245 = arith.mulf %244, %161 : vector<2x8xf32>
    %246 = arith.addf %241, %245 : vector<2x8xf32>
    %247 = vector.shape_cast %157 : vector<8xf32> to vector<1x8xf32>
    %248 = vector.broadcast %247 : vector<1x8xf32> to vector<2x8xf32>
    %249 = arith.addf %246, %248 : vector<2x8xf32>
    %250 = arith.mulf %139, %143 : vector<8xf32>
    %251 = vector.shape_cast %250 : vector<8xf32> to vector<1x8xf32>
    %252 = vector.broadcast %251 : vector<1x8xf32> to vector<2x8xf32>
    %253 = arith.mulf %252, %72 : vector<2x8xf32>
    %254 = arith.mulf %139, %145 : vector<8xf32>
    %255 = arith.mulf %141, %143 : vector<8xf32>
    %256 = arith.addf %254, %255 : vector<8xf32>
    %257 = vector.shape_cast %256 : vector<8xf32> to vector<1x8xf32>
    %258 = vector.broadcast %257 : vector<1x8xf32> to vector<2x8xf32>
    %259 = arith.mulf %258, %73 : vector<2x8xf32>
    %260 = arith.addf %253, %259 : vector<2x8xf32>
    %261 = arith.mulf %141, %145 : vector<8xf32>
    %262 = vector.shape_cast %261 : vector<8xf32> to vector<1x8xf32>
    %263 = vector.broadcast %262 : vector<1x8xf32> to vector<2x8xf32>
    %264 = arith.mulf %263, %77 : vector<2x8xf32>
    %265 = arith.addf %260, %264 : vector<2x8xf32>
    %266 = arith.mulf %147, %151 : vector<8xf32>
    %267 = vector.shape_cast %266 : vector<8xf32> to vector<1x8xf32>
    %268 = vector.broadcast %267 : vector<1x8xf32> to vector<2x8xf32>
    %269 = arith.mulf %268, %160 : vector<2x8xf32>
    %270 = arith.addf %265, %269 : vector<2x8xf32>
    %271 = arith.mulf %149, %153 : vector<8xf32>
    %272 = vector.shape_cast %271 : vector<8xf32> to vector<1x8xf32>
    %273 = vector.broadcast %272 : vector<1x8xf32> to vector<2x8xf32>
    %274 = arith.mulf %273, %161 : vector<2x8xf32>
    %275 = arith.addf %270, %274 : vector<2x8xf32>
    %276 = tpu.concatenate %176, %191 in 1 : vector<2x8xf32>, vector<2x8xf32> -> vector<2x16xf32>
    %c0_84 = arith.constant 0 : index
    %c0_85 = arith.constant 0 : index
    %c0_86 = arith.constant 0 : index
    %277 = vector.load %arg36[%c0_84, %c0_85, %c0_86] : memref<1x2x16xf32, #tpu.memory_space<vmem>>, vector<1x2x16xf32>
    %278 = vector.shape_cast %277 : vector<1x2x16xf32> to vector<2x16xf32>
    %279 = vector.shape_cast %276 : vector<2x16xf32> to vector<1x2x16xf32>
    tpu.vector_store %arg36[%c0_84, %c0_85, %c0_86], %279 {strides = array<i32>} : memref<1x2x16xf32, #tpu.memory_space<vmem>>, vector<1x2x16xf32>,
    %280 = tpu.concatenate %220, %249, %275 in 1 : vector<2x8xf32>, vector<2x8xf32>, vector<2x8xf32> -> vector<2x24xf32>
    %c0_87 = arith.constant 0 : index
    %c0_88 = arith.constant 0 : index
    %c0_89 = arith.constant 0 : index
    %281 = vector.load %arg37[%c0_87, %c0_88, %c0_89] : memref<1x2x24xf32, #tpu.memory_space<vmem>>, vector<1x2x24xf32>
    %282 = vector.shape_cast %281 : vector<1x2x24xf32> to vector<2x24xf32>
    %283 = vector.shape_cast %280 : vector<2x24xf32> to vector<1x2x24xf32>
    tpu.vector_store %arg37[%c0_87, %c0_88, %c0_89], %283 {strides = array<i32>} : memref<1x2x24xf32, #tpu.memory_space<vmem>>, vector<1x2x24xf32>,
    %c0_90 = arith.constant 0 : index
    %c0_91 = arith.constant 0 : index
    %284 = vector.load %arg39[%c0_90, %c0_91] : memref<2x8xf32, #tpu.memory_space<vmem>>, vector<2x8xf32>
    tpu.vector_store %arg39[%c0_90, %c0_91], %176 {strides = array<i32>} : memref<2x8xf32, #tpu.memory_space<vmem>>, vector<2x8xf32>,
    %c0_92 = arith.constant 0 : index
    %c0_93 = arith.constant 0 : index
    %285 = vector.load %arg40[%c0_92, %c0_93] : memref<2x8xf32, #tpu.memory_space<vmem>>, vector<2x8xf32>
    tpu.vector_store %arg40[%c0_92, %c0_93], %191 {strides = array<i32>} : memref<2x8xf32, #tpu.memory_space<vmem>>, vector<2x8xf32>,
    %c0_94 = arith.constant 0 : index
    %c0_95 = arith.constant 0 : index
    %286 = vector.load %arg41[%c0_94, %c0_95] : memref<2x8xf32, #tpu.memory_space<vmem>>, vector<2x8xf32>
    tpu.vector_store %arg41[%c0_94, %c0_95], %220 {strides = array<i32>} : memref<2x8xf32, #tpu.memory_space<vmem>>, vector<2x8xf32>,
    %c0_96 = arith.constant 0 : index
    %c0_97 = arith.constant 0 : index
    %287 = vector.load %arg42[%c0_96, %c0_97] : memref<2x8xf32, #tpu.memory_space<vmem>>, vector<2x8xf32>
    tpu.vector_store %arg42[%c0_96, %c0_97], %249 {strides = array<i32>} : memref<2x8xf32, #tpu.memory_space<vmem>>, vector<2x8xf32>,
    %c0_98 = arith.constant 0 : index
    %c0_99 = arith.constant 0 : index
    %288 = vector.load %arg43[%c0_98, %c0_99] : memref<2x8xf32, #tpu.memory_space<vmem>>, vector<2x8xf32>
    tpu.vector_store %arg43[%c0_98, %c0_99], %275 {strides = array<i32>} : memref<2x8xf32, #tpu.memory_space<vmem>>, vector<2x8xf32>,
    %c0_100 = arith.constant 0 : index
    %c0_101 = arith.constant 0 : index
    %289 = vector.load %arg16[%c0_100, %c0_101] : memref<6x32xbf16, #tpu.memory_space<vmem>>, vector<6x32xbf16>
    %cst_102 = arith.constant dense<0.000000e+00> : vector<8x32xf32>
    %290 = tpu.matmul %5, %289, %cst_102 {dimension_numbers = #tpu.dot_dimension_numbers<[1], [0], [0], [1], [0, 0, 1, 1], [], []>} : vector<8x6xbf16>, vector<6x32xbf16>, vector<8x32xf32> -> vector<8x32xf32>
    %c0_103 = arith.constant 0 : index
    %c0_104 = arith.constant 0 : index
    %291 = vector.load %arg17[%c0_103, %c0_104] : memref<1x32xf32, #tpu.memory_space<vmem>>, vector<1x32xf32>
    %292 = vector.broadcast %291 : vector<1x32xf32> to vector<8x32xf32>
    %293 = arith.addf %290, %292 : vector<8x32xf32>
    %cst_105 = arith.constant 0.000000e+00 : f32
    %294 = vector.broadcast %cst_105 : f32 to vector<8x32xf32>
    %295 = arith.maximumf %293, %294 : vector<8x32xf32>
    %296 = arith.truncf %295 : vector<8x32xf32> to vector<8x32xbf16>
    %c0_106 = arith.constant 0 : index
    %c0_107 = arith.constant 0 : index
    %297 = vector.load %arg18[%c0_106, %c0_107] : memref<32x16xbf16, #tpu.memory_space<vmem>>, vector<32x16xbf16>
    %cst_108 = arith.constant dense<0.000000e+00> : vector<8x16xf32>
    %298 = tpu.matmul %296, %297, %cst_108 {dimension_numbers = #tpu.dot_dimension_numbers<[1], [0], [0], [1], [0, 0, 1, 1], [], []>} : vector<8x32xbf16>, vector<32x16xbf16>, vector<8x16xf32> -> vector<8x16xf32>
    %c0_109 = arith.constant 0 : index
    %c0_110 = arith.constant 0 : index
    %299 = vector.load %arg19[%c0_109, %c0_110] : memref<1x16xf32, #tpu.memory_space<vmem>>, vector<1x16xf32>
    %300 = vector.broadcast %299 : vector<1x16xf32> to vector<8x16xf32>
    %301 = arith.addf %298, %300 : vector<8x16xf32>
    %302 = vector.extract_strided_slice %301 {offsets = [0, 0], sizes = [8, 8], strides = [1, 1]} : vector<8x16xf32> to vector<8x8xf32>
    %cst_111 = arith.constant 5.000000e-01 : f32
    %303 = vector.broadcast %cst_111 : f32 to vector<8x1xf32>
    %304 = arith.cmpf ogt, %7, %303 : vector<8x1xf32>
    %305 = vector.extract_strided_slice %301 {offsets = [0, 8], sizes = [8, 8], strides = [1, 1]} : vector<8x16xf32> to vector<8x8xf32>
    %cst_112 = arith.constant 0.000000e+00 : f32
    %306 = vector.broadcast %cst_112 : f32 to vector<8x8xf32>
    %307 = arith.cmpf ogt, %305, %306 : vector<8x8xf32>
    %cst_113 = arith.constant 1.000000e+00 : f32
    %308 = vector.broadcast %cst_113 : f32 to vector<8x8xf32>
    %309 = arith.addf %305, %308 : vector<8x8xf32>
    %cst_114 = arith.constant 0.000000e+00 : f32
    %310 = vector.broadcast %cst_114 : f32 to vector<8x8xf32>
    %311 = arith.minimumf %305, %310 : vector<8x8xf32>
    %312 = math.exp %311 : vector<8x8xf32>
    %313 = arith.select %307, %309, %312 : vector<8x8xi1>, vector<8x8xf32>
    %cst_115 = arith.constant 9.99999997E-7 : f32
    %314 = vector.broadcast %cst_115 : f32 to vector<8x8xf32>
    %315 = arith.addf %313, %314 : vector<8x8xf32>
    %cst_116 = arith.constant 1.000000e+00 : f32
    %316 = vector.broadcast %cst_116 : f32 to vector<8x8xf32>
    %317 = arith.divf %316, %315 : vector<8x8xf32>
    %cst_117 = arith.constant 0.000000e+00 : f32
    %318 = vector.shape_cast %304 : vector<8x1xi1> to vector<8x1xi1>
    %319 = vector.broadcast %318 : vector<8x1xi1> to vector<8x8xi1>
    %320 = vector.broadcast %cst_117 : f32 to vector<8x8xf32>
    %321 = arith.select %319, %317, %320 : vector<8x8xi1>, vector<8x8xf32>
    %c0_118 = arith.constant 0 : index
    %c0_119 = arith.constant 0 : index
    %c0_120 = arith.constant 0 : index
    %322 = vector.load %arg2[%c0_118, %c0_119, %c0_120] : memref<1x8x3xf32, #tpu.memory_space<vmem>>, vector<1x8x3xf32>
    %323 = vector.shape_cast %322 : vector<1x8x3xf32> to vector<8x3xf32>
    %324 = arith.truncf %323 : vector<8x3xf32> to vector<8x3xbf16>
    %c0_121 = arith.constant 0 : index
    %c0_122 = arith.constant 0 : index
    %325 = vector.load %arg22[%c0_121, %c0_122] : memref<3x16xbf16, #tpu.memory_space<vmem>>, vector<3x16xbf16>
    %cst_123 = arith.constant dense<0.000000e+00> : vector<8x16xf32>
    %326 = tpu.matmul %324, %325, %cst_123 {dimension_numbers = #tpu.dot_dimension_numbers<[1], [0], [0], [1], [0, 0, 1, 1], [], []>} : vector<8x3xbf16>, vector<3x16xbf16>, vector<8x16xf32> -> vector<8x16xf32>
    %c0_124 = arith.constant 0 : index
    %c0_125 = arith.constant 0 : index
    %327 = vector.load %arg21[%c0_124, %c0_125] : memref<4x8xf32, #tpu.memory_space<vmem>>, vector<1x8xf32>
    %328 = vector.shape_cast %327 : vector<1x8xf32> to vector<8xf32>
    %c1_126 = arith.constant 1 : index
    %c0_127 = arith.constant 0 : index
    %329 = vector.load %arg21[%c1_126, %c0_127] : memref<4x8xf32, #tpu.memory_space<vmem>>, vector<1x8xf32>
    %330 = vector.shape_cast %329 : vector<1x8xf32> to vector<8xf32>
    %c2_128 = arith.constant 2 : index
    %c0_129 = arith.constant 0 : index
    %331 = vector.load %arg21[%c2_128, %c0_129] : memref<4x8xf32, #tpu.memory_space<vmem>>, vector<1x8xf32>
    %332 = vector.shape_cast %331 : vector<1x8xf32> to vector<8xf32>
    %c3_130 = arith.constant 3 : index
    %c0_131 = arith.constant 0 : index
    %333 = vector.load %arg21[%c3_130, %c0_131] : memref<4x8xf32, #tpu.memory_space<vmem>>, vector<1x8xf32>
    %334 = vector.shape_cast %333 : vector<1x8xf32> to vector<8xf32>
    %c0_132 = arith.constant 0 : index
    %c0_133 = arith.constant 0 : index
    %335 = vector.load %arg23[%c0_132, %c0_133] : memref<2x8xf32, #tpu.memory_space<vmem>>, vector<1x8xf32>
    %336 = vector.shape_cast %335 : vector<1x8xf32> to vector<8xf32>
    %c1_134 = arith.constant 1 : index
    %c0_135 = arith.constant 0 : index
    %337 = vector.load %arg23[%c1_134, %c0_135] : memref<2x8xf32, #tpu.memory_space<vmem>>, vector<1x8xf32>
    %338 = vector.shape_cast %337 : vector<1x8xf32> to vector<8xf32>
    %339 = vector.shape_cast %328 : vector<8xf32> to vector<1x8xf32>
    %340 = vector.broadcast %339 : vector<1x8xf32> to vector<2x8xf32>
    %341 = arith.mulf %340, %69 : vector<2x8xf32>
    %342 = vector.shape_cast %330 : vector<8xf32> to vector<1x8xf32>
    %343 = vector.broadcast %342 : vector<1x8xf32> to vector<2x8xf32>
    %344 = arith.mulf %343, %71 : vector<2x8xf32>
    %345 = arith.addf %341, %344 : vector<2x8xf32>
    %346 = vector.shape_cast %332 : vector<8xf32> to vector<1x8xf32>
    %347 = vector.broadcast %346 : vector<1x8xf32> to vector<2x8xf32>
    %348 = arith.mulf %347, %69 : vector<2x8xf32>
    %349 = vector.shape_cast %334 : vector<8xf32> to vector<1x8xf32>
    %350 = vector.broadcast %349 : vector<1x8xf32> to vector<2x8xf32>
    %351 = arith.mulf %350, %71 : vector<2x8xf32>
    %352 = arith.addf %348, %351 : vector<2x8xf32>
    %353 = arith.mulf %328, %328 : vector<8xf32>
    %354 = vector.shape_cast %353 : vector<8xf32> to vector<1x8xf32>
    %355 = vector.broadcast %354 : vector<1x8xf32> to vector<2x8xf32>
    %356 = arith.mulf %355, %72 : vector<2x8xf32>
    %cst_136 = arith.constant 2.000000e+00 : f32
    %357 = vector.broadcast %cst_136 : f32 to vector<8xf32>
    %358 = arith.mulf %357, %328 : vector<8xf32>
    %359 = arith.mulf %358, %330 : vector<8xf32>
    %360 = vector.shape_cast %359 : vector<8xf32> to vector<1x8xf32>
    %361 = vector.broadcast %360 : vector<1x8xf32> to vector<2x8xf32>
    %362 = arith.mulf %361, %73 : vector<2x8xf32>
    %363 = arith.addf %356, %362 : vector<2x8xf32>
    %364 = arith.mulf %330, %330 : vector<8xf32>
    %365 = vector.shape_cast %364 : vector<8xf32> to vector<1x8xf32>
    %366 = vector.broadcast %365 : vector<1x8xf32> to vector<2x8xf32>
    %367 = arith.mulf %366, %77 : vector<2x8xf32>
    %368 = arith.addf %363, %367 : vector<2x8xf32>
    %369 = vector.shape_cast %336 : vector<8xf32> to vector<1x8xf32>
    %370 = vector.broadcast %369 : vector<1x8xf32> to vector<2x8xf32>
    %371 = arith.addf %368, %370 : vector<2x8xf32>
    %372 = arith.mulf %332, %332 : vector<8xf32>
    %373 = vector.shape_cast %372 : vector<8xf32> to vector<1x8xf32>
    %374 = vector.broadcast %373 : vector<1x8xf32> to vector<2x8xf32>
    %375 = arith.mulf %374, %72 : vector<2x8xf32>
    %cst_137 = arith.constant 2.000000e+00 : f32
    %376 = vector.broadcast %cst_137 : f32 to vector<8xf32>
    %377 = arith.mulf %376, %332 : vector<8xf32>
    %378 = arith.mulf %377, %334 : vector<8xf32>
    %379 = vector.shape_cast %378 : vector<8xf32> to vector<1x8xf32>
    %380 = vector.broadcast %379 : vector<1x8xf32> to vector<2x8xf32>
    %381 = arith.mulf %380, %73 : vector<2x8xf32>
    %382 = arith.addf %375, %381 : vector<2x8xf32>
    %383 = arith.mulf %334, %334 : vector<8xf32>
    %384 = vector.shape_cast %383 : vector<8xf32> to vector<1x8xf32>
    %385 = vector.broadcast %384 : vector<1x8xf32> to vector<2x8xf32>
    %386 = arith.mulf %385, %77 : vector<2x8xf32>
    %387 = arith.addf %382, %386 : vector<2x8xf32>
    %388 = vector.shape_cast %338 : vector<8xf32> to vector<1x8xf32>
    %389 = vector.broadcast %388 : vector<1x8xf32> to vector<2x8xf32>
    %390 = arith.addf %387, %389 : vector<2x8xf32>
    %391 = arith.mulf %328, %332 : vector<8xf32>
    %392 = vector.shape_cast %391 : vector<8xf32> to vector<1x8xf32>
    %393 = vector.broadcast %392 : vector<1x8xf32> to vector<2x8xf32>
    %394 = arith.mulf %393, %72 : vector<2x8xf32>
    %395 = arith.mulf %328, %334 : vector<8xf32>
    %396 = arith.mulf %330, %332 : vector<8xf32>
    %397 = arith.addf %395, %396 : vector<8xf32>
    %398 = vector.shape_cast %397 : vector<8xf32> to vector<1x8xf32>
    %399 = vector.broadcast %398 : vector<1x8xf32> to vector<2x8xf32>
    %400 = arith.mulf %399, %73 : vector<2x8xf32>
    %401 = arith.addf %394, %400 : vector<2x8xf32>
    %402 = arith.mulf %330, %334 : vector<8xf32>
    %403 = vector.shape_cast %402 : vector<8xf32> to vector<1x8xf32>
    %404 = vector.broadcast %403 : vector<1x8xf32> to vector<2x8xf32>
    %405 = arith.mulf %404, %77 : vector<2x8xf32>
    %406 = arith.addf %401, %405 : vector<2x8xf32>
    %c0_138 = arith.constant 0 : index
    %c0_139 = arith.constant 0 : index
    %407 = vector.load %arg20[%c0_138, %c0_139] : memref<4x8xf32, #tpu.memory_space<vmem>>, vector<1x8xf32>
    %408 = vector.shape_cast %407 : vector<1x8xf32> to vector<8xf32>
    %c1_140 = arith.constant 1 : index
    %c0_141 = arith.constant 0 : index
    %409 = vector.load %arg20[%c1_140, %c0_141] : memref<4x8xf32, #tpu.memory_space<vmem>>, vector<1x8xf32>
    %410 = vector.shape_cast %409 : vector<1x8xf32> to vector<8xf32>
    %c2_142 = arith.constant 2 : index
    %c0_143 = arith.constant 0 : index
    %411 = vector.load %arg20[%c2_142, %c0_143] : memref<4x8xf32, #tpu.memory_space<vmem>>, vector<1x8xf32>
    %412 = vector.shape_cast %411 : vector<1x8xf32> to vector<8xf32>
    %c3_144 = arith.constant 3 : index
    %c0_145 = arith.constant 0 : index
    %413 = vector.load %arg20[%c3_144, %c0_145] : memref<4x8xf32, #tpu.memory_space<vmem>>, vector<1x8xf32>
    %414 = vector.shape_cast %413 : vector<1x8xf32> to vector<8xf32>
    %c0_146 = arith.constant 0 : index
    %c0_147 = arith.constant 0 : index
    %415 = vector.load %arg44[%c0_146, %c0_147] : memref<2x8xf32, #tpu.memory_space<vmem>>, vector<2x8xf32>
    %c0_148 = arith.constant 0 : index
    %c0_149 = arith.constant 0 : index
    %416 = vector.load %arg45[%c0_148, %c0_149] : memref<2x8xf32, #tpu.memory_space<vmem>>, vector<2x8xf32>
    %c0_150 = arith.constant 0 : index
    %c0_151 = arith.constant 0 : index
    %417 = vector.load %arg46[%c0_150, %c0_151] : memref<2x8xf32, #tpu.memory_space<vmem>>, vector<2x8xf32>
    %c0_152 = arith.constant 0 : index
    %c0_153 = arith.constant 0 : index
    %418 = vector.load %arg47[%c0_152, %c0_153] : memref<2x8xf32, #tpu.memory_space<vmem>>, vector<2x8xf32>
    %c0_154 = arith.constant 0 : index
    %c0_155 = arith.constant 0 : index
    %419 = vector.load %arg48[%c0_154, %c0_155] : memref<2x8xf32, #tpu.memory_space<vmem>>, vector<2x8xf32>
    %420 = vector.extract_strided_slice %321 {offsets = [0, 0], sizes = [2, 8], strides = [1, 1]} : vector<8x8xf32> to vector<2x8xf32>
    %421 = vector.extract_strided_slice %302 {offsets = [0, 0], sizes = [2, 8], strides = [1, 1]} : vector<8x8xf32> to vector<2x8xf32>
    %422 = arith.mulf %417, %420 : vector<2x8xf32>
    %cst_156 = arith.constant 1.000000e+00 : f32
    %423 = vector.broadcast %cst_156 : f32 to vector<2x8xf32>
    %424 = arith.addf %423, %422 : vector<2x8xf32>
    %cst_157 = arith.constant 1.000000e+00 : f32
    %425 = vector.broadcast %cst_157 : f32 to vector<2x8xf32>
    %426 = arith.divf %425, %424 : vector<2x8xf32>
    %427 = arith.subf %421, %415 : vector<2x8xf32>
    %428 = arith.mulf %420, %427 : vector<2x8xf32>
    %429 = arith.mulf %428, %426 : vector<2x8xf32>
    %430 = arith.mulf %417, %429 : vector<2x8xf32>
    %431 = arith.addf %415, %430 : vector<2x8xf32>
    %432 = arith.mulf %419, %429 : vector<2x8xf32>
    %433 = arith.addf %416, %432 : vector<2x8xf32>
    %434 = arith.mulf %417, %426 : vector<2x8xf32>
    %435 = arith.mulf %419, %426 : vector<2x8xf32>
    %436 = arith.mulf %419, %419 : vector<2x8xf32>
    %437 = arith.mulf %436, %420 : vector<2x8xf32>
    %438 = arith.mulf %437, %426 : vector<2x8xf32>
    %439 = arith.subf %418, %438 : vector<2x8xf32>
    %440 = vector.extract_strided_slice %326 {offsets = [0, 0], sizes = [2, 16], strides = [1, 1]} : vector<8x16xf32> to vector<2x16xf32>
    %441 = vector.shape_cast %408 : vector<8xf32> to vector<1x8xf32>
    %442 = vector.broadcast %441 : vector<1x8xf32> to vector<2x8xf32>
    %443 = arith.mulf %442, %431 : vector<2x8xf32>
    %444 = vector.shape_cast %410 : vector<8xf32> to vector<1x8xf32>
    %445 = vector.broadcast %444 : vector<1x8xf32> to vector<2x8xf32>
    %446 = arith.mulf %445, %433 : vector<2x8xf32>
    %447 = arith.addf %443, %446 : vector<2x8xf32>
    %448 = vector.extract_strided_slice %440 {offsets = [0, 0], sizes = [2, 8], strides = [1, 1]} : vector<2x16xf32> to vector<2x8xf32>
    %449 = arith.addf %447, %448 : vector<2x8xf32>
    %450 = arith.addf %449, %345 : vector<2x8xf32>
    %451 = vector.shape_cast %412 : vector<8xf32> to vector<1x8xf32>
    %452 = vector.broadcast %451 : vector<1x8xf32> to vector<2x8xf32>
    %453 = arith.mulf %452, %431 : vector<2x8xf32>
    %454 = vector.shape_cast %414 : vector<8xf32> to vector<1x8xf32>
    %455 = vector.broadcast %454 : vector<1x8xf32> to vector<2x8xf32>
    %456 = arith.mulf %455, %433 : vector<2x8xf32>
    %457 = arith.addf %453, %456 : vector<2x8xf32>
    %458 = vector.extract_strided_slice %440 {offsets = [0, 8], sizes = [2, 8], strides = [1, 1]} : vector<2x16xf32> to vector<2x8xf32>
    %459 = arith.addf %457, %458 : vector<2x8xf32>
    %460 = arith.addf %459, %352 : vector<2x8xf32>
    %461 = arith.mulf %408, %408 : vector<8xf32>
    %462 = vector.shape_cast %461 : vector<8xf32> to vector<1x8xf32>
    %463 = vector.broadcast %462 : vector<1x8xf32> to vector<2x8xf32>
    %464 = arith.mulf %463, %434 : vector<2x8xf32>
    %cst_158 = arith.constant 2.000000e+00 : f32
    %465 = vector.broadcast %cst_158 : f32 to vector<8xf32>
    %466 = arith.mulf %465, %408 : vector<8xf32>
    %467 = arith.mulf %466, %410 : vector<8xf32>
    %468 = vector.shape_cast %467 : vector<8xf32> to vector<1x8xf32>
    %469 = vector.broadcast %468 : vector<1x8xf32> to vector<2x8xf32>
    %470 = arith.mulf %469, %435 : vector<2x8xf32>
    %471 = arith.addf %464, %470 : vector<2x8xf32>
    %472 = arith.mulf %410, %410 : vector<8xf32>
    %473 = vector.shape_cast %472 : vector<8xf32> to vector<1x8xf32>
    %474 = vector.broadcast %473 : vector<1x8xf32> to vector<2x8xf32>
    %475 = arith.mulf %474, %439 : vector<2x8xf32>
    %476 = arith.addf %471, %475 : vector<2x8xf32>
    %477 = arith.addf %476, %371 : vector<2x8xf32>
    %478 = arith.mulf %412, %412 : vector<8xf32>
    %479 = vector.shape_cast %478 : vector<8xf32> to vector<1x8xf32>
    %480 = vector.broadcast %479 : vector<1x8xf32> to vector<2x8xf32>
    %481 = arith.mulf %480, %434 : vector<2x8xf32>
    %cst_159 = arith.constant 2.000000e+00 : f32
    %482 = vector.broadcast %cst_159 : f32 to vector<8xf32>
    %483 = arith.mulf %482, %412 : vector<8xf32>
    %484 = arith.mulf %483, %414 : vector<8xf32>
    %485 = vector.shape_cast %484 : vector<8xf32> to vector<1x8xf32>
    %486 = vector.broadcast %485 : vector<1x8xf32> to vector<2x8xf32>
    %487 = arith.mulf %486, %435 : vector<2x8xf32>
    %488 = arith.addf %481, %487 : vector<2x8xf32>
    %489 = arith.mulf %414, %414 : vector<8xf32>
    %490 = vector.shape_cast %489 : vector<8xf32> to vector<1x8xf32>
    %491 = vector.broadcast %490 : vector<1x8xf32> to vector<2x8xf32>
    %492 = arith.mulf %491, %439 : vector<2x8xf32>
    %493 = arith.addf %488, %492 : vector<2x8xf32>
    %494 = arith.addf %493, %390 : vector<2x8xf32>
    %495 = arith.mulf %408, %412 : vector<8xf32>
    %496 = vector.shape_cast %495 : vector<8xf32> to vector<1x8xf32>
    %497 = vector.broadcast %496 : vector<1x8xf32> to vector<2x8xf32>
    %498 = arith.mulf %497, %434 : vector<2x8xf32>
    %499 = arith.mulf %408, %414 : vector<8xf32>
    %500 = arith.mulf %410, %412 : vector<8xf32>
    %501 = arith.addf %499, %500 : vector<8xf32>
    %502 = vector.shape_cast %501 : vector<8xf32> to vector<1x8xf32>
    %503 = vector.broadcast %502 : vector<1x8xf32> to vector<2x8xf32>
    %504 = arith.mulf %503, %435 : vector<2x8xf32>
    %505 = arith.addf %498, %504 : vector<2x8xf32>
    %506 = arith.mulf %410, %414 : vector<8xf32>
    %507 = vector.shape_cast %506 : vector<8xf32> to vector<1x8xf32>
    %508 = vector.broadcast %507 : vector<1x8xf32> to vector<2x8xf32>
    %509 = arith.mulf %508, %439 : vector<2x8xf32>
    %510 = arith.addf %505, %509 : vector<2x8xf32>
    %511 = arith.addf %510, %406 : vector<2x8xf32>
    %c0_160 = arith.constant 0 : index
    %c0_161 = arith.constant 0 : index
    %512 = vector.load %arg49[%c0_160, %c0_161] : memref<8x8xf32, #tpu.memory_space<vmem>>, vector<2x8xf32>
    tpu.vector_store %arg49[%c0_160, %c0_161], %450 {strides = array<i32>} : memref<8x8xf32, #tpu.memory_space<vmem>>, vector<2x8xf32>,
    %c0_162 = arith.constant 0 : index
    %c0_163 = arith.constant 0 : index
    %513 = vector.load %arg50[%c0_162, %c0_163] : memref<8x8xf32, #tpu.memory_space<vmem>>, vector<2x8xf32>
    tpu.vector_store %arg50[%c0_162, %c0_163], %460 {strides = array<i32>} : memref<8x8xf32, #tpu.memory_space<vmem>>, vector<2x8xf32>,
    %c0_164 = arith.constant 0 : index
    %c0_165 = arith.constant 0 : index
    %514 = vector.load %arg51[%c0_164, %c0_165] : memref<8x8xf32, #tpu.memory_space<vmem>>, vector<2x8xf32>
    tpu.vector_store %arg51[%c0_164, %c0_165], %477 {strides = array<i32>} : memref<8x8xf32, #tpu.memory_space<vmem>>, vector<2x8xf32>,
    %c0_166 = arith.constant 0 : index
    %c0_167 = arith.constant 0 : index
    %515 = vector.load %arg52[%c0_166, %c0_167] : memref<8x8xf32, #tpu.memory_space<vmem>>, vector<2x8xf32>
    tpu.vector_store %arg52[%c0_166, %c0_167], %494 {strides = array<i32>} : memref<8x8xf32, #tpu.memory_space<vmem>>, vector<2x8xf32>,
    %c0_168 = arith.constant 0 : index
    %c0_169 = arith.constant 0 : index
    %516 = vector.load %arg53[%c0_168, %c0_169] : memref<8x8xf32, #tpu.memory_space<vmem>>, vector<2x8xf32>
    tpu.vector_store %arg53[%c0_168, %c0_169], %511 {strides = array<i32>} : memref<8x8xf32, #tpu.memory_space<vmem>>, vector<2x8xf32>,
    %517 = vector.extract_strided_slice %321 {offsets = [2, 0], sizes = [2, 8], strides = [1, 1]} : vector<8x8xf32> to vector<2x8xf32>
    %518 = vector.extract_strided_slice %302 {offsets = [2, 0], sizes = [2, 8], strides = [1, 1]} : vector<8x8xf32> to vector<2x8xf32>
    %519 = arith.mulf %477, %517 : vector<2x8xf32>
    %cst_170 = arith.constant 1.000000e+00 : f32
    %520 = vector.broadcast %cst_170 : f32 to vector<2x8xf32>
    %521 = arith.addf %520, %519 : vector<2x8xf32>
    %cst_171 = arith.constant 1.000000e+00 : f32
    %522 = vector.broadcast %cst_171 : f32 to vector<2x8xf32>
    %523 = arith.divf %522, %521 : vector<2x8xf32>
    %524 = arith.subf %518, %450 : vector<2x8xf32>
    %525 = arith.mulf %517, %524 : vector<2x8xf32>
    %526 = arith.mulf %525, %523 : vector<2x8xf32>
    %527 = arith.mulf %477, %526 : vector<2x8xf32>
    %528 = arith.addf %450, %527 : vector<2x8xf32>
    %529 = arith.mulf %511, %526 : vector<2x8xf32>
    %530 = arith.addf %460, %529 : vector<2x8xf32>
    %531 = arith.mulf %477, %523 : vector<2x8xf32>
    %532 = arith.mulf %511, %523 : vector<2x8xf32>
    %533 = arith.mulf %511, %511 : vector<2x8xf32>
    %534 = arith.mulf %533, %517 : vector<2x8xf32>
    %535 = arith.mulf %534, %523 : vector<2x8xf32>
    %536 = arith.subf %494, %535 : vector<2x8xf32>
    %537 = vector.extract_strided_slice %326 {offsets = [2, 0], sizes = [2, 16], strides = [1, 1]} : vector<8x16xf32> to vector<2x16xf32>
    %538 = vector.shape_cast %408 : vector<8xf32> to vector<1x8xf32>
    %539 = vector.broadcast %538 : vector<1x8xf32> to vector<2x8xf32>
    %540 = arith.mulf %539, %528 : vector<2x8xf32>
    %541 = vector.shape_cast %410 : vector<8xf32> to vector<1x8xf32>
    %542 = vector.broadcast %541 : vector<1x8xf32> to vector<2x8xf32>
    %543 = arith.mulf %542, %530 : vector<2x8xf32>
    %544 = arith.addf %540, %543 : vector<2x8xf32>
    %545 = vector.extract_strided_slice %537 {offsets = [0, 0], sizes = [2, 8], strides = [1, 1]} : vector<2x16xf32> to vector<2x8xf32>
    %546 = arith.addf %544, %545 : vector<2x8xf32>
    %547 = arith.addf %546, %345 : vector<2x8xf32>
    %548 = vector.shape_cast %412 : vector<8xf32> to vector<1x8xf32>
    %549 = vector.broadcast %548 : vector<1x8xf32> to vector<2x8xf32>
    %550 = arith.mulf %549, %528 : vector<2x8xf32>
    %551 = vector.shape_cast %414 : vector<8xf32> to vector<1x8xf32>
    %552 = vector.broadcast %551 : vector<1x8xf32> to vector<2x8xf32>
    %553 = arith.mulf %552, %530 : vector<2x8xf32>
    %554 = arith.addf %550, %553 : vector<2x8xf32>
    %555 = vector.extract_strided_slice %537 {offsets = [0, 8], sizes = [2, 8], strides = [1, 1]} : vector<2x16xf32> to vector<2x8xf32>
    %556 = arith.addf %554, %555 : vector<2x8xf32>
    %557 = arith.addf %556, %352 : vector<2x8xf32>
    %558 = arith.mulf %408, %408 : vector<8xf32>
    %559 = vector.shape_cast %558 : vector<8xf32> to vector<1x8xf32>
    %560 = vector.broadcast %559 : vector<1x8xf32> to vector<2x8xf32>
    %561 = arith.mulf %560, %531 : vector<2x8xf32>
    %cst_172 = arith.constant 2.000000e+00 : f32
    %562 = vector.broadcast %cst_172 : f32 to vector<8xf32>
    %563 = arith.mulf %562, %408 : vector<8xf32>
    %564 = arith.mulf %563, %410 : vector<8xf32>
    %565 = vector.shape_cast %564 : vector<8xf32> to vector<1x8xf32>
    %566 = vector.broadcast %565 : vector<1x8xf32> to vector<2x8xf32>
    %567 = arith.mulf %566, %532 : vector<2x8xf32>
    %568 = arith.addf %561, %567 : vector<2x8xf32>
    %569 = arith.mulf %410, %410 : vector<8xf32>
    %570 = vector.shape_cast %569 : vector<8xf32> to vector<1x8xf32>
    %571 = vector.broadcast %570 : vector<1x8xf32> to vector<2x8xf32>
    %572 = arith.mulf %571, %536 : vector<2x8xf32>
    %573 = arith.addf %568, %572 : vector<2x8xf32>
    %574 = arith.addf %573, %371 : vector<2x8xf32>
    %575 = arith.mulf %412, %412 : vector<8xf32>
    %576 = vector.shape_cast %575 : vector<8xf32> to vector<1x8xf32>
    %577 = vector.broadcast %576 : vector<1x8xf32> to vector<2x8xf32>
    %578 = arith.mulf %577, %531 : vector<2x8xf32>
    %cst_173 = arith.constant 2.000000e+00 : f32
    %579 = vector.broadcast %cst_173 : f32 to vector<8xf32>
    %580 = arith.mulf %579, %412 : vector<8xf32>
    %581 = arith.mulf %580, %414 : vector<8xf32>
    %582 = vector.shape_cast %581 : vector<8xf32> to vector<1x8xf32>
    %583 = vector.broadcast %582 : vector<1x8xf32> to vector<2x8xf32>
    %584 = arith.mulf %583, %532 : vector<2x8xf32>
    %585 = arith.addf %578, %584 : vector<2x8xf32>
    %586 = arith.mulf %414, %414 : vector<8xf32>
    %587 = vector.shape_cast %586 : vector<8xf32> to vector<1x8xf32>
    %588 = vector.broadcast %587 : vector<1x8xf32> to vector<2x8xf32>
    %589 = arith.mulf %588, %536 : vector<2x8xf32>
    %590 = arith.addf %585, %589 : vector<2x8xf32>
    %591 = arith.addf %590, %390 : vector<2x8xf32>
    %592 = arith.mulf %408, %412 : vector<8xf32>
    %593 = vector.shape_cast %592 : vector<8xf32> to vector<1x8xf32>
    %594 = vector.broadcast %593 : vector<1x8xf32> to vector<2x8xf32>
    %595 = arith.mulf %594, %531 : vector<2x8xf32>
    %596 = arith.mulf %408, %414 : vector<8xf32>
    %597 = arith.mulf %410, %412 : vector<8xf32>
    %598 = arith.addf %596, %597 : vector<8xf32>
    %599 = vector.shape_cast %598 : vector<8xf32> to vector<1x8xf32>
    %600 = vector.broadcast %599 : vector<1x8xf32> to vector<2x8xf32>
    %601 = arith.mulf %600, %532 : vector<2x8xf32>
    %602 = arith.addf %595, %601 : vector<2x8xf32>
    %603 = arith.mulf %410, %414 : vector<8xf32>
    %604 = vector.shape_cast %603 : vector<8xf32> to vector<1x8xf32>
    %605 = vector.broadcast %604 : vector<1x8xf32> to vector<2x8xf32>
    %606 = arith.mulf %605, %536 : vector<2x8xf32>
    %607 = arith.addf %602, %606 : vector<2x8xf32>
    %608 = arith.addf %607, %406 : vector<2x8xf32>
    %c2_174 = arith.constant 2 : index
    %c0_175 = arith.constant 0 : index
    %609 = vector.load %arg49[%c2_174, %c0_175] : memref<8x8xf32, #tpu.memory_space<vmem>>, vector<2x8xf32>
    tpu.vector_store %arg49[%c2_174, %c0_175], %547 {strides = array<i32>} : memref<8x8xf32, #tpu.memory_space<vmem>>, vector<2x8xf32>,
    %c2_176 = arith.constant 2 : index
    %c0_177 = arith.constant 0 : index
    %610 = vector.load %arg50[%c2_176, %c0_177] : memref<8x8xf32, #tpu.memory_space<vmem>>, vector<2x8xf32>
    tpu.vector_store %arg50[%c2_176, %c0_177], %557 {strides = array<i32>} : memref<8x8xf32, #tpu.memory_space<vmem>>, vector<2x8xf32>,
    %c2_178 = arith.constant 2 : index
    %c0_179 = arith.constant 0 : index
    %611 = vector.load %arg51[%c2_178, %c0_179] : memref<8x8xf32, #tpu.memory_space<vmem>>, vector<2x8xf32>
    tpu.vector_store %arg51[%c2_178, %c0_179], %574 {strides = array<i32>} : memref<8x8xf32, #tpu.memory_space<vmem>>, vector<2x8xf32>,
    %c2_180 = arith.constant 2 : index
    %c0_181 = arith.constant 0 : index
    %612 = vector.load %arg52[%c2_180, %c0_181] : memref<8x8xf32, #tpu.memory_space<vmem>>, vector<2x8xf32>
    tpu.vector_store %arg52[%c2_180, %c0_181], %591 {strides = array<i32>} : memref<8x8xf32, #tpu.memory_space<vmem>>, vector<2x8xf32>,
    %c2_182 = arith.constant 2 : index
    %c0_183 = arith.constant 0 : index
    %613 = vector.load %arg53[%c2_182, %c0_183] : memref<8x8xf32, #tpu.memory_space<vmem>>, vector<2x8xf32>
    tpu.vector_store %arg53[%c2_182, %c0_183], %608 {strides = array<i32>} : memref<8x8xf32, #tpu.memory_space<vmem>>, vector<2x8xf32>,
    %614 = vector.extract_strided_slice %321 {offsets = [4, 0], sizes = [2, 8], strides = [1, 1]} : vector<8x8xf32> to vector<2x8xf32>
    %615 = vector.extract_strided_slice %302 {offsets = [4, 0], sizes = [2, 8], strides = [1, 1]} : vector<8x8xf32> to vector<2x8xf32>
    %616 = arith.mulf %574, %614 : vector<2x8xf32>
    %cst_184 = arith.constant 1.000000e+00 : f32
    %617 = vector.broadcast %cst_184 : f32 to vector<2x8xf32>
    %618 = arith.addf %617, %616 : vector<2x8xf32>
    %cst_185 = arith.constant 1.000000e+00 : f32
    %619 = vector.broadcast %cst_185 : f32 to vector<2x8xf32>
    %620 = arith.divf %619, %618 : vector<2x8xf32>
    %621 = arith.subf %615, %547 : vector<2x8xf32>
    %622 = arith.mulf %614, %621 : vector<2x8xf32>
    %623 = arith.mulf %622, %620 : vector<2x8xf32>
    %624 = arith.mulf %574, %623 : vector<2x8xf32>
    %625 = arith.addf %547, %624 : vector<2x8xf32>
    %626 = arith.mulf %608, %623 : vector<2x8xf32>
    %627 = arith.addf %557, %626 : vector<2x8xf32>
    %628 = arith.mulf %574, %620 : vector<2x8xf32>
    %629 = arith.mulf %608, %620 : vector<2x8xf32>
    %630 = arith.mulf %608, %608 : vector<2x8xf32>
    %631 = arith.mulf %630, %614 : vector<2x8xf32>
    %632 = arith.mulf %631, %620 : vector<2x8xf32>
    %633 = arith.subf %591, %632 : vector<2x8xf32>
    %634 = vector.extract_strided_slice %326 {offsets = [4, 0], sizes = [2, 16], strides = [1, 1]} : vector<8x16xf32> to vector<2x16xf32>
    %635 = vector.shape_cast %408 : vector<8xf32> to vector<1x8xf32>
    %636 = vector.broadcast %635 : vector<1x8xf32> to vector<2x8xf32>
    %637 = arith.mulf %636, %625 : vector<2x8xf32>
    %638 = vector.shape_cast %410 : vector<8xf32> to vector<1x8xf32>
    %639 = vector.broadcast %638 : vector<1x8xf32> to vector<2x8xf32>
    %640 = arith.mulf %639, %627 : vector<2x8xf32>
    %641 = arith.addf %637, %640 : vector<2x8xf32>
    %642 = vector.extract_strided_slice %634 {offsets = [0, 0], sizes = [2, 8], strides = [1, 1]} : vector<2x16xf32> to vector<2x8xf32>
    %643 = arith.addf %641, %642 : vector<2x8xf32>
    %644 = arith.addf %643, %345 : vector<2x8xf32>
    %645 = vector.shape_cast %412 : vector<8xf32> to vector<1x8xf32>
    %646 = vector.broadcast %645 : vector<1x8xf32> to vector<2x8xf32>
    %647 = arith.mulf %646, %625 : vector<2x8xf32>
    %648 = vector.shape_cast %414 : vector<8xf32> to vector<1x8xf32>
    %649 = vector.broadcast %648 : vector<1x8xf32> to vector<2x8xf32>
    %650 = arith.mulf %649, %627 : vector<2x8xf32>
    %651 = arith.addf %647, %650 : vector<2x8xf32>
    %652 = vector.extract_strided_slice %634 {offsets = [0, 8], sizes = [2, 8], strides = [1, 1]} : vector<2x16xf32> to vector<2x8xf32>
    %653 = arith.addf %651, %652 : vector<2x8xf32>
    %654 = arith.addf %653, %352 : vector<2x8xf32>
    %655 = arith.mulf %408, %408 : vector<8xf32>
    %656 = vector.shape_cast %655 : vector<8xf32> to vector<1x8xf32>
    %657 = vector.broadcast %656 : vector<1x8xf32> to vector<2x8xf32>
    %658 = arith.mulf %657, %628 : vector<2x8xf32>
    %cst_186 = arith.constant 2.000000e+00 : f32
    %659 = vector.broadcast %cst_186 : f32 to vector<8xf32>
    %660 = arith.mulf %659, %408 : vector<8xf32>
    %661 = arith.mulf %660, %410 : vector<8xf32>
    %662 = vector.shape_cast %661 : vector<8xf32> to vector<1x8xf32>
    %663 = vector.broadcast %662 : vector<1x8xf32> to vector<2x8xf32>
    %664 = arith.mulf %663, %629 : vector<2x8xf32>
    %665 = arith.addf %658, %664 : vector<2x8xf32>
    %666 = arith.mulf %410, %410 : vector<8xf32>
    %667 = vector.shape_cast %666 : vector<8xf32> to vector<1x8xf32>
    %668 = vector.broadcast %667 : vector<1x8xf32> to vector<2x8xf32>
    %669 = arith.mulf %668, %633 : vector<2x8xf32>
    %670 = arith.addf %665, %669 : vector<2x8xf32>
    %671 = arith.addf %670, %371 : vector<2x8xf32>
    %672 = arith.mulf %412, %412 : vector<8xf32>
    %673 = vector.shape_cast %672 : vector<8xf32> to vector<1x8xf32>
    %674 = vector.broadcast %673 : vector<1x8xf32> to vector<2x8xf32>
    %675 = arith.mulf %674, %628 : vector<2x8xf32>
    %cst_187 = arith.constant 2.000000e+00 : f32
    %676 = vector.broadcast %cst_187 : f32 to vector<8xf32>
    %677 = arith.mulf %676, %412 : vector<8xf32>
    %678 = arith.mulf %677, %414 : vector<8xf32>
    %679 = vector.shape_cast %678 : vector<8xf32> to vector<1x8xf32>
    %680 = vector.broadcast %679 : vector<1x8xf32> to vector<2x8xf32>
    %681 = arith.mulf %680, %629 : vector<2x8xf32>
    %682 = arith.addf %675, %681 : vector<2x8xf32>
    %683 = arith.mulf %414, %414 : vector<8xf32>
    %684 = vector.shape_cast %683 : vector<8xf32> to vector<1x8xf32>
    %685 = vector.broadcast %684 : vector<1x8xf32> to vector<2x8xf32>
    %686 = arith.mulf %685, %633 : vector<2x8xf32>
    %687 = arith.addf %682, %686 : vector<2x8xf32>
    %688 = arith.addf %687, %390 : vector<2x8xf32>
    %689 = arith.mulf %408, %412 : vector<8xf32>
    %690 = vector.shape_cast %689 : vector<8xf32> to vector<1x8xf32>
    %691 = vector.broadcast %690 : vector<1x8xf32> to vector<2x8xf32>
    %692 = arith.mulf %691, %628 : vector<2x8xf32>
    %693 = arith.mulf %408, %414 : vector<8xf32>
    %694 = arith.mulf %410, %412 : vector<8xf32>
    %695 = arith.addf %693, %694 : vector<8xf32>
    %696 = vector.shape_cast %695 : vector<8xf32> to vector<1x8xf32>
    %697 = vector.broadcast %696 : vector<1x8xf32> to vector<2x8xf32>
    %698 = arith.mulf %697, %629 : vector<2x8xf32>
    %699 = arith.addf %692, %698 : vector<2x8xf32>
    %700 = arith.mulf %410, %414 : vector<8xf32>
    %701 = vector.shape_cast %700 : vector<8xf32> to vector<1x8xf32>
    %702 = vector.broadcast %701 : vector<1x8xf32> to vector<2x8xf32>
    %703 = arith.mulf %702, %633 : vector<2x8xf32>
    %704 = arith.addf %699, %703 : vector<2x8xf32>
    %705 = arith.addf %704, %406 : vector<2x8xf32>
    %c4 = arith.constant 4 : index
    %c0_188 = arith.constant 0 : index
    %706 = vector.load %arg49[%c4, %c0_188] : memref<8x8xf32, #tpu.memory_space<vmem>>, vector<2x8xf32>
    tpu.vector_store %arg49[%c4, %c0_188], %644 {strides = array<i32>} : memref<8x8xf32, #tpu.memory_space<vmem>>, vector<2x8xf32>,
    %c4_189 = arith.constant 4 : index
    %c0_190 = arith.constant 0 : index
    %707 = vector.load %arg50[%c4_189, %c0_190] : memref<8x8xf32, #tpu.memory_space<vmem>>, vector<2x8xf32>
    tpu.vector_store %arg50[%c4_189, %c0_190], %654 {strides = array<i32>} : memref<8x8xf32, #tpu.memory_space<vmem>>, vector<2x8xf32>,
    %c4_191 = arith.constant 4 : index
    %c0_192 = arith.constant 0 : index
    %708 = vector.load %arg51[%c4_191, %c0_192] : memref<8x8xf32, #tpu.memory_space<vmem>>, vector<2x8xf32>
    tpu.vector_store %arg51[%c4_191, %c0_192], %671 {strides = array<i32>} : memref<8x8xf32, #tpu.memory_space<vmem>>, vector<2x8xf32>,
    %c4_193 = arith.constant 4 : index
    %c0_194 = arith.constant 0 : index
    %709 = vector.load %arg52[%c4_193, %c0_194] : memref<8x8xf32, #tpu.memory_space<vmem>>, vector<2x8xf32>
    tpu.vector_store %arg52[%c4_193, %c0_194], %688 {strides = array<i32>} : memref<8x8xf32, #tpu.memory_space<vmem>>, vector<2x8xf32>,
    %c4_195 = arith.constant 4 : index
    %c0_196 = arith.constant 0 : index
    %710 = vector.load %arg53[%c4_195, %c0_196] : memref<8x8xf32, #tpu.memory_space<vmem>>, vector<2x8xf32>
    tpu.vector_store %arg53[%c4_195, %c0_196], %705 {strides = array<i32>} : memref<8x8xf32, #tpu.memory_space<vmem>>, vector<2x8xf32>,
    %711 = vector.extract_strided_slice %321 {offsets = [6, 0], sizes = [2, 8], strides = [1, 1]} : vector<8x8xf32> to vector<2x8xf32>
    %712 = vector.extract_strided_slice %302 {offsets = [6, 0], sizes = [2, 8], strides = [1, 1]} : vector<8x8xf32> to vector<2x8xf32>
    %713 = arith.mulf %671, %711 : vector<2x8xf32>
    %cst_197 = arith.constant 1.000000e+00 : f32
    %714 = vector.broadcast %cst_197 : f32 to vector<2x8xf32>
    %715 = arith.addf %714, %713 : vector<2x8xf32>
    %cst_198 = arith.constant 1.000000e+00 : f32
    %716 = vector.broadcast %cst_198 : f32 to vector<2x8xf32>
    %717 = arith.divf %716, %715 : vector<2x8xf32>
    %718 = arith.subf %712, %644 : vector<2x8xf32>
    %719 = arith.mulf %711, %718 : vector<2x8xf32>
    %720 = arith.mulf %719, %717 : vector<2x8xf32>
    %721 = arith.mulf %671, %720 : vector<2x8xf32>
    %722 = arith.addf %644, %721 : vector<2x8xf32>
    %723 = arith.mulf %705, %720 : vector<2x8xf32>
    %724 = arith.addf %654, %723 : vector<2x8xf32>
    %725 = arith.mulf %671, %717 : vector<2x8xf32>
    %726 = arith.mulf %705, %717 : vector<2x8xf32>
    %727 = arith.mulf %705, %705 : vector<2x8xf32>
    %728 = arith.mulf %727, %711 : vector<2x8xf32>
    %729 = arith.mulf %728, %717 : vector<2x8xf32>
    %730 = arith.subf %688, %729 : vector<2x8xf32>
    %731 = vector.extract_strided_slice %326 {offsets = [6, 0], sizes = [2, 16], strides = [1, 1]} : vector<8x16xf32> to vector<2x16xf32>
    %732 = vector.shape_cast %408 : vector<8xf32> to vector<1x8xf32>
    %733 = vector.broadcast %732 : vector<1x8xf32> to vector<2x8xf32>
    %734 = arith.mulf %733, %722 : vector<2x8xf32>
    %735 = vector.shape_cast %410 : vector<8xf32> to vector<1x8xf32>
    %736 = vector.broadcast %735 : vector<1x8xf32> to vector<2x8xf32>
    %737 = arith.mulf %736, %724 : vector<2x8xf32>
    %738 = arith.addf %734, %737 : vector<2x8xf32>
    %739 = vector.extract_strided_slice %731 {offsets = [0, 0], sizes = [2, 8], strides = [1, 1]} : vector<2x16xf32> to vector<2x8xf32>
    %740 = arith.addf %738, %739 : vector<2x8xf32>
    %741 = arith.addf %740, %345 : vector<2x8xf32>
    %742 = vector.shape_cast %412 : vector<8xf32> to vector<1x8xf32>
    %743 = vector.broadcast %742 : vector<1x8xf32> to vector<2x8xf32>
    %744 = arith.mulf %743, %722 : vector<2x8xf32>
    %745 = vector.shape_cast %414 : vector<8xf32> to vector<1x8xf32>
    %746 = vector.broadcast %745 : vector<1x8xf32> to vector<2x8xf32>
    %747 = arith.mulf %746, %724 : vector<2x8xf32>
    %748 = arith.addf %744, %747 : vector<2x8xf32>
    %749 = vector.extract_strided_slice %731 {offsets = [0, 8], sizes = [2, 8], strides = [1, 1]} : vector<2x16xf32> to vector<2x8xf32>
    %750 = arith.addf %748, %749 : vector<2x8xf32>
    %751 = arith.addf %750, %352 : vector<2x8xf32>
    %752 = arith.mulf %408, %408 : vector<8xf32>
    %753 = vector.shape_cast %752 : vector<8xf32> to vector<1x8xf32>
    %754 = vector.broadcast %753 : vector<1x8xf32> to vector<2x8xf32>
    %755 = arith.mulf %754, %725 : vector<2x8xf32>
    %cst_199 = arith.constant 2.000000e+00 : f32
    %756 = vector.broadcast %cst_199 : f32 to vector<8xf32>
    %757 = arith.mulf %756, %408 : vector<8xf32>
    %758 = arith.mulf %757, %410 : vector<8xf32>
    %759 = vector.shape_cast %758 : vector<8xf32> to vector<1x8xf32>
    %760 = vector.broadcast %759 : vector<1x8xf32> to vector<2x8xf32>
    %761 = arith.mulf %760, %726 : vector<2x8xf32>
    %762 = arith.addf %755, %761 : vector<2x8xf32>
    %763 = arith.mulf %410, %410 : vector<8xf32>
    %764 = vector.shape_cast %763 : vector<8xf32> to vector<1x8xf32>
    %765 = vector.broadcast %764 : vector<1x8xf32> to vector<2x8xf32>
    %766 = arith.mulf %765, %730 : vector<2x8xf32>
    %767 = arith.addf %762, %766 : vector<2x8xf32>
    %768 = arith.addf %767, %371 : vector<2x8xf32>
    %769 = arith.mulf %412, %412 : vector<8xf32>
    %770 = vector.shape_cast %769 : vector<8xf32> to vector<1x8xf32>
    %771 = vector.broadcast %770 : vector<1x8xf32> to vector<2x8xf32>
    %772 = arith.mulf %771, %725 : vector<2x8xf32>
    %cst_200 = arith.constant 2.000000e+00 : f32
    %773 = vector.broadcast %cst_200 : f32 to vector<8xf32>
    %774 = arith.mulf %773, %412 : vector<8xf32>
    %775 = arith.mulf %774, %414 : vector<8xf32>
    %776 = vector.shape_cast %775 : vector<8xf32> to vector<1x8xf32>
    %777 = vector.broadcast %776 : vector<1x8xf32> to vector<2x8xf32>
    %778 = arith.mulf %777, %726 : vector<2x8xf32>
    %779 = arith.addf %772, %778 : vector<2x8xf32>
    %780 = arith.mulf %414, %414 : vector<8xf32>
    %781 = vector.shape_cast %780 : vector<8xf32> to vector<1x8xf32>
    %782 = vector.broadcast %781 : vector<1x8xf32> to vector<2x8xf32>
    %783 = arith.mulf %782, %730 : vector<2x8xf32>
    %784 = arith.addf %779, %783 : vector<2x8xf32>
    %785 = arith.addf %784, %390 : vector<2x8xf32>
    %786 = arith.mulf %408, %412 : vector<8xf32>
    %787 = vector.shape_cast %786 : vector<8xf32> to vector<1x8xf32>
    %788 = vector.broadcast %787 : vector<1x8xf32> to vector<2x8xf32>
    %789 = arith.mulf %788, %725 : vector<2x8xf32>
    %790 = arith.mulf %408, %414 : vector<8xf32>
    %791 = arith.mulf %410, %412 : vector<8xf32>
    %792 = arith.addf %790, %791 : vector<8xf32>
    %793 = vector.shape_cast %792 : vector<8xf32> to vector<1x8xf32>
    %794 = vector.broadcast %793 : vector<1x8xf32> to vector<2x8xf32>
    %795 = arith.mulf %794, %726 : vector<2x8xf32>
    %796 = arith.addf %789, %795 : vector<2x8xf32>
    %797 = arith.mulf %410, %414 : vector<8xf32>
    %798 = vector.shape_cast %797 : vector<8xf32> to vector<1x8xf32>
    %799 = vector.broadcast %798 : vector<1x8xf32> to vector<2x8xf32>
    %800 = arith.mulf %799, %730 : vector<2x8xf32>
    %801 = arith.addf %796, %800 : vector<2x8xf32>
    %802 = arith.addf %801, %406 : vector<2x8xf32>
    %c6 = arith.constant 6 : index
    %c0_201 = arith.constant 0 : index
    %803 = vector.load %arg49[%c6, %c0_201] : memref<8x8xf32, #tpu.memory_space<vmem>>, vector<2x8xf32>
    tpu.vector_store %arg49[%c6, %c0_201], %741 {strides = array<i32>} : memref<8x8xf32, #tpu.memory_space<vmem>>, vector<2x8xf32>,
    %c6_202 = arith.constant 6 : index
    %c0_203 = arith.constant 0 : index
    %804 = vector.load %arg50[%c6_202, %c0_203] : memref<8x8xf32, #tpu.memory_space<vmem>>, vector<2x8xf32>
    tpu.vector_store %arg50[%c6_202, %c0_203], %751 {strides = array<i32>} : memref<8x8xf32, #tpu.memory_space<vmem>>, vector<2x8xf32>,
    %c6_204 = arith.constant 6 : index
    %c0_205 = arith.constant 0 : index
    %805 = vector.load %arg51[%c6_204, %c0_205] : memref<8x8xf32, #tpu.memory_space<vmem>>, vector<2x8xf32>
    tpu.vector_store %arg51[%c6_204, %c0_205], %768 {strides = array<i32>} : memref<8x8xf32, #tpu.memory_space<vmem>>, vector<2x8xf32>,
    %c6_206 = arith.constant 6 : index
    %c0_207 = arith.constant 0 : index
    %806 = vector.load %arg52[%c6_206, %c0_207] : memref<8x8xf32, #tpu.memory_space<vmem>>, vector<2x8xf32>
    tpu.vector_store %arg52[%c6_206, %c0_207], %785 {strides = array<i32>} : memref<8x8xf32, #tpu.memory_space<vmem>>, vector<2x8xf32>,
    %c6_208 = arith.constant 6 : index
    %c0_209 = arith.constant 0 : index
    %807 = vector.load %arg53[%c6_208, %c0_209] : memref<8x8xf32, #tpu.memory_space<vmem>>, vector<2x8xf32>
    tpu.vector_store %arg53[%c6_208, %c0_209], %802 {strides = array<i32>} : memref<8x8xf32, #tpu.memory_space<vmem>>, vector<2x8xf32>,
    %c0_210 = arith.constant 0 : index
    %c0_211 = arith.constant 0 : index
    %808 = vector.load %arg44[%c0_210, %c0_211] : memref<2x8xf32, #tpu.memory_space<vmem>>, vector<2x8xf32>
    tpu.vector_store %arg44[%c0_210, %c0_211], %741 {strides = array<i32>} : memref<2x8xf32, #tpu.memory_space<vmem>>, vector<2x8xf32>,
    %c0_212 = arith.constant 0 : index
    %c0_213 = arith.constant 0 : index
    %809 = vector.load %arg45[%c0_212, %c0_213] : memref<2x8xf32, #tpu.memory_space<vmem>>, vector<2x8xf32>
    tpu.vector_store %arg45[%c0_212, %c0_213], %751 {strides = array<i32>} : memref<2x8xf32, #tpu.memory_space<vmem>>, vector<2x8xf32>,
    %c0_214 = arith.constant 0 : index
    %c0_215 = arith.constant 0 : index
    %810 = vector.load %arg46[%c0_214, %c0_215] : memref<2x8xf32, #tpu.memory_space<vmem>>, vector<2x8xf32>
    tpu.vector_store %arg46[%c0_214, %c0_215], %768 {strides = array<i32>} : memref<2x8xf32, #tpu.memory_space<vmem>>, vector<2x8xf32>,
    %c0_216 = arith.constant 0 : index
    %c0_217 = arith.constant 0 : index
    %811 = vector.load %arg47[%c0_216, %c0_217] : memref<2x8xf32, #tpu.memory_space<vmem>>, vector<2x8xf32>
    tpu.vector_store %arg47[%c0_216, %c0_217], %785 {strides = array<i32>} : memref<2x8xf32, #tpu.memory_space<vmem>>, vector<2x8xf32>,
    %c0_218 = arith.constant 0 : index
    %c0_219 = arith.constant 0 : index
    %812 = vector.load %arg48[%c0_218, %c0_219] : memref<2x8xf32, #tpu.memory_space<vmem>>, vector<2x8xf32>
    tpu.vector_store %arg48[%c0_218, %c0_219], %802 {strides = array<i32>} : memref<2x8xf32, #tpu.memory_space<vmem>>, vector<2x8xf32>,
    %c0_220 = arith.constant 0 : index
    %c0_221 = arith.constant 0 : index
    %813 = vector.load %arg49[%c0_220, %c0_221] : memref<8x8xf32, #tpu.memory_space<vmem>>, vector<8x8xf32>
    %c0_222 = arith.constant 0 : index
    %c0_223 = arith.constant 0 : index
    %814 = vector.load %arg50[%c0_222, %c0_223] : memref<8x8xf32, #tpu.memory_space<vmem>>, vector<8x8xf32>
    %815 = tpu.concatenate %813, %814 in 1 : vector<8x8xf32>, vector<8x8xf32> -> vector<8x16xf32>
    %816 = arith.truncf %815 : vector<8x16xf32> to vector<8x16xbf16>
    %c0_224 = arith.constant 0 : index
    %c0_225 = arith.constant 0 : index
    %817 = vector.load %arg24[%c0_224, %c0_225] : memref<16x32xbf16, #tpu.memory_space<vmem>>, vector<16x32xbf16>
    %cst_226 = arith.constant dense<0.000000e+00> : vector<8x32xf32>
    %818 = tpu.matmul %816, %817, %cst_226 {dimension_numbers = #tpu.dot_dimension_numbers<[1], [0], [0], [1], [0, 0, 1, 1], [], []>} : vector<8x16xbf16>, vector<16x32xbf16>, vector<8x32xf32> -> vector<8x32xf32>
    %c0_227 = arith.constant 0 : index
    %c0_228 = arith.constant 0 : index
    %819 = vector.load %arg25[%c0_227, %c0_228] : memref<1x32xf32, #tpu.memory_space<vmem>>, vector<1x32xf32>
    %820 = vector.broadcast %819 : vector<1x32xf32> to vector<8x32xf32>
    %821 = arith.addf %818, %820 : vector<8x32xf32>
    %cst_229 = arith.constant 0.000000e+00 : f32
    %822 = vector.broadcast %cst_229 : f32 to vector<8x32xf32>
    %823 = arith.maximumf %821, %822 : vector<8x32xf32>
    %824 = arith.truncf %823 : vector<8x32xf32> to vector<8x32xbf16>
    %c0_230 = arith.constant 0 : index
    %c0_231 = arith.constant 0 : index
    %825 = vector.load %arg26[%c0_230, %c0_231] : memref<32x6xbf16, #tpu.memory_space<vmem>>, vector<32x6xbf16>
    %cst_232 = arith.constant dense<0.000000e+00> : vector<8x6xf32>
    %826 = tpu.matmul %824, %825, %cst_232 {dimension_numbers = #tpu.dot_dimension_numbers<[1], [0], [0], [1], [0, 0, 1, 1], [], []>} : vector<8x32xbf16>, vector<32x6xbf16>, vector<8x6xf32> -> vector<8x6xf32>
    %c0_233 = arith.constant 0 : index
    %c0_234 = arith.constant 0 : index
    %827 = vector.load %arg27[%c0_233, %c0_234] : memref<1x6xf32, #tpu.memory_space<vmem>>, vector<1x6xf32>
    %828 = vector.broadcast %827 : vector<1x6xf32> to vector<8x6xf32>
    %829 = arith.addf %826, %828 : vector<8x6xf32>
    %c0_235 = arith.constant 0 : index
    %c0_236 = arith.constant 0 : index
    %c0_237 = arith.constant 0 : index
    %830 = vector.load %arg32[%c0_235, %c0_236, %c0_237] : memref<1x8x6xf32, #tpu.memory_space<vmem>>, vector<1x8x6xf32>
    %831 = vector.shape_cast %830 : vector<1x8x6xf32> to vector<8x6xf32>
    %832 = vector.shape_cast %829 : vector<8x6xf32> to vector<1x8x6xf32>
    tpu.vector_store %arg32[%c0_235, %c0_236, %c0_237], %832 {strides = array<i32>} : memref<1x8x6xf32, #tpu.memory_space<vmem>>, vector<1x8x6xf32>,
    %c0_238 = arith.constant 0 : index
    %c0_239 = arith.constant 0 : index
    %833 = vector.load %arg51[%c0_238, %c0_239] : memref<8x8xf32, #tpu.memory_space<vmem>>, vector<8x8xf32>
    %c0_240 = arith.constant 0 : index
    %c0_241 = arith.constant 0 : index
    %834 = vector.load %arg52[%c0_240, %c0_241] : memref<8x8xf32, #tpu.memory_space<vmem>>, vector<8x8xf32>
    %c0_242 = arith.constant 0 : index
    %c0_243 = arith.constant 0 : index
    %835 = vector.load %arg53[%c0_242, %c0_243] : memref<8x8xf32, #tpu.memory_space<vmem>>, vector<8x8xf32>
    %836 = tpu.concatenate %833, %834, %835 in 1 : vector<8x8xf32>, vector<8x8xf32>, vector<8x8xf32> -> vector<8x24xf32>
    %837 = arith.truncf %836 : vector<8x24xf32> to vector<8x24xbf16>
    %c0_244 = arith.constant 0 : index
    %c0_245 = arith.constant 0 : index
    %838 = vector.load %arg28[%c0_244, %c0_245] : memref<24x32xbf16, #tpu.memory_space<vmem>>, vector<24x32xbf16>
    %cst_246 = arith.constant dense<0.000000e+00> : vector<8x32xf32>
    %839 = tpu.matmul %837, %838, %cst_246 {dimension_numbers = #tpu.dot_dimension_numbers<[1], [0], [0], [1], [0, 0, 1, 1], [], []>} : vector<8x24xbf16>, vector<24x32xbf16>, vector<8x32xf32> -> vector<8x32xf32>
    %c0_247 = arith.constant 0 : index
    %c0_248 = arith.constant 0 : index
    %840 = vector.load %arg29[%c0_247, %c0_248] : memref<1x32xf32, #tpu.memory_space<vmem>>, vector<1x32xf32>
    %841 = vector.broadcast %840 : vector<1x32xf32> to vector<8x32xf32>
    %842 = arith.addf %839, %841 : vector<8x32xf32>
    %cst_249 = arith.constant 0.000000e+00 : f32
    %843 = vector.broadcast %cst_249 : f32 to vector<8x32xf32>
    %844 = arith.maximumf %842, %843 : vector<8x32xf32>
    %845 = arith.truncf %844 : vector<8x32xf32> to vector<8x32xbf16>
    %c0_250 = arith.constant 0 : index
    %c0_251 = arith.constant 0 : index
    %846 = vector.load %arg30[%c0_250, %c0_251] : memref<32x6xbf16, #tpu.memory_space<vmem>>, vector<32x6xbf16>
    %cst_252 = arith.constant dense<0.000000e+00> : vector<8x6xf32>
    %847 = tpu.matmul %845, %846, %cst_252 {dimension_numbers = #tpu.dot_dimension_numbers<[1], [0], [0], [1], [0, 0, 1, 1], [], []>} : vector<8x32xbf16>, vector<32x6xbf16>, vector<8x6xf32> -> vector<8x6xf32>
    %c0_253 = arith.constant 0 : index
    %c0_254 = arith.constant 0 : index
    %848 = vector.load %arg31[%c0_253, %c0_254] : memref<1x6xf32, #tpu.memory_space<vmem>>, vector<1x6xf32>
    %849 = vector.broadcast %848 : vector<1x6xf32> to vector<8x6xf32>
    %850 = arith.addf %847, %849 : vector<8x6xf32>
    %cst_255 = arith.constant 0.000000e+00 : f32
    %851 = vector.broadcast %cst_255 : f32 to vector<8x6xf32>
    %852 = arith.cmpf ogt, %850, %851 : vector<8x6xf32>
    %cst_256 = arith.constant 1.000000e+00 : f32
    %853 = vector.broadcast %cst_256 : f32 to vector<8x6xf32>
    %854 = arith.addf %850, %853 : vector<8x6xf32>
    %cst_257 = arith.constant 0.000000e+00 : f32
    %855 = vector.broadcast %cst_257 : f32 to vector<8x6xf32>
    %856 = arith.minimumf %850, %855 : vector<8x6xf32>
    %857 = math.exp %856 : vector<8x6xf32>
    %858 = arith.select %852, %854, %857 : vector<8x6xi1>, vector<8x6xf32>
    %cst_258 = arith.constant 9.99999997E-7 : f32
    %859 = vector.broadcast %cst_258 : f32 to vector<8x6xf32>
    %860 = arith.addf %858, %859 : vector<8x6xf32>
    %c0_259 = arith.constant 0 : index
    %c0_260 = arith.constant 0 : index
    %c0_261 = arith.constant 0 : index
    %861 = vector.load %arg33[%c0_259, %c0_260, %c0_261] : memref<1x8x6xf32, #tpu.memory_space<vmem>>, vector<1x8x6xf32>
    %862 = vector.shape_cast %861 : vector<1x8x6xf32> to vector<8x6xf32>
    %863 = vector.shape_cast %860 : vector<8x6xf32> to vector<1x8x6xf32>
    tpu.vector_store %arg33[%c0_259, %c0_260, %c0_261], %863 {strides = array<i32>} : memref<1x8x6xf32, #tpu.memory_space<vmem>>, vector<1x8x6xf32>,
    return
  }
  func.func @transform_0(%arg0: i32) -> (i32, i32, i32) {
    %c0_i32 = arith.constant 0 : i32
    %c0_i32_0 = arith.constant 0 : i32
    %c0_i32_1 = arith.constant 0 : i32
    return %arg0, %c0_i32, %c0_i32_0 : i32, i32, i32
  }
  func.func @transform_1(%arg0: i32) -> (i32, i32, i32) {
    %c0_i32 = arith.constant 0 : i32
    %c0_i32_0 = arith.constant 0 : i32
    %c0_i32_1 = arith.constant 0 : i32
    return %arg0, %c0_i32, %c0_i32_0 : i32, i32, i32
  }
  func.func @transform_2(%arg0: i32) -> (i32, i32, i32) {
    %c1_i32 = arith.constant 1 : i32
    %0 = arith.addi %arg0, %c1_i32 : i32
    %c2_i32 = arith.constant 2 : i32
    %1 = arith.minsi %0, %c2_i32 : i32
    %c0_i32 = arith.constant 0 : i32
    %c0_i32_0 = arith.constant 0 : i32
    %c0_i32_1 = arith.constant 0 : i32
    return %1, %c0_i32, %c0_i32_0 : i32, i32, i32
  }
  func.func @transform_3(%arg0: i32) -> (i32, i32, i32) {
    %c0_i32 = arith.constant 0 : i32
    %c0_i32_0 = arith.constant 0 : i32
    %c0_i32_1 = arith.constant 0 : i32
    return %arg0, %c0_i32, %c0_i32_0 : i32, i32, i32
  }
  func.func @transform_4(%arg0: i32) -> (i32, i32) {
    %c0_i32 = arith.constant 0 : i32
    %c0_i32_0 = arith.constant 0 : i32
    %c0_i32_1 = arith.constant 0 : i32
    return %c0_i32, %c0_i32_0 : i32, i32
  }
  func.func @transform_5(%arg0: i32) -> (i32, i32) {
    %c0_i32 = arith.constant 0 : i32
    %c0_i32_0 = arith.constant 0 : i32
    %c0_i32_1 = arith.constant 0 : i32
    return %c0_i32, %c0_i32_0 : i32, i32
  }
  func.func @transform_6(%arg0: i32) -> (i32, i32) {
    %c0_i32 = arith.constant 0 : i32
    %c0_i32_0 = arith.constant 0 : i32
    %c0_i32_1 = arith.constant 0 : i32
    return %c0_i32, %c0_i32_0 : i32, i32
  }
  func.func @transform_7(%arg0: i32) -> (i32, i32) {
    %c0_i32 = arith.constant 0 : i32
    %c0_i32_0 = arith.constant 0 : i32
    %c0_i32_1 = arith.constant 0 : i32
    return %c0_i32, %c0_i32_0 : i32, i32
  }
  func.func @transform_8(%arg0: i32) -> (i32, i32) {
    %c0_i32 = arith.constant 0 : i32
    %c0_i32_0 = arith.constant 0 : i32
    %c0_i32_1 = arith.constant 0 : i32
    return %c0_i32, %c0_i32_0 : i32, i32
  }
  func.func @transform_9(%arg0: i32) -> (i32, i32) {
    %c0_i32 = arith.constant 0 : i32
    %c0_i32_0 = arith.constant 0 : i32
    %c0_i32_1 = arith.constant 0 : i32
    return %c0_i32, %c0_i32_0 : i32, i32
  }
  func.func @transform_10(%arg0: i32) -> (i32, i32) {
    %c0_i32 = arith.constant 0 : i32
    %c0_i32_0 = arith.constant 0 : i32
    %c0_i32_1 = arith.constant 0 : i32
    return %c0_i32, %c0_i32_0 : i32, i32
  }
  func.func @transform_11(%arg0: i32) -> (i32, i32) {
    %c0_i32 = arith.constant 0 : i32
    %c0_i32_0 = arith.constant 0 : i32
    %c0_i32_1 = arith.constant 0 : i32
    return %c0_i32, %c0_i32_0 : i32, i32
  }
  func.func @transform_12(%arg0: i32) -> (i32, i32) {
    %c0_i32 = arith.constant 0 : i32
    %c0_i32_0 = arith.constant 0 : i32
    %c0_i32_1 = arith.constant 0 : i32
    return %c0_i32, %c0_i32_0 : i32, i32
  }
  func.func @transform_13(%arg0: i32) -> (i32, i32) {
    %c0_i32 = arith.constant 0 : i32
    %c0_i32_0 = arith.constant 0 : i32
    %c0_i32_1 = arith.constant 0 : i32
    return %c0_i32, %c0_i32_0 : i32, i32
  }
  func.func @transform_14(%arg0: i32) -> (i32, i32) {
    %c0_i32 = arith.constant 0 : i32
    %c0_i32_0 = arith.constant 0 : i32
    %c0_i32_1 = arith.constant 0 : i32
    return %c0_i32, %c0_i32_0 : i32, i32
  }
  func.func @transform_15(%arg0: i32) -> (i32, i32) {
    %c0_i32 = arith.constant 0 : i32
    %c0_i32_0 = arith.constant 0 : i32
    %c0_i32_1 = arith.constant 0 : i32
    return %c0_i32, %c0_i32_0 : i32, i32
  }
  func.func @transform_16(%arg0: i32) -> (i32, i32) {
    %c0_i32 = arith.constant 0 : i32
    %c0_i32_0 = arith.constant 0 : i32
    %c0_i32_1 = arith.constant 0 : i32
    return %c0_i32, %c0_i32_0 : i32, i32
  }
  func.func @transform_17(%arg0: i32) -> (i32, i32) {
    %c0_i32 = arith.constant 0 : i32
    %c0_i32_0 = arith.constant 0 : i32
    %c0_i32_1 = arith.constant 0 : i32
    return %c0_i32, %c0_i32_0 : i32, i32
  }
  func.func @transform_18(%arg0: i32) -> (i32, i32) {
    %c0_i32 = arith.constant 0 : i32
    %c0_i32_0 = arith.constant 0 : i32
    %c0_i32_1 = arith.constant 0 : i32
    return %c0_i32, %c0_i32_0 : i32, i32
  }
  func.func @transform_19(%arg0: i32) -> (i32, i32) {
    %c0_i32 = arith.constant 0 : i32
    %c0_i32_0 = arith.constant 0 : i32
    %c0_i32_1 = arith.constant 0 : i32
    return %c0_i32, %c0_i32_0 : i32, i32
  }
  func.func @transform_20(%arg0: i32) -> (i32, i32) {
    %c0_i32 = arith.constant 0 : i32
    %c0_i32_0 = arith.constant 0 : i32
    %c0_i32_1 = arith.constant 0 : i32
    return %c0_i32, %c0_i32_0 : i32, i32
  }
  func.func @transform_21(%arg0: i32) -> (i32, i32) {
    %c0_i32 = arith.constant 0 : i32
    %c0_i32_0 = arith.constant 0 : i32
    %c0_i32_1 = arith.constant 0 : i32
    return %c0_i32, %c0_i32_0 : i32, i32
  }
  func.func @transform_22(%arg0: i32) -> (i32, i32) {
    %c0_i32 = arith.constant 0 : i32
    %c0_i32_0 = arith.constant 0 : i32
    %c0_i32_1 = arith.constant 0 : i32
    return %c0_i32, %c0_i32_0 : i32, i32
  }
  func.func @transform_23(%arg0: i32) -> (i32, i32) {
    %c0_i32 = arith.constant 0 : i32
    %c0_i32_0 = arith.constant 0 : i32
    %c0_i32_1 = arith.constant 0 : i32
    return %c0_i32, %c0_i32_0 : i32, i32
  }
  func.func @transform_24(%arg0: i32) -> (i32, i32) {
    %c0_i32 = arith.constant 0 : i32
    %c0_i32_0 = arith.constant 0 : i32
    %c0_i32_1 = arith.constant 0 : i32
    return %c0_i32, %c0_i32_0 : i32, i32
  }
  func.func @transform_25(%arg0: i32) -> (i32, i32) {
    %c0_i32 = arith.constant 0 : i32
    %c0_i32_0 = arith.constant 0 : i32
    %c0_i32_1 = arith.constant 0 : i32
    return %c0_i32, %c0_i32_0 : i32, i32
  }
  func.func @transform_26(%arg0: i32) -> (i32, i32) {
    %c0_i32 = arith.constant 0 : i32
    %c0_i32_0 = arith.constant 0 : i32
    %c0_i32_1 = arith.constant 0 : i32
    return %c0_i32, %c0_i32_0 : i32, i32
  }
  func.func @transform_27(%arg0: i32) -> (i32, i32) {
    %c0_i32 = arith.constant 0 : i32
    %c0_i32_0 = arith.constant 0 : i32
    %c0_i32_1 = arith.constant 0 : i32
    return %c0_i32, %c0_i32_0 : i32, i32
  }
  func.func @transform_28(%arg0: i32) -> (i32, i32) {
    %c0_i32 = arith.constant 0 : i32
    %c0_i32_0 = arith.constant 0 : i32
    %c0_i32_1 = arith.constant 0 : i32
    return %c0_i32, %c0_i32_0 : i32, i32
  }
  func.func @transform_29(%arg0: i32) -> (i32, i32) {
    %c0_i32 = arith.constant 0 : i32
    %c0_i32_0 = arith.constant 0 : i32
    %c0_i32_1 = arith.constant 0 : i32
    return %c0_i32, %c0_i32_0 : i32, i32
  }
  func.func @transform_30(%arg0: i32) -> (i32, i32) {
    %c0_i32 = arith.constant 0 : i32
    %c0_i32_0 = arith.constant 0 : i32
    %c0_i32_1 = arith.constant 0 : i32
    return %c0_i32, %c0_i32_0 : i32, i32
  }
  func.func @transform_31(%arg0: i32) -> (i32, i32, i32) {
    %c0_i32 = arith.constant 0 : i32
    %c0_i32_0 = arith.constant 0 : i32
    %c0_i32_1 = arith.constant 0 : i32
    return %arg0, %c0_i32, %c0_i32_0 : i32, i32, i32
  }
  func.func @transform_32(%arg0: i32) -> (i32, i32, i32) {
    %c0_i32 = arith.constant 0 : i32
    %c0_i32_0 = arith.constant 0 : i32
    %c0_i32_1 = arith.constant 0 : i32
    return %arg0, %c0_i32, %c0_i32_0 : i32, i32, i32
  }
  func.func @transform_33(%arg0: i32) -> (i32, i32, i32) {
    %c0_i32 = arith.constant 0 : i32
    %c0_i32_0 = arith.constant 0 : i32
    %c0_i32_1 = arith.constant 0 : i32
    return %arg0, %c0_i32, %c0_i32_0 : i32, i32, i32
  }
  func.func @transform_34(%arg0: i32) -> (i32, i32, i32) {
    %c0_i32 = arith.constant 0 : i32
    %c0_i32_0 = arith.constant 0 : i32
    %c0_i32_1 = arith.constant 0 : i32
    return %arg0, %c0_i32, %c0_i32_0 : i32, i32, i32
  }
  func.func @transform_35(%arg0: i32) -> (i32, i32, i32) {
    %c0_i32 = arith.constant 0 : i32
    %c0_i32_0 = arith.constant 0 : i32
    %c0_i32_1 = arith.constant 0 : i32
    return %arg0, %c0_i32, %c0_i32_0 : i32, i32, i32
  }
  func.func @transform_36(%arg0: i32) -> (i32, i32, i32) {
    %c0_i32 = arith.constant 0 : i32
    %c0_i32_0 = arith.constant 0 : i32
    %c0_i32_1 = arith.constant 0 : i32
    return %arg0, %c0_i32, %c0_i32_0 : i32, i32, i32
  }
  func.func @transform_37(%arg0: i32) -> (i32, i32, i32) {
    %c0_i32 = arith.constant 0 : i32
    %c0_i32_0 = arith.constant 0 : i32
    %c0_i32_1 = arith.constant 0 : i32
    return %arg0, %c0_i32, %c0_i32_0 : i32, i32, i32
  }
}

</mosaic_0001>

<llo_original>
// kernel: tpu_custom_call.1
$region0: #{tpu_custom_call.1}
  #allocation0 [shape = 'u32[]', space=smem, size = 0x4, offset = 0x4, fixed_abs, tag = 'smem constant byte address 0x4 - core index']
  #allocation1 [shape = 'u32[144,128]{1,0:T(1,128)}', space=vmem, size = 0x12000, scoped, tag = 'internal scratch']
  #allocation2 [shape = 'f32[2,8]{1,0:T(2,128)}', space=vmem, size = 0x400, scoped, tag = 'scratch operand']
  #allocation3 [shape = 'f32[2,8]{1,0:T(2,128)}', space=vmem, size = 0x400, scoped, tag = 'scratch operand']
  #allocation4 [shape = 'f32[2,8]{1,0:T(2,128)}', space=vmem, size = 0x400, scoped, tag = 'scratch operand']
  #allocation5 [shape = 'f32[2,8]{1,0:T(2,128)}', space=vmem, size = 0x400, scoped, tag = 'scratch operand']
  #allocation6 [shape = 'f32[2,8]{1,0:T(2,128)}', space=vmem, size = 0x400, scoped, tag = 'scratch operand']
  #allocation7 [shape = 'f32[2,8]{1,0:T(2,128)}', space=vmem, size = 0x400, scoped, tag = 'scratch operand']
  #allocation8 [shape = 'f32[2,8]{1,0:T(2,128)}', space=vmem, size = 0x400, scoped, tag = 'scratch operand']
  #allocation9 [shape = 'f32[2,8]{1,0:T(2,128)}', space=vmem, size = 0x400, scoped, tag = 'scratch operand']
  #allocation10 [shape = 'f32[2,8]{1,0:T(2,128)}', space=vmem, size = 0x400, scoped, tag = 'scratch operand']
  #allocation11 [shape = 'f32[2,8]{1,0:T(2,128)}', space=vmem, size = 0x400, scoped, tag = 'scratch operand']
  #allocation12 [shape = 'f32[8,8]{1,0:T(8,128)}', space=vmem, size = 0x1000, scoped, tag = 'scratch operand']
  #allocation13 [shape = 'f32[8,8]{1,0:T(8,128)}', space=vmem, size = 0x1000, scoped, tag = 'scratch operand']
  #allocation14 [shape = 'f32[8,8]{1,0:T(8,128)}', space=vmem, size = 0x1000, scoped, tag = 'scratch operand']
  #allocation15 [shape = 'f32[8,8]{1,0:T(8,128)}', space=vmem, size = 0x1000, scoped, tag = 'scratch operand']
  #allocation16 [shape = 'f32[8,8]{1,0:T(8,128)}', space=vmem, size = 0x1000, scoped, tag = 'scratch operand']
  %s0 = inlined_call_operand.smem [shape: u32[38], index: -1, kind: input, shape index: {}]
  %s1 = sld [smem:[%s0]]
  %s2 = scalar_lea.smem %s0, 1
  %s3 = sld [smem:[%s2]]
  %s4 = scalar_lea.smem %s0, 2
  %s5 = sld [smem:[%s4]]
  %s6 = scalar_lea.smem %s0, 3
  %s7 = sld [smem:[%s6]]
  %s8 = scalar_lea.smem %s0, 4
  %s9 = sld [smem:[%s8]]
  %s10 = scalar_lea.smem %s0, 5
  %s11 = sld [smem:[%s10]]
  %s12 = scalar_lea.smem %s0, 6
  %s13 = sld [smem:[%s12]]
  %s14 = scalar_lea.smem %s0, 7
  %s15 = sld [smem:[%s14]]
  %s16 = scalar_lea.smem %s0, 8
  %s17 = sld [smem:[%s16]]
  %s18 = scalar_lea.smem %s0, 9
  %s19 = sld [smem:[%s18]]
  %s20 = scalar_lea.smem %s0, 10
  %s21 = sld [smem:[%s20]]
  %s22 = scalar_lea.smem %s0, 11
  %s23 = sld [smem:[%s22]]
  %s24 = scalar_lea.smem %s0, 12
  %s25 = sld [smem:[%s24]]
  %s26 = scalar_lea.smem %s0, 13
  %s27 = sld [smem:[%s26]]
  %s28 = scalar_lea.smem %s0, 14
  %s29 = sld [smem:[%s28]]
  %s30 = scalar_lea.smem %s0, 15
  %s31 = sld [smem:[%s30]]
  %s32 = scalar_lea.smem %s0, 16
  %s33 = sld [smem:[%s32]]
  %s34 = scalar_lea.smem %s0, 17
  %s35 = sld [smem:[%s34]]
  %s36 = scalar_lea.smem %s0, 18
  %s37 = sld [smem:[%s36]]
  %s38 = scalar_lea.smem %s0, 19
  %s39 = sld [smem:[%s38]]
  %s40 = scalar_lea.smem %s0, 20
  %s41 = sld [smem:[%s40]]
  %s42 = scalar_lea.smem %s0, 21
  %s43 = sld [smem:[%s42]]
  %s44 = scalar_lea.smem %s0, 22
  %s45 = sld [smem:[%s44]]
  %s46 = scalar_lea.smem %s0, 23
  %s47 = sld [smem:[%s46]]
  %s48 = scalar_lea.smem %s0, 24
  %s49 = sld [smem:[%s48]]
  %s50 = scalar_lea.smem %s0, 25
  %s51 = sld [smem:[%s50]]
  %s52 = scalar_lea.smem %s0, 26
  %s53 = sld [smem:[%s52]]
  %s54 = scalar_lea.smem %s0, 27
  %s55 = sld [smem:[%s54]]
  %s56 = scalar_lea.smem %s0, 28
  %s57 = sld [smem:[%s56]]
  %s58 = scalar_lea.smem %s0, 29
  %s59 = sld [smem:[%s58]]
  %s60 = scalar_lea.smem %s0, 30
  %s61 = sld [smem:[%s60]]
  %s62 = scalar_lea.smem %s0, 31
  %s63 = sld [smem:[%s62]]
  %s64 = scalar_lea.smem %s0, 32
  %s65 = sld [smem:[%s64]]
  %s66 = scalar_lea.smem %s0, 33
  %s67 = sld [smem:[%s66]]
  %s68 = scalar_lea.smem %s0, 34
  %s69 = sld [smem:[%s68]]
  %s70 = scalar_lea.smem %s0, 35
  %s71 = sld [smem:[%s70]]
  %s72 = scalar_lea.smem %s0, 36
  %s73 = sld [smem:[%s72]]
  %s74 = scalar_lea.smem %s0, 37
  %s75 = sld [smem:[%s74]]
  %76 = xla_tuple %s63, %s65, %s67, %s69, %s71, %s73, %s75
  %s77 = sld [smem:[#allocation0]]
  $region209: #{tpu_custom_call.1} parent=0
    _
  %s79 = ssub.s32 1, %s77
  %s80 = scalar_select 0, %s79, %s77
  $region1: #{tpu_custom_call.1} parent=0
    #allocation17 [shape = 'u8[8192]{0}', space=vmem, size = 0x2000, scoped, tag = 'output window, operand 0']
    #allocation18 [shape = 's32[2]{0}', space=sflag, size = 0x8, scoped, tag = 'scoped memory for tpu_custom_call.1']
    #allocation19 [shape = 'u8[8192]{0}', space=vmem, size = 0x2000, scoped, tag = 'output window, operand 1']
    #allocation20 [shape = 's32[2]{0}', space=sflag, size = 0x8, scoped, tag = 'scoped memory for tpu_custom_call.1']
    #allocation21 [shape = 'u8[2048]{0}', space=vmem, size = 0x800, scoped, tag = 'output window, operand 2']
    #allocation22 [shape = 'u8[2048]{0}', space=vmem, size = 0x800, scoped, tag = 'output window, operand 3']
    #allocation23 [shape = 's32[2]{0}', space=sflag, size = 0x8, scoped, tag = 'scoped memory for tpu_custom_call.1']
    #allocation24 [shape = 'u8[2048]{0}', space=vmem, size = 0x800, scoped, tag = 'output window, operand 4']
    #allocation25 [shape = 'u8[2048]{0}', space=vmem, size = 0x800, scoped, tag = 'output window, operand 5']
    #allocation26 [shape = 's32[2]{0}', space=sflag, size = 0x8, scoped, tag = 'scoped memory for tpu_custom_call.1']
    #allocation27 [shape = 'u8[2048]{0}', space=vmem, size = 0x800, scoped, tag = 'output window, operand 6']
    %81 = vsyncpa [#allocation18], 0
    %s82 = scalar_lea.sflag [#allocation18], 1
    %83 = vsyncpa %s82, 0
    %84 = vsyncpa [#allocation20], 0
    %s85 = scalar_lea.sflag [#allocation20], 1
    %86 = vsyncpa %s85, 0
    %87 = vsyncpa [#allocation23], 0
    %s88 = scalar_lea.sflag [#allocation23], 1
    %89 = vsyncpa %s88, 0
    %90 = vsyncpa [#allocation26], 0
    %s91 = scalar_lea.sflag [#allocation26], 1
    %92 = vsyncpa %s91, 0
    loop: start=0, step=1, limit=5
    $region2: #{tpu_custom_call.1} parent=1 // loop_pre_header
      _
    $region3: #{tpu_custom_call.1} parent=1 // loop_header
      %s94 = sphi 0, %s98
      %p95 = scmp.ge.s32.totalorder %s94, 5
      %s104 = sphi 0, %s106
      %s107 = sphi 0, %s104
      %s108 = sphi 0, %s107
      %s124 = sphi 0, %s108
      %s130 = sphi 0, %s132
      %s133 = sphi 0, %s130
      %s134 = sphi 0, %s133
      %s150 = sphi 0, %s134
      %s162 = sphi 0, %s164
      %s165 = sphi 0, %s162
      %s166 = sphi 0, %s165
      %s182 = sphi 0, %s166
      %s188 = sphi 0, %s190
      %s191 = sphi 0, %s188
      %s192 = sphi 0, %s191
      %s208 = sphi 0, %s192
      %s212 = sphi 0, %s212
      %s214 = sphi 0, %s212
      %s215 = sphi 0, %s214
      %s229 = sphi 0, %s215
      %s233 = sphi 0, %s233
      %s235 = sphi 0, %s233
      %s236 = sphi 0, %s235
      %s250 = sphi 0, %s236
      %s254 = sphi 0, %s254
      %s256 = sphi 0, %s254
      %s257 = sphi 0, %s256
      %s271 = sphi 0, %s257
      %s275 = sphi 0, %s275
      %s277 = sphi 0, %s275
      %s278 = sphi 0, %s277
      %s292 = sphi 0, %s278
      %s296 = sphi 0, %s296
      %s298 = sphi 0, %s296
      %s299 = sphi 0, %s298
      %s313 = sphi 0, %s299
      %s317 = sphi 0, %s317
      %s319 = sphi 0, %s317
      %s320 = sphi 0, %s319
      %s334 = sphi 0, %s320
      %s338 = sphi 0, %s338
      %s340 = sphi 0, %s338
      %s341 = sphi 0, %s340
      %s355 = sphi 0, %s341
      %s359 = sphi 0, %s359
      %s361 = sphi 0, %s359
      %s362 = sphi 0, %s361
      %s376 = sphi 0, %s362
      %s380 = sphi 0, %s380
      %s382 = sphi 0, %s380
      %s383 = sphi 0, %s382
      %s397 = sphi 0, %s383
      %s401 = sphi 0, %s401
      %s403 = sphi 0, %s401
      %s404 = sphi 0, %s403
      %s418 = sphi 0, %s404
      %s422 = sphi 0, %s422
      %s424 = sphi 0, %s422
      %s425 = sphi 0, %s424
      %s439 = sphi 0, %s425
      %s443 = sphi 0, %s443
      %s445 = sphi 0, %s443
      %s446 = sphi 0, %s445
      %s460 = sphi 0, %s446
      %s464 = sphi 0, %s464
      %s466 = sphi 0, %s464
      %s467 = sphi 0, %s466
      %s481 = sphi 0, %s467
      %s485 = sphi 0, %s485
      %s487 = sphi 0, %s485
      %s488 = sphi 0, %s487
      %s502 = sphi 0, %s488
      %s506 = sphi 0, %s506
      %s508 = sphi 0, %s506
      %s509 = sphi 0, %s508
      %s523 = sphi 0, %s509
      %s527 = sphi 0, %s527
      %s529 = sphi 0, %s527
      %s530 = sphi 0, %s529
      %s544 = sphi 0, %s530
      %s548 = sphi 0, %s548
      %s550 = sphi 0, %s548
      %s551 = sphi 0, %s550
      %s565 = sphi 0, %s551
      %s569 = sphi 0, %s569
      %s571 = sphi 0, %s569
      %s572 = sphi 0, %s571
      %s586 = sphi 0, %s572
      %s590 = sphi 0, %s590
      %s592 = sphi 0, %s590
      %s593 = sphi 0, %s592
      %s607 = sphi 0, %s593
      %s611 = sphi 0, %s611
      %s613 = sphi 0, %s611
      %s614 = sphi 0, %s613
      %s628 = sphi 0, %s614
      %s632 = sphi 0, %s632
      %s634 = sphi 0, %s632
      %s635 = sphi 0, %s634
      %s649 = sphi 0, %s635
      %s653 = sphi 0, %s653
      %s655 = sphi 0, %s653
      %s656 = sphi 0, %s655
      %s670 = sphi 0, %s656
      %s674 = sphi 0, %s674
      %s676 = sphi 0, %s674
      %s677 = sphi 0, %s676
      %s691 = sphi 0, %s677
      %s695 = sphi 0, %s695
      %s697 = sphi 0, %s695
      %s698 = sphi 0, %s697
      %s712 = sphi 0, %s698
      %s716 = sphi 0, %s716
      %s718 = sphi 0, %s716
      %s719 = sphi 0, %s718
      %s733 = sphi 0, %s719
      %s737 = sphi 0, %s737
      %s739 = sphi 0, %s737
      %s740 = sphi 0, %s739
      %s754 = sphi 0, %s740
      %s758 = sphi 0, %s758
      %s760 = sphi 0, %s758
      %s761 = sphi 0, %s760
      %s775 = sphi 0, %s761
      %s781 = sphi 0, %s783
      %s784 = sphi 0, %s781
      %s785 = sphi 0, %s784
      %s801 = sphi 0, %s785
      %s807 = sphi 0, %s809
      %s810 = sphi 0, %s807
      %s811 = sphi 0, %s810
      %s827 = sphi 0, %s811
      %s833 = sphi 0, %s835
      %s836 = sphi 0, %s833
      %s837 = sphi 0, %s836
      %s853 = sphi 0, %s837
      %s859 = sphi 0, %s861
      %s862 = sphi 0, %s859
      %s863 = sphi 0, %s862
      %s879 = sphi 0, %s863
      %s885 = sphi 0, %s887
      %s888 = sphi 0, %s885
      %s889 = sphi 0, %s888
      %s905 = sphi 0, %s889
      %s911 = sphi 0, %s913
      %s914 = sphi 0, %s911
      %s915 = sphi 0, %s914
      %s931 = sphi 0, %s915
      %s937 = sphi 0, %s939
      %s940 = sphi 0, %s937
      %s941 = sphi 0, %s940
      %s957 = sphi 0, %s941
    $region4: #{tpu_custom_call.1} parent=1 // loop_header_branch
      %97 = sbr.rel (%p95) target = $region8
    $region5: #{tpu_custom_call.1} parent=1 // loop_body
      %s99 = ssub.s32 %s94, 1
      %s100 = ssub.s32 %s94, 2
      %s101 = sadd.s32 %s94, 1
      %s102 = ssub.s32 %s94, %s101
      %p103 = scmp.eq.s32.totalorder %s102, 0
      %s105 = sadd.s32 %s104, 1
      %s106 = scalar_select %p103, %s104, %s105
      %p109 = pneg %p103
      %p110 = scmp.eq.s32.totalorder %s94, 2
      %p111 = por %p109, %p110
      %p112 = scmp.ne.s32.totalorder %s104, %s107
      %p113 = scmp.eq.s32.totalorder %s94, 0
      %p114 = por %p112, %p113
      %p115 = scmp.ne.s32.totalorder %s104, %s107
      %p116 = scmp.eq.s32.totalorder %s99, 2
      %p117 = por %p115, %p116
      %p118 = scmp.ne.s32.totalorder %s107, %s108
      %p119 = scmp.eq.s32.totalorder %s99, 0
      %p120 = por %p118, %p119
      %p121 = scmp.ne.s32.totalorder %s107, %s108
      %p122 = scmp.eq.s32.totalorder %s100, 2
      %p123 = por %p121, %p122
      %p125 = scmp.ne.s32.totalorder %s108, %s124
      %p126 = scmp.eq.s32.totalorder %s100, 0
      %p127 = por %p125, %p126
      %s128 = ssub.s32 %s94, %s101
      %p129 = scmp.eq.s32.totalorder %s128, 0
      %s131 = sadd.s32 %s130, 1
      %s132 = scalar_select %p129, %s130, %s131
      %p135 = pneg %p129
      %p136 = scmp.eq.s32.totalorder %s94, 2
      %p137 = por %p135, %p136
      %p138 = scmp.ne.s32.totalorder %s130, %s133
      %p139 = scmp.eq.s32.totalorder %s94, 0
      %p140 = por %p138, %p139
      %p141 = scmp.ne.s32.totalorder %s130, %s133
      %p142 = scmp.eq.s32.totalorder %s99, 2
      %p143 = por %p141, %p142
      %p144 = scmp.ne.s32.totalorder %s133, %s134
      %p145 = scmp.eq.s32.totalorder %s99, 0
      %p146 = por %p144, %p145
      %p147 = scmp.ne.s32.totalorder %s133, %s134
      %p148 = scmp.eq.s32.totalorder %s100, 2
      %p149 = por %p147, %p148
      %p151 = scmp.ne.s32.totalorder %s134, %s150
      %p152 = scmp.eq.s32.totalorder %s100, 0
      %p153 = por %p151, %p152
      %s154 = sadd.s32 %s94, 1
      %p155 = scmp.lt.s32.totalorder %s154, 2
      %s156 = scalar_select %p155, %s154, 2
      %s157 = sadd.s32 %s101, 1
      %p158 = scmp.lt.s32.totalorder %s157, 2
      %s159 = scalar_select %p158, %s157, 2
      %s160 = ssub.s32 %s156, %s159
      %p161 = scmp.eq.s32.totalorder %s160, 0
      %s163 = sadd.s32 %s162, 1
      %s164 = scalar_select %p161, %s162, %s163
      %p167 = pneg %p161
      %p168 = scmp.eq.s32.totalorder %s94, 2
      %p169 = por %p167, %p168
      %p170 = scmp.ne.s32.totalorder %s162, %s165
      %p171 = scmp.eq.s32.totalorder %s94, 0
      %p172 = por %p170, %p171
      %p173 = scmp.ne.s32.totalorder %s162, %s165
      %p174 = scmp.eq.s32.totalorder %s99, 2
      %p175 = por %p173, %p174
      %p176 = scmp.ne.s32.totalorder %s165, %s166
      %p177 = scmp.eq.s32.totalorder %s99, 0
      %p178 = por %p176, %p177
      %p179 = scmp.ne.s32.totalorder %s165, %s166
      %p180 = scmp.eq.s32.totalorder %s100, 2
      %p181 = por %p179, %p180
      %p183 = scmp.ne.s32.totalorder %s166, %s182
      %p184 = scmp.eq.s32.totalorder %s100, 0
      %p185 = por %p183, %p184
      %s186 = ssub.s32 %s94, %s101
      %p187 = scmp.eq.s32.totalorder %s186, 0
      %s189 = sadd.s32 %s188, 1
      %s190 = scalar_select %p187, %s188, %s189
      %p193 = pneg %p187
      %p194 = scmp.eq.s32.totalorder %s94, 2
      %p195 = por %p193, %p194
      %p196 = scmp.ne.s32.totalorder %s188, %s191
      %p197 = scmp.eq.s32.totalorder %s94, 0
      %p198 = por %p196, %p197
      %p199 = scmp.ne.s32.totalorder %s188, %s191
      %p200 = scmp.eq.s32.totalorder %s99, 2
      %p201 = por %p199, %p200
      %p202 = scmp.ne.s32.totalorder %s191, %s192
      %p203 = scmp.eq.s32.totalorder %s99, 0
      %p204 = por %p202, %p203
      %p205 = scmp.ne.s32.totalorder %s191, %s192
      %p206 = scmp.eq.s32.totalorder %s100, 2
      %p207 = por %p205, %p206
      %p209 = scmp.ne.s32.totalorder %s192, %s208
      %p210 = scmp.eq.s32.totalorder %s100, 0
      %p211 = por %p209, %p210
      %s213 = sadd.s32 %s212, 1
      %p216 = scmp.eq.s32.totalorder %s94, 2
      %p217 = scmp.ne.s32.totalorder %s212, %s214
      %p218 = scmp.eq.s32.totalorder %s94, 0
      %p219 = por %p217, %p218
      %p220 = scmp.ne.s32.totalorder %s212, %s214
      %p221 = scmp.eq.s32.totalorder %s99, 2
      %p222 = por %p220, %p221
      %p223 = scmp.ne.s32.totalorder %s214, %s215
      %p224 = scmp.eq.s32.totalorder %s99, 0
      %p225 = por %p223, %p224
      %p226 = scmp.ne.s32.totalorder %s214, %s215
      %p227 = scmp.eq.s32.totalorder %s100, 2
      %p228 = por %p226, %p227
      %p230 = scmp.ne.s32.totalorder %s215, %s229
      %p231 = scmp.eq.s32.totalorder %s100, 0
      %p232 = por %p230, %p231
      %s234 = sadd.s32 %s233, 1
      %p237 = scmp.eq.s32.totalorder %s94, 2
      %p238 = scmp.ne.s32.totalorder %s233, %s235
      %p239 = scmp.eq.s32.totalorder %s94, 0
      %p240 = por %p238, %p239
      %p241 = scmp.ne.s32.totalorder %s233, %s235
      %p242 = scmp.eq.s32.totalorder %s99, 2
      %p243 = por %p241, %p242
      %p244 = scmp.ne.s32.totalorder %s235, %s236
      %p245 = scmp.eq.s32.totalorder %s99, 0
      %p246 = por %p244, %p245
      %p247 = scmp.ne.s32.totalorder %s235, %s236
      %p248 = scmp.eq.s32.totalorder %s100, 2
      %p249 = por %p247, %p248
      %p251 = scmp.ne.s32.totalorder %s236, %s250
      %p252 = scmp.eq.s32.totalorder %s100, 0
      %p253 = por %p251, %p252
      %s255 = sadd.s32 %s254, 1
      %p258 = scmp.eq.s32.totalorder %s94, 2
      %p259 = scmp.ne.s32.totalorder %s254, %s256
      %p260 = scmp.eq.s32.totalorder %s94, 0
      %p261 = por %p259, %p260
      %p262 = scmp.ne.s32.totalorder %s254, %s256
      %p263 = scmp.eq.s32.totalorder %s99, 2
      %p264 = por %p262, %p263
      %p265 = scmp.ne.s32.totalorder %s256, %s257
      %p266 = scmp.eq.s32.totalorder %s99, 0
      %p267 = por %p265, %p266
      %p268 = scmp.ne.s32.totalorder %s256, %s257
      %p269 = scmp.eq.s32.totalorder %s100, 2
      %p270 = por %p268, %p269
      %p272 = scmp.ne.s32.totalorder %s257, %s271
      %p273 = scmp.eq.s32.totalorder %s100, 0
      %p274 = por %p272, %p273
      %s276 = sadd.s32 %s275, 1
      %p279 = scmp.eq.s32.totalorder %s94, 2
      %p280 = scmp.ne.s32.totalorder %s275, %s277
      %p281 = scmp.eq.s32.totalorder %s94, 0
      %p282 = por %p280, %p281
      %p283 = scmp.ne.s32.totalorder %s275, %s277
      %p284 = scmp.eq.s32.totalorder %s99, 2
      %p285 = por %p283, %p284
      %p286 = scmp.ne.s32.totalorder %s277, %s278
      %p287 = scmp.eq.s32.totalorder %s99, 0
      %p288 = por %p286, %p287
      %p289 = scmp.ne.s32.totalorder %s277, %s278
      %p290 = scmp.eq.s32.totalorder %s100, 2
      %p291 = por %p289, %p290
      %p293 = scmp.ne.s32.totalorder %s278, %s292
      %p294 = scmp.eq.s32.totalorder %s100, 0
      %p295 = por %p293, %p294
      %s297 = sadd.s32 %s296, 1
      %p300 = scmp.eq.s32.totalorder %s94, 2
      %p301 = scmp.ne.s32.totalorder %s296, %s298
      %p302 = scmp.eq.s32.totalorder %s94, 0
      %p303 = por %p301, %p302
      %p304 = scmp.ne.s32.totalorder %s296, %s298
      %p305 = scmp.eq.s32.totalorder %s99, 2
      %p306 = por %p304, %p305
      %p307 = scmp.ne.s32.totalorder %s298, %s299
      %p308 = scmp.eq.s32.totalorder %s99, 0
      %p309 = por %p307, %p308
      %p310 = scmp.ne.s32.totalorder %s298, %s299
      %p311 = scmp.eq.s32.totalorder %s100, 2
      %p312 = por %p310, %p311
      %p314 = scmp.ne.s32.totalorder %s299, %s313
      %p315 = scmp.eq.s32.totalorder %s100, 0
      %p316 = por %p314, %p315
      %s318 = sadd.s32 %s317, 1
      %p321 = scmp.eq.s32.totalorder %s94, 2
      %p322 = scmp.ne.s32.totalorder %s317, %s319
      %p323 = scmp.eq.s32.totalorder %s94, 0
      %p324 = por %p322, %p323
      %p325 = scmp.ne.s32.totalorder %s317, %s319
      %p326 = scmp.eq.s32.totalorder %s99, 2
      %p327 = por %p325, %p326
      %p328 = scmp.ne.s32.totalorder %s319, %s320
      %p329 = scmp.eq.s32.totalorder %s99, 0
      %p330 = por %p328, %p329
      %p331 = scmp.ne.s32.totalorder %s319, %s320
      %p332 = scmp.eq.s32.totalorder %s100, 2
      %p333 = por %p331, %p332
      %p335 = scmp.ne.s32.totalorder %s320, %s334
      %p336 = scmp.eq.s32.totalorder %s100, 0
      %p337 = por %p335, %p336
      %s339 = sadd.s32 %s338, 1
      %p342 = scmp.eq.s32.totalorder %s94, 2
      %p343 = scmp.ne.s32.totalorder %s338, %s340
      %p344 = scmp.eq.s32.totalorder %s94, 0
      %p345 = por %p343, %p344
      %p346 = scmp.ne.s32.totalorder %s338, %s340
      %p347 = scmp.eq.s32.totalorder %s99, 2
      %p348 = por %p346, %p347
      %p349 = scmp.ne.s32.totalorder %s340, %s341
      %p350 = scmp.eq.s32.totalorder %s99, 0
      %p351 = por %p349, %p350
      %p352 = scmp.ne.s32.totalorder %s340, %s341
      %p353 = scmp.eq.s32.totalorder %s100, 2
      %p354 = por %p352, %p353
      %p356 = scmp.ne.s32.totalorder %s341, %s355
      %p357 = scmp.eq.s32.totalorder %s100, 0
      %p358 = por %p356, %p357
      %s360 = sadd.s32 %s359, 1
      %p363 = scmp.eq.s32.totalorder %s94, 2
      %p364 = scmp.ne.s32.totalorder %s359, %s361
      %p365 = scmp.eq.s32.totalorder %s94, 0
      %p366 = por %p364, %p365
      %p367 = scmp.ne.s32.totalorder %s359, %s361
      %p368 = scmp.eq.s32.totalorder %s99, 2
      %p369 = por %p367, %p368
      %p370 = scmp.ne.s32.totalorder %s361, %s362
      %p371 = scmp.eq.s32.totalorder %s99, 0
      %p372 = por %p370, %p371
      %p373 = scmp.ne.s32.totalorder %s361, %s362
      %p374 = scmp.eq.s32.totalorder %s100, 2
      %p375 = por %p373, %p374
      %p377 = scmp.ne.s32.totalorder %s362, %s376
      %p378 = scmp.eq.s32.totalorder %s100, 0
      %p379 = por %p377, %p378
      %s381 = sadd.s32 %s380, 1
      %p384 = scmp.eq.s32.totalorder %s94, 2
      %p385 = scmp.ne.s32.totalorder %s380, %s382
      %p386 = scmp.eq.s32.totalorder %s94, 0
      %p387 = por %p385, %p386
      %p388 = scmp.ne.s32.totalorder %s380, %s382
      %p389 = scmp.eq.s32.totalorder %s99, 2
      %p390 = por %p388, %p389
      %p391 = scmp.ne.s32.totalorder %s382, %s383
      %p392 = scmp.eq.s32.totalorder %s99, 0
      %p393 = por %p391, %p392
      %p394 = scmp.ne.s32.totalorder %s382, %s383
      %p395 = scmp.eq.s32.totalorder %s100, 2
      %p396 = por %p394, %p395
      %p398 = scmp.ne.s32.totalorder %s383, %s397
      %p399 = scmp.eq.s32.totalorder %s100, 0
      %p400 = por %p398, %p399
      %s402 = sadd.s32 %s401, 1
      %p405 = scmp.eq.s32.totalorder %s94, 2
      %p406 = scmp.ne.s32.totalorder %s401, %s403
      %p407 = scmp.eq.s32.totalorder %s94, 0
      %p408 = por %p406, %p407
      %p409 = scmp.ne.s32.totalorder %s401, %s403
      %p410 = scmp.eq.s32.totalorder %s99, 2
      %p411 = por %p409, %p410
      %p412 = scmp.ne.s32.totalorder %s403, %s404
      %p413 = scmp.eq.s32.totalorder %s99, 0
      %p414 = por %p412, %p413
      %p415 = scmp.ne.s32.totalorder %s403, %s404
      %p416 = scmp.eq.s32.totalorder %s100, 2
      %p417 = por %p415, %p416
      %p419 = scmp.ne.s32.totalorder %s404, %s418
      %p420 = scmp.eq.s32.totalorder %s100, 0
      %p421 = por %p419, %p420
      %s423 = sadd.s32 %s422, 1
      %p426 = scmp.eq.s32.totalorder %s94, 2
      %p427 = scmp.ne.s32.totalorder %s422, %s424
      %p428 = scmp.eq.s32.totalorder %s94, 0
      %p429 = por %p427, %p428
      %p430 = scmp.ne.s32.totalorder %s422, %s424
      %p431 = scmp.eq.s32.totalorder %s99, 2
      %p432 = por %p430, %p431
      %p433 = scmp.ne.s32.totalorder %s424, %s425
      %p434 = scmp.eq.s32.totalorder %s99, 0
      %p435 = por %p433, %p434
      %p436 = scmp.ne.s32.totalorder %s424, %s425
      %p437 = scmp.eq.s32.totalorder %s100, 2
      %p438 = por %p436, %p437
      %p440 = scmp.ne.s32.totalorder %s425, %s439
      %p441 = scmp.eq.s32.totalorder %s100, 0
      %p442 = por %p440, %p441
      %s444 = sadd.s32 %s443, 1
      %p447 = scmp.eq.s32.totalorder %s94, 2
      %p448 = scmp.ne.s32.totalorder %s443, %s445
      %p449 = scmp.eq.s32.totalorder %s94, 0
      %p450 = por %p448, %p449
      %p451 = scmp.ne.s32.totalorder %s443, %s445
      %p452 = scmp.eq.s32.totalorder %s99, 2
      %p453 = por %p451, %p452
      %p454 = scmp.ne.s32.totalorder %s445, %s446
      %p455 = scmp.eq.s32.totalorder %s99, 0
      %p456 = por %p454, %p455
      %p457 = scmp.ne.s32.totalorder %s445, %s446
      %p458 = scmp.eq.s32.totalorder %s100, 2
      %p459 = por %p457, %p458
      %p461 = scmp.ne.s32.totalorder %s446, %s460
      %p462 = scmp.eq.s32.totalorder %s100, 0
      %p463 = por %p461, %p462
      %s465 = sadd.s32 %s464, 1
      %p468 = scmp.eq.s32.totalorder %s94, 2
      %p469 = scmp.ne.s32.totalorder %s464, %s466
      %p470 = scmp.eq.s32.totalorder %s94, 0
      %p471 = por %p469, %p470
      %p472 = scmp.ne.s32.totalorder %s464, %s466
      %p473 = scmp.eq.s32.totalorder %s99, 2
      %p474 = por %p472, %p473
      %p475 = scmp.ne.s32.totalorder %s466, %s467
      %p476 = scmp.eq.s32.totalorder %s99, 0
      %p477 = por %p475, %p476
      %p478 = scmp.ne.s32.totalorder %s466, %s467
      %p479 = scmp.eq.s32.totalorder %s100, 2
      %p480 = por %p478, %p479
      %p482 = scmp.ne.s32.totalorder %s467, %s481
      %p483 = scmp.eq.s32.totalorder %s100, 0
      %p484 = por %p482, %p483
      %s486 = sadd.s32 %s485, 1
      %p489 = scmp.eq.s32.totalorder %s94, 2
      %p490 = scmp.ne.s32.totalorder %s485, %s487
      %p491 = scmp.eq.s32.totalorder %s94, 0
      %p492 = por %p490, %p491
      %p493 = scmp.ne.s32.totalorder %s485, %s487
      %p494 = scmp.eq.s32.totalorder %s99, 2
      %p495 = por %p493, %p494
      %p496 = scmp.ne.s32.totalorder %s487, %s488
      %p497 = scmp.eq.s32.totalorder %s99, 0
      %p498 = por %p496, %p497
      %p499 = scmp.ne.s32.totalorder %s487, %s488
      %p500 = scmp.eq.s32.totalorder %s100, 2
      %p501 = por %p499, %p500
      %p503 = scmp.ne.s32.totalorder %s488, %s502
      %p504 = scmp.eq.s32.totalorder %s100, 0
      %p505 = por %p503, %p504
      %s507 = sadd.s32 %s506, 1
      %p510 = scmp.eq.s32.totalorder %s94, 2
      %p511 = scmp.ne.s32.totalorder %s506, %s508
      %p512 = scmp.eq.s32.totalorder %s94, 0
      %p513 = por %p511, %p512
      %p514 = scmp.ne.s32.totalorder %s506, %s508
      %p515 = scmp.eq.s32.totalorder %s99, 2
      %p516 = por %p514, %p515
      %p517 = scmp.ne.s32.totalorder %s508, %s509
      %p518 = scmp.eq.s32.totalorder %s99, 0
      %p519 = por %p517, %p518
      %p520 = scmp.ne.s32.totalorder %s508, %s509
      %p521 = scmp.eq.s32.totalorder %s100, 2
      %p522 = por %p520, %p521
      %p524 = scmp.ne.s32.totalorder %s509, %s523
      %p525 = scmp.eq.s32.totalorder %s100, 0
      %p526 = por %p524, %p525
      %s528 = sadd.s32 %s527, 1
      %p531 = scmp.eq.s32.totalorder %s94, 2
      %p532 = scmp.ne.s32.totalorder %s527, %s529
      %p533 = scmp.eq.s32.totalorder %s94, 0
      %p534 = por %p532, %p533
      %p535 = scmp.ne.s32.totalorder %s527, %s529
      %p536 = scmp.eq.s32.totalorder %s99, 2
      %p537 = por %p535, %p536
      %p538 = scmp.ne.s32.totalorder %s529, %s530
      %p539 = scmp.eq.s32.totalorder %s99, 0
      %p540 = por %p538, %p539
      %p541 = scmp.ne.s32.totalorder %s529, %s530
      %p542 = scmp.eq.s32.totalorder %s100, 2
      %p543 = por %p541, %p542
      %p545 = scmp.ne.s32.totalorder %s530, %s544
      %p546 = scmp.eq.s32.totalorder %s100, 0
      %p547 = por %p545, %p546
      %s549 = sadd.s32 %s548, 1
      %p552 = scmp.eq.s32.totalorder %s94, 2
      %p553 = scmp.ne.s32.totalorder %s548, %s550
      %p554 = scmp.eq.s32.totalorder %s94, 0
      %p555 = por %p553, %p554
      %p556 = scmp.ne.s32.totalorder %s548, %s550
      %p557 = scmp.eq.s32.totalorder %s99, 2
      %p558 = por %p556, %p557
      %p559 = scmp.ne.s32.totalorder %s550, %s551
      %p560 = scmp.eq.s32.totalorder %s99, 0
      %p561 = por %p559, %p560
      %p562 = scmp.ne.s32.totalorder %s550, %s551
      %p563 = scmp.eq.s32.totalorder %s100, 2
      %p564 = por %p562, %p563
      %p566 = scmp.ne.s32.totalorder %s551, %s565
      %p567 = scmp.eq.s32.totalorder %s100, 0
      %p568 = por %p566, %p567
      %s570 = sadd.s32 %s569, 1
      %p573 = scmp.eq.s32.totalorder %s94, 2
      %p574 = scmp.ne.s32.totalorder %s569, %s571
      %p575 = scmp.eq.s32.totalorder %s94, 0
      %p576 = por %p574, %p575
      %p577 = scmp.ne.s32.totalorder %s569, %s571
      %p578 = scmp.eq.s32.totalorder %s99, 2
      %p579 = por %p577, %p578
      %p580 = scmp.ne.s32.totalorder %s571, %s572
      %p581 = scmp.eq.s32.totalorder %s99, 0
      %p582 = por %p580, %p581
      %p583 = scmp.ne.s32.totalorder %s571, %s572
      %p584 = scmp.eq.s32.totalorder %s100, 2
      %p585 = por %p583, %p584
      %p587 = scmp.ne.s32.totalorder %s572, %s586
      %p588 = scmp.eq.s32.totalorder %s100, 0
      %p589 = por %p587, %p588
      %s591 = sadd.s32 %s590, 1
      %p594 = scmp.eq.s32.totalorder %s94, 2
      %p595 = scmp.ne.s32.totalorder %s590, %s592
      %p596 = scmp.eq.s32.totalorder %s94, 0
      %p597 = por %p595, %p596
      %p598 = scmp.ne.s32.totalorder %s590, %s592
      %p599 = scmp.eq.s32.totalorder %s99, 2
      %p600 = por %p598, %p599
      %p601 = scmp.ne.s32.totalorder %s592, %s593
      %p602 = scmp.eq.s32.totalorder %s99, 0
      %p603 = por %p601, %p602
      %p604 = scmp.ne.s32.totalorder %s592, %s593
      %p605 = scmp.eq.s32.totalorder %s100, 2
      %p606 = por %p604, %p605
      %p608 = scmp.ne.s32.totalorder %s593, %s607
      %p609 = scmp.eq.s32.totalorder %s100, 0
      %p610 = por %p608, %p609
      %s612 = sadd.s32 %s611, 1
      %p615 = scmp.eq.s32.totalorder %s94, 2
      %p616 = scmp.ne.s32.totalorder %s611, %s613
      %p617 = scmp.eq.s32.totalorder %s94, 0
      %p618 = por %p616, %p617
      %p619 = scmp.ne.s32.totalorder %s611, %s613
      %p620 = scmp.eq.s32.totalorder %s99, 2
      %p621 = por %p619, %p620
      %p622 = scmp.ne.s32.totalorder %s613, %s614
      %p623 = scmp.eq.s32.totalorder %s99, 0
      %p624 = por %p622, %p623
      %p625 = scmp.ne.s32.totalorder %s613, %s614
      %p626 = scmp.eq.s32.totalorder %s100, 2
      %p627 = por %p625, %p626
      %p629 = scmp.ne.s32.totalorder %s614, %s628
      %p630 = scmp.eq.s32.totalorder %s100, 0
      %p631 = por %p629, %p630
      %s633 = sadd.s32 %s632, 1
      %p636 = scmp.eq.s32.totalorder %s94, 2
      %p637 = scmp.ne.s32.totalorder %s632, %s634
      %p638 = scmp.eq.s32.totalorder %s94, 0
      %p639 = por %p637, %p638
      %p640 = scmp.ne.s32.totalorder %s632, %s634
      %p641 = scmp.eq.s32.totalorder %s99, 2
      %p642 = por %p640, %p641
      %p643 = scmp.ne.s32.totalorder %s634, %s635
      %p644 = scmp.eq.s32.totalorder %s99, 0
      %p645 = por %p643, %p644
      %p646 = scmp.ne.s32.totalorder %s634, %s635
      %p647 = scmp.eq.s32.totalorder %s100, 2
      %p648 = por %p646, %p647
      %p650 = scmp.ne.s32.totalorder %s635, %s649
      %p651 = scmp.eq.s32.totalorder %s100, 0
      %p652 = por %p650, %p651
      %s654 = sadd.s32 %s653, 1
      %p657 = scmp.eq.s32.totalorder %s94, 2
      %p658 = scmp.ne.s32.totalorder %s653, %s655
      %p659 = scmp.eq.s32.totalorder %s94, 0
      %p660 = por %p658, %p659
      %p661 = scmp.ne.s32.totalorder %s653, %s655
      %p662 = scmp.eq.s32.totalorder %s99, 2
      %p663 = por %p661, %p662
      %p664 = scmp.ne.s32.totalorder %s655, %s656
      %p665 = scmp.eq.s32.totalorder %s99, 0
      %p666 = por %p664, %p665
      %p667 = scmp.ne.s32.totalorder %s655, %s656
      %p668 = scmp.eq.s32.totalorder %s100, 2
      %p669 = por %p667, %p668
      %p671 = scmp.ne.s32.totalorder %s656, %s670
      %p672 = scmp.eq.s32.totalorder %s100, 0
      %p673 = por %p671, %p672
      %s675 = sadd.s32 %s674, 1
      %p678 = scmp.eq.s32.totalorder %s94, 2
      %p679 = scmp.ne.s32.totalorder %s674, %s676
      %p680 = scmp.eq.s32.totalorder %s94, 0
      %p681 = por %p679, %p680
      %p682 = scmp.ne.s32.totalorder %s674, %s676
      %p683 = scmp.eq.s32.totalorder %s99, 2
      %p684 = por %p682, %p683
      %p685 = scmp.ne.s32.totalorder %s676, %s677
      %p686 = scmp.eq.s32.totalorder %s99, 0
      %p687 = por %p685, %p686
      %p688 = scmp.ne.s32.totalorder %s676, %s677
      %p689 = scmp.eq.s32.totalorder %s100, 2
      %p690 = por %p688, %p689
      %p692 = scmp.ne.s32.totalorder %s677, %s691
      %p693 = scmp.eq.s32.totalorder %s100, 0
      %p694 = por %p692, %p693
      %s696 = sadd.s32 %s695, 1
      %p699 = scmp.eq.s32.totalorder %s94, 2
      %p700 = scmp.ne.s32.totalorder %s695, %s697
      %p701 = scmp.eq.s32.totalorder %s94, 0
      %p702 = por %p700, %p701
      %p703 = scmp.ne.s32.totalorder %s695, %s697
      %p704 = scmp.eq.s32.totalorder %s99, 2
      %p705 = por %p703, %p704
      %p706 = scmp.ne.s32.totalorder %s697, %s698
      %p707 = scmp.eq.s32.totalorder %s99, 0
      %p708 = por %p706, %p707
      %p709 = scmp.ne.s32.totalorder %s697, %s698
      %p710 = scmp.eq.s32.totalorder %s100, 2
      %p711 = por %p709, %p710
      %p713 = scmp.ne.s32.totalorder %s698, %s712
      %p714 = scmp.eq.s32.totalorder %s100, 0
      %p715 = por %p713, %p714
      %s717 = sadd.s32 %s716, 1
      %p720 = scmp.eq.s32.totalorder %s94, 2
      %p721 = scmp.ne.s32.totalorder %s716, %s718
      %p722 = scmp.eq.s32.totalorder %s94, 0
      %p723 = por %p721, %p722
      %p724 = scmp.ne.s32.totalorder %s716, %s718
      %p725 = scmp.eq.s32.totalorder %s99, 2
      %p726 = por %p724, %p725
      %p727 = scmp.ne.s32.totalorder %s718, %s719
      %p728 = scmp.eq.s32.totalorder %s99, 0
      %p729 = por %p727, %p728
      %p730 = scmp.ne.s32.totalorder %s718, %s719
      %p731 = scmp.eq.s32.totalorder %s100, 2
      %p732 = por %p730, %p731
      %p734 = scmp.ne.s32.totalorder %s719, %s733
      %p735 = scmp.eq.s32.totalorder %s100, 0
      %p736 = por %p734, %p735
      %s738 = sadd.s32 %s737, 1
      %p741 = scmp.eq.s32.totalorder %s94, 2
      %p742 = scmp.ne.s32.totalorder %s737, %s739
      %p743 = scmp.eq.s32.totalorder %s94, 0
      %p744 = por %p742, %p743
      %p745 = scmp.ne.s32.totalorder %s737, %s739
      %p746 = scmp.eq.s32.totalorder %s99, 2
      %p747 = por %p745, %p746
      %p748 = scmp.ne.s32.totalorder %s739, %s740
      %p749 = scmp.eq.s32.totalorder %s99, 0
      %p750 = por %p748, %p749
      %p751 = scmp.ne.s32.totalorder %s739, %s740
      %p752 = scmp.eq.s32.totalorder %s100, 2
      %p753 = por %p751, %p752
      %p755 = scmp.ne.s32.totalorder %s740, %s754
      %p756 = scmp.eq.s32.totalorder %s100, 0
      %p757 = por %p755, %p756
      %s759 = sadd.s32 %s758, 1
      %p762 = scmp.eq.s32.totalorder %s94, 2
      %p763 = scmp.ne.s32.totalorder %s758, %s760
      %p764 = scmp.eq.s32.totalorder %s94, 0
      %p765 = por %p763, %p764
      %p766 = scmp.ne.s32.totalorder %s758, %s760
      %p767 = scmp.eq.s32.totalorder %s99, 2
      %p768 = por %p766, %p767
      %p769 = scmp.ne.s32.totalorder %s760, %s761
      %p770 = scmp.eq.s32.totalorder %s99, 0
      %p771 = por %p769, %p770
      %p772 = scmp.ne.s32.totalorder %s760, %s761
      %p773 = scmp.eq.s32.totalorder %s100, 2
      %p774 = por %p772, %p773
      %p776 = scmp.ne.s32.totalorder %s761, %s775
      %p777 = scmp.eq.s32.totalorder %s100, 0
      %p778 = por %p776, %p777
      %s779 = ssub.s32 %s94, %s101
      %p780 = scmp.eq.s32.totalorder %s779, 0
      %s782 = sadd.s32 %s781, 1
      %s783 = scalar_select %p780, %s781, %s782
      %p786 = pneg %p780
      %p787 = scmp.eq.s32.totalorder %s94, 2
      %p788 = por %p786, %p787
      %p789 = scmp.ne.s32.totalorder %s781, %s784
      %p790 = scmp.eq.s32.totalorder %s94, 0
      %p791 = por %p789, %p790
      %p792 = scmp.ne.s32.totalorder %s781, %s784
      %p793 = scmp.eq.s32.totalorder %s99, 2
      %p794 = por %p792, %p793
      %p795 = scmp.ne.s32.totalorder %s784, %s785
      %p796 = scmp.eq.s32.totalorder %s99, 0
      %p797 = por %p795, %p796
      %p798 = scmp.ne.s32.totalorder %s784, %s785
      %p799 = scmp.eq.s32.totalorder %s100, 2
      %p800 = por %p798, %p799
      %p802 = scmp.ne.s32.totalorder %s785, %s801
      %p803 = scmp.eq.s32.totalorder %s100, 0
      %p804 = por %p802, %p803
      %s805 = ssub.s32 %s94, %s101
      %p806 = scmp.eq.s32.totalorder %s805, 0
      %s808 = sadd.s32 %s807, 1
      %s809 = scalar_select %p806, %s807, %s808
      %p812 = pneg %p806
      %p813 = scmp.eq.s32.totalorder %s94, 2
      %p814 = por %p812, %p813
      %p815 = scmp.ne.s32.totalorder %s807, %s810
      %p816 = scmp.eq.s32.totalorder %s94, 0
      %p817 = por %p815, %p816
      %p818 = scmp.ne.s32.totalorder %s807, %s810
      %p819 = scmp.eq.s32.totalorder %s99, 2
      %p820 = por %p818, %p819
      %p821 = scmp.ne.s32.totalorder %s810, %s811
      %p822 = scmp.eq.s32.totalorder %s99, 0
      %p823 = por %p821, %p822
      %p824 = scmp.ne.s32.totalorder %s810, %s811
      %p825 = scmp.eq.s32.totalorder %s100, 2
      %p826 = por %p824, %p825
      %p828 = scmp.ne.s32.totalorder %s811, %s827
      %p829 = scmp.eq.s32.totalorder %s100, 0
      %p830 = por %p828, %p829
      %s831 = ssub.s32 %s94, %s101
      %p832 = scmp.eq.s32.totalorder %s831, 0
      %s834 = sadd.s32 %s833, 1
      %s835 = scalar_select %p832, %s833, %s834
      %p838 = pneg %p832
      %p839 = scmp.eq.s32.totalorder %s94, 2
      %p840 = por %p838, %p839
      %p841 = scmp.ne.s32.totalorder %s833, %s836
      %p842 = scmp.eq.s32.totalorder %s94, 0
      %p843 = por %p841, %p842
      %p844 = scmp.ne.s32.totalorder %s833, %s836
      %p845 = scmp.eq.s32.totalorder %s99, 2
      %p846 = por %p844, %p845
      %p847 = scmp.ne.s32.totalorder %s836, %s837
      %p848 = scmp.eq.s32.totalorder %s99, 0
      %p849 = por %p847, %p848
      %p850 = scmp.ne.s32.totalorder %s836, %s837
      %p851 = scmp.eq.s32.totalorder %s100, 2
      %p852 = por %p850, %p851
      %p854 = scmp.ne.s32.totalorder %s837, %s853
      %p855 = scmp.eq.s32.totalorder %s100, 0
      %p856 = por %p854, %p855
      %s857 = ssub.s32 %s94, %s101
      %p858 = scmp.eq.s32.totalorder %s857, 0
      %s860 = sadd.s32 %s859, 1
      %s861 = scalar_select %p858, %s859, %s860
      %p864 = pneg %p858
      %p865 = scmp.eq.s32.totalorder %s94, 2
      %p866 = por %p864, %p865
      %p867 = scmp.ne.s32.totalorder %s859, %s862
      %p868 = scmp.eq.s32.totalorder %s94, 0
      %p869 = por %p867, %p868
      %p870 = scmp.ne.s32.totalorder %s859, %s862
      %p871 = scmp.eq.s32.totalorder %s99, 2
      %p872 = por %p870, %p871
      %p873 = scmp.ne.s32.totalorder %s862, %s863
      %p874 = scmp.eq.s32.totalorder %s99, 0
      %p875 = por %p873, %p874
      %p876 = scmp.ne.s32.totalorder %s862, %s863
      %p877 = scmp.eq.s32.totalorder %s100, 2
      %p878 = por %p876, %p877
      %p880 = scmp.ne.s32.totalorder %s863, %s879
      %p881 = scmp.eq.s32.totalorder %s100, 0
      %p882 = por %p880, %p881
      %s883 = ssub.s32 %s94, %s101
      %p884 = scmp.eq.s32.totalorder %s883, 0
      %s886 = sadd.s32 %s885, 1
      %s887 = scalar_select %p884, %s885, %s886
      %p890 = pneg %p884
      %p891 = scmp.eq.s32.totalorder %s94, 2
      %p892 = por %p890, %p891
      %p893 = scmp.ne.s32.totalorder %s885, %s888
      %p894 = scmp.eq.s32.totalorder %s94, 0
      %p895 = por %p893, %p894
      %p896 = scmp.ne.s32.totalorder %s885, %s888
      %p897 = scmp.eq.s32.totalorder %s99, 2
      %p898 = por %p896, %p897
      %p899 = scmp.ne.s32.totalorder %s888, %s889
      %p900 = scmp.eq.s32.totalorder %s99, 0
      %p901 = por %p899, %p900
      %p902 = scmp.ne.s32.totalorder %s888, %s889
      %p903 = scmp.eq.s32.totalorder %s100, 2
      %p904 = por %p902, %p903
      %p906 = scmp.ne.s32.totalorder %s889, %s905
      %p907 = scmp.eq.s32.totalorder %s100, 0
      %p908 = por %p906, %p907
      %s909 = ssub.s32 %s94, %s101
      %p910 = scmp.eq.s32.totalorder %s909, 0
      %s912 = sadd.s32 %s911, 1
      %s913 = scalar_select %p910, %s911, %s912
      %p916 = pneg %p910
      %p917 = scmp.eq.s32.totalorder %s94, 2
      %p918 = por %p916, %p917
      %p919 = scmp.ne.s32.totalorder %s911, %s914
      %p920 = scmp.eq.s32.totalorder %s94, 0
      %p921 = por %p919, %p920
      %p922 = scmp.ne.s32.totalorder %s911, %s914
      %p923 = scmp.eq.s32.totalorder %s99, 2
      %p924 = por %p922, %p923
      %p925 = scmp.ne.s32.totalorder %s914, %s915
      %p926 = scmp.eq.s32.totalorder %s99, 0
      %p927 = por %p925, %p926
      %p928 = scmp.ne.s32.totalorder %s914, %s915
      %p929 = scmp.eq.s32.totalorder %s100, 2
      %p930 = por %p928, %p929
      %p932 = scmp.ne.s32.totalorder %s915, %s931
      %p933 = scmp.eq.s32.totalorder %s100, 0
      %p934 = por %p932, %p933
      %s935 = ssub.s32 %s94, %s101
      %p936 = scmp.eq.s32.totalorder %s935, 0
      %s938 = sadd.s32 %s937, 1
      %s939 = scalar_select %p936, %s937, %s938
      %p942 = pneg %p936
      %p943 = scmp.eq.s32.totalorder %s94, 2
      %p944 = por %p942, %p943
      %p945 = scmp.ne.s32.totalorder %s937, %s940
      %p946 = scmp.eq.s32.totalorder %s94, 0
      %p947 = por %p945, %p946
      %p948 = scmp.ne.s32.totalorder %s937, %s940
      %p949 = scmp.eq.s32.totalorder %s99, 2
      %p950 = por %p948, %p949
      %p951 = scmp.ne.s32.totalorder %s940, %s941
      %p952 = scmp.eq.s32.totalorder %s99, 0
      %p953 = por %p951, %p952
      %p954 = scmp.ne.s32.totalorder %s940, %s941
      %p955 = scmp.eq.s32.totalorder %s100, 2
      %p956 = por %p954, %p955
      %p958 = scmp.ne.s32.totalorder %s941, %s957
      %p959 = scmp.eq.s32.totalorder %s100, 0
      %p960 = por %p958, %p959
      %p961 = scmp.le.s32.totalorder 1, %s94
      %p962 = scmp.lt.s32.totalorder %s94, 4
      %p963 = pnand %p961, %p962
      %p964 = pneg %p963
      // Predicated region
      $region9: #{tpu_custom_call.1} parent=5 // pred_check
        _
      $region10: #{tpu_custom_call.1} parent=5 // pred_check_branch
        %966 = sbr.rel (%p963) target = $region12
      $region11: #{tpu_custom_call.1} parent=5 // pred_region
        %s967 = ssub.s32 %s94, 1
        // Predicated region
        $region13: #{tpu_custom_call.1} parent=11 // pred_check
          %p968 = pneg %p225
        $region14: #{tpu_custom_call.1} parent=11 // pred_check_branch
          %970 = sbr.rel (%p968) target = $region16
        $region15: #{tpu_custom_call.1} parent=11 // pred_region
          _
        $region16: #{tpu_custom_call.1} parent=11 // pred_fallthru
          _
        // Predicated region
        $region17: #{tpu_custom_call.1} parent=11 // pred_check
          %p971 = pneg %p246
        $region18: #{tpu_custom_call.1} parent=11 // pred_check_branch
          %973 = sbr.rel (%p971) target = $region20
        $region19: #{tpu_custom_call.1} parent=11 // pred_region
          _
        $region20: #{tpu_custom_call.1} parent=11 // pred_fallthru
          _
        // Predicated region
        $region21: #{tpu_custom_call.1} parent=11 // pred_check
          %p974 = pneg %p267
        $region22: #{tpu_custom_call.1} parent=11 // pred_check_branch
          %976 = sbr.rel (%p974) target = $region24
        $region23: #{tpu_custom_call.1} parent=11 // pred_region
          _
        $region24: #{tpu_custom_call.1} parent=11 // pred_fallthru
          _
        // Predicated region
        $region25: #{tpu_custom_call.1} parent=11 // pred_check
          %p977 = pneg %p288
        $region26: #{tpu_custom_call.1} parent=11 // pred_check_branch
          %979 = sbr.rel (%p977) target = $region28
        $region27: #{tpu_custom_call.1} parent=11 // pred_region
          _
        $region28: #{tpu_custom_call.1} parent=11 // pred_fallthru
          _
        // Predicated region
        $region29: #{tpu_custom_call.1} parent=11 // pred_check
          %p980 = pneg %p309
        $region30: #{tpu_custom_call.1} parent=11 // pred_check_branch
          %982 = sbr.rel (%p980) target = $region32
        $region31: #{tpu_custom_call.1} parent=11 // pred_region
          _
        $region32: #{tpu_custom_call.1} parent=11 // pred_fallthru
          _
        // Predicated region
        $region33: #{tpu_custom_call.1} parent=11 // pred_check
          %p983 = pneg %p330
        $region34: #{tpu_custom_call.1} parent=11 // pred_check_branch
          %985 = sbr.rel (%p983) target = $region36
        $region35: #{tpu_custom_call.1} parent=11 // pred_region
          _
        $region36: #{tpu_custom_call.1} parent=11 // pred_fallthru
          _
        // Predicated region
        $region37: #{tpu_custom_call.1} parent=11 // pred_check
          %p986 = pneg %p351
        $region38: #{tpu_custom_call.1} parent=11 // pred_check_branch
          %988 = sbr.rel (%p986) target = $region40
        $region39: #{tpu_custom_call.1} parent=11 // pred_region
          _
        $region40: #{tpu_custom_call.1} parent=11 // pred_fallthru
          _
        // Predicated region
        $region41: #{tpu_custom_call.1} parent=11 // pred_check
          %p989 = pneg %p372
        $region42: #{tpu_custom_call.1} parent=11 // pred_check_branch
          %991 = sbr.rel (%p989) target = $region44
        $region43: #{tpu_custom_call.1} parent=11 // pred_region
          _
        $region44: #{tpu_custom_call.1} parent=11 // pred_fallthru
          _
        // Predicated region
        $region45: #{tpu_custom_call.1} parent=11 // pred_check
          %p992 = pneg %p393
        $region46: #{tpu_custom_call.1} parent=11 // pred_check_branch
          %994 = sbr.rel (%p992) target = $region48
        $region47: #{tpu_custom_call.1} parent=11 // pred_region
          _
        $region48: #{tpu_custom_call.1} parent=11 // pred_fallthru
          _
        // Predicated region
        $region49: #{tpu_custom_call.1} parent=11 // pred_check
          %p995 = pneg %p414
        $region50: #{tpu_custom_call.1} parent=11 // pred_check_branch
          %997 = sbr.rel (%p995) target = $region52
        $region51: #{tpu_custom_call.1} parent=11 // pred_region
          _
        $region52: #{tpu_custom_call.1} parent=11 // pred_fallthru
          _
        // Predicated region
        $region53: #{tpu_custom_call.1} parent=11 // pred_check
          %p998 = pneg %p435
        $region54: #{tpu_custom_call.1} parent=11 // pred_check_branch
          %1000 = sbr.rel (%p998) target = $region56
        $region55: #{tpu_custom_call.1} parent=11 // pred_region
          _
        $region56: #{tpu_custom_call.1} parent=11 // pred_fallthru
          _
        // Predicated region
        $region57: #{tpu_custom_call.1} parent=11 // pred_check
          %p1001 = pneg %p456
        $region58: #{tpu_custom_call.1} parent=11 // pred_check_branch
          %1003 = sbr.rel (%p1001) target = $region60
        $region59: #{tpu_custom_call.1} parent=11 // pred_region
          _
        $region60: #{tpu_custom_call.1} parent=11 // pred_fallthru
          _
        // Predicated region
        $region61: #{tpu_custom_call.1} parent=11 // pred_check
          %p1004 = pneg %p477
        $region62: #{tpu_custom_call.1} parent=11 // pred_check_branch
          %1006 = sbr.rel (%p1004) target = $region64
        $region63: #{tpu_custom_call.1} parent=11 // pred_region
          _
        $region64: #{tpu_custom_call.1} parent=11 // pred_fallthru
          _
        // Predicated region
        $region65: #{tpu_custom_call.1} parent=11 // pred_check
          %p1007 = pneg %p498
        $region66: #{tpu_custom_call.1} parent=11 // pred_check_branch
          %1009 = sbr.rel (%p1007) target = $region68
        $region67: #{tpu_custom_call.1} parent=11 // pred_region
          _
        $region68: #{tpu_custom_call.1} parent=11 // pred_fallthru
          _
        // Predicated region
        $region69: #{tpu_custom_call.1} parent=11 // pred_check
          %p1010 = pneg %p519
        $region70: #{tpu_custom_call.1} parent=11 // pred_check_branch
          %1012 = sbr.rel (%p1010) target = $region72
        $region71: #{tpu_custom_call.1} parent=11 // pred_region
          _
        $region72: #{tpu_custom_call.1} parent=11 // pred_fallthru
          _
        // Predicated region
        $region73: #{tpu_custom_call.1} parent=11 // pred_check
          %p1013 = pneg %p540
        $region74: #{tpu_custom_call.1} parent=11 // pred_check_branch
          %1015 = sbr.rel (%p1013) target = $region76
        $region75: #{tpu_custom_call.1} parent=11 // pred_region
          _
        $region76: #{tpu_custom_call.1} parent=11 // pred_fallthru
          _
        // Predicated region
        $region77: #{tpu_custom_call.1} parent=11 // pred_check
          %p1016 = pneg %p561
        $region78: #{tpu_custom_call.1} parent=11 // pred_check_branch
          %1018 = sbr.rel (%p1016) target = $region80
        $region79: #{tpu_custom_call.1} parent=11 // pred_region
          _
        $region80: #{tpu_custom_call.1} parent=11 // pred_fallthru
          _
        // Predicated region
        $region81: #{tpu_custom_call.1} parent=11 // pred_check
          %p1019 = pneg %p582
        $region82: #{tpu_custom_call.1} parent=11 // pred_check_branch
          %1021 = sbr.rel (%p1019) target = $region84
        $region83: #{tpu_custom_call.1} parent=11 // pred_region
          _
        $region84: #{tpu_custom_call.1} parent=11 // pred_fallthru
          _
        // Predicated region
        $region85: #{tpu_custom_call.1} parent=11 // pred_check
          %p1022 = pneg %p603
        $region86: #{tpu_custom_call.1} parent=11 // pred_check_branch
          %1024 = sbr.rel (%p1022) target = $region88
        $region87: #{tpu_custom_call.1} parent=11 // pred_region
          _
        $region88: #{tpu_custom_call.1} parent=11 // pred_fallthru
          _
        // Predicated region
        $region89: #{tpu_custom_call.1} parent=11 // pred_check
          %p1025 = pneg %p624
        $region90: #{tpu_custom_call.1} parent=11 // pred_check_branch
          %1027 = sbr.rel (%p1025) target = $region92
        $region91: #{tpu_custom_call.1} parent=11 // pred_region
          _
        $region92: #{tpu_custom_call.1} parent=11 // pred_fallthru
          _
        // Predicated region
        $region93: #{tpu_custom_call.1} parent=11 // pred_check
          %p1028 = pneg %p645
        $region94: #{tpu_custom_call.1} parent=11 // pred_check_branch
          %1030 = sbr.rel (%p1028) target = $region96
        $region95: #{tpu_custom_call.1} parent=11 // pred_region
          _
        $region96: #{tpu_custom_call.1} parent=11 // pred_fallthru
          _
        // Predicated region
        $region97: #{tpu_custom_call.1} parent=11 // pred_check
          %p1031 = pneg %p666
        $region98: #{tpu_custom_call.1} parent=11 // pred_check_branch
          %1033 = sbr.rel (%p1031) target = $region100
        $region99: #{tpu_custom_call.1} parent=11 // pred_region
          _
        $region100: #{tpu_custom_call.1} parent=11 // pred_fallthru
          _
        // Predicated region
        $region101: #{tpu_custom_call.1} parent=11 // pred_check
          %p1034 = pneg %p687
        $region102: #{tpu_custom_call.1} parent=11 // pred_check_branch
          %1036 = sbr.rel (%p1034) target = $region104
        $region103: #{tpu_custom_call.1} parent=11 // pred_region
          _
        $region104: #{tpu_custom_call.1} parent=11 // pred_fallthru
          _
        // Predicated region
        $region105: #{tpu_custom_call.1} parent=11 // pred_check
          %p1037 = pneg %p708
        $region106: #{tpu_custom_call.1} parent=11 // pred_check_branch
          %1039 = sbr.rel (%p1037) target = $region108
        $region107: #{tpu_custom_call.1} parent=11 // pred_region
          _
        $region108: #{tpu_custom_call.1} parent=11 // pred_fallthru
          _
        // Predicated region
        $region109: #{tpu_custom_call.1} parent=11 // pred_check
          %p1040 = pneg %p729
        $region110: #{tpu_custom_call.1} parent=11 // pred_check_branch
          %1042 = sbr.rel (%p1040) target = $region112
        $region111: #{tpu_custom_call.1} parent=11 // pred_region
          _
        $region112: #{tpu_custom_call.1} parent=11 // pred_fallthru
          _
        // Predicated region
        $region113: #{tpu_custom_call.1} parent=11 // pred_check
          %p1043 = pneg %p750
        $region114: #{tpu_custom_call.1} parent=11 // pred_check_branch
          %1045 = sbr.rel (%p1043) target = $region116
        $region115: #{tpu_custom_call.1} parent=11 // pred_region
          _
        $region116: #{tpu_custom_call.1} parent=11 // pred_fallthru
          _
        // Predicated region
        $region117: #{tpu_custom_call.1} parent=11 // pred_check
          %p1046 = pneg %p771
        $region118: #{tpu_custom_call.1} parent=11 // pred_check_branch
          %1048 = sbr.rel (%p1046) target = $region120
        $region119: #{tpu_custom_call.1} parent=11 // pred_region
          _
        $region120: #{tpu_custom_call.1} parent=11 // pred_fallthru
          _
      $region12: #{tpu_custom_call.1} parent=5 // pred_fallthru
        _
      %p1049 = scmp.lt.s32.totalorder %s94, 3
      // Predicated region
      $region121: #{tpu_custom_call.1} parent=5 // pred_check
        %p1050 = pneg %p1049
      $region122: #{tpu_custom_call.1} parent=5 // pred_check_branch
        %1052 = sbr.rel (%p1050) target = $region124
      $region123: #{tpu_custom_call.1} parent=5 // pred_region
        // Predicated region
        $region125: #{tpu_custom_call.1} parent=123 // pred_check
          %p1053 = pneg %p114
        $region126: #{tpu_custom_call.1} parent=123 // pred_check_branch
          %1055 = sbr.rel (%p1053) target = $region128
        $region127: #{tpu_custom_call.1} parent=123 // pred_region
          %p1056 = scmp.lt.s32.totalorder %s94, 2
          %s1057 = scalar_select %p1056, %s94, 2
          %s1058 = smul.addr %s1057, 8
          %s1059 = scalar_lea.vmem %s1, %s1058
        $region128: #{tpu_custom_call.1} parent=123 // pred_fallthru
          _
        // Predicated region
        $region129: #{tpu_custom_call.1} parent=123 // pred_check
          %p1060 = pneg %p140
        $region130: #{tpu_custom_call.1} parent=123 // pred_check_branch
          %1062 = sbr.rel (%p1060) target = $region132
        $region131: #{tpu_custom_call.1} parent=123 // pred_region
          %p1063 = scmp.lt.s32.totalorder %s94, 2
          %s1064 = scalar_select %p1063, %s94, 2
          %s1065 = smul.addr %s1064, 8
          %s1066 = scalar_lea.vmem %s3, %s1065
        $region132: #{tpu_custom_call.1} parent=123 // pred_fallthru
          _
        // Predicated region
        $region133: #{tpu_custom_call.1} parent=123 // pred_check
          %p1067 = pneg %p172
        $region134: #{tpu_custom_call.1} parent=123 // pred_check_branch
          %1069 = sbr.rel (%p1067) target = $region136
        $region135: #{tpu_custom_call.1} parent=123 // pred_region
          %s1070 = sadd.s32 %s94, 1
          %p1071 = scmp.lt.s32.totalorder %s1070, 2
          %s1072 = scalar_select %p1071, %s1070, 2
          %p1073 = scmp.lt.s32.totalorder %s1072, 2
          %s1074 = scalar_select %p1073, %s1072, 2
          %s1075 = smul.addr %s1074, 8
          %s1076 = scalar_lea.vmem %s5, %s1075
          %s1077 = sadd.s32 %s94, 1
          %p1078 = scmp.lt.s32.totalorder %s1077, 2
          %s1079 = scalar_select %p1078, %s1077, 2
        $region136: #{tpu_custom_call.1} parent=123 // pred_fallthru
          _
        // Predicated region
        $region137: #{tpu_custom_call.1} parent=123 // pred_check
          %p1080 = pneg %p198
        $region138: #{tpu_custom_call.1} parent=123 // pred_check_branch
          %1082 = sbr.rel (%p1080) target = $region140
        $region139: #{tpu_custom_call.1} parent=123 // pred_region
          %p1083 = scmp.lt.s32.totalorder %s94, 2
          %s1084 = scalar_select %p1083, %s94, 2
          %s1085 = smul.addr %s1084, 8
          %s1086 = scalar_lea.vmem %s7, %s1085
        $region140: #{tpu_custom_call.1} parent=123 // pred_fallthru
          _
      $region124: #{tpu_custom_call.1} parent=5 // pred_fallthru
        _
      %p1087 = scmp.le.s32.totalorder 1, %s94
      %p1088 = scmp.lt.s32.totalorder %s94, 4
      %p1089 = pnand %p1087, %p1088
      %p1090 = pneg %p1089
      // Predicated region
      $region141: #{tpu_custom_call.1} parent=5 // pred_check
        _
      $region142: #{tpu_custom_call.1} parent=5 // pred_check_branch
        %1092 = sbr.rel (%p1089) target = $region144
      $region143: #{tpu_custom_call.1} parent=5 // pred_region
        %s1093 = ssub.s32 %s94, 1
        %p1094 = scmp.lt.s32.totalorder %s99, 2
        %s1095 = scalar_select %p1094, %s99, 2
        %s1096 = smul.addr %s1095, 8
        %s1097 = scalar_lea.vmem %s1, %s1096
        %p1098 = pneg %p120
        %p1099 = pneg %p117
        %p1100 = scmp.lt.s32.totalorder %s99, 2
        %s1101 = scalar_select %p1100, %s99, 2
        %s1102 = smul.addr %s1101, 8
        %s1103 = scalar_lea.vmem %s3, %s1102
        %p1104 = pneg %p146
        %p1105 = pneg %p143
        %s1106 = sadd.s32 %s99, 1
        %p1107 = scmp.lt.s32.totalorder %s1106, 2
        %s1108 = scalar_select %p1107, %s1106, 2
        %p1109 = scmp.lt.s32.totalorder %s1108, 2
        %s1110 = scalar_select %p1109, %s1108, 2
        %s1111 = smul.addr %s1110, 8
        %s1112 = scalar_lea.vmem %s5, %s1111
        %p1113 = pneg %p178
        %p1114 = pneg %p175
        %p1115 = scmp.lt.s32.totalorder %s99, 2
        %s1116 = scalar_select %p1115, %s99, 2
        %s1117 = smul.addr %s1116, 8
        %s1118 = scalar_lea.vmem %s7, %s1117
        %p1119 = pneg %p204
        %p1120 = pneg %p201
        %p1121 = pneg %p225
        %p1122 = pneg %p222
        %p1123 = pneg %p246
        %p1124 = pneg %p243
        %p1125 = pneg %p267
        %p1126 = pneg %p264
        %p1127 = pneg %p288
        %p1128 = pneg %p285
        %p1129 = pneg %p309
        %p1130 = pneg %p306
        %p1131 = pneg %p330
        %p1132 = pneg %p327
        %p1133 = pneg %p351
        %p1134 = pneg %p348
        %p1135 = pneg %p372
        %p1136 = pneg %p369
        %p1137 = pneg %p393
        %p1138 = pneg %p390
        %p1139 = pneg %p414
        %p1140 = pneg %p411
        %p1141 = pneg %p435
        %p1142 = pneg %p432
        %p1143 = pneg %p456
        %p1144 = pneg %p453
        %p1145 = pneg %p477
        %p1146 = pneg %p474
        %p1147 = pneg %p498
        %p1148 = pneg %p495
        %p1149 = pneg %p519
        %p1150 = pneg %p516
        %p1151 = pneg %p540
        %p1152 = pneg %p537
        %p1153 = pneg %p561
        %p1154 = pneg %p558
        %p1155 = pneg %p582
        %p1156 = pneg %p579
        %p1157 = pneg %p603
        %p1158 = pneg %p600
        %p1159 = pneg %p624
        %p1160 = pneg %p621
        %p1161 = pneg %p645
        %p1162 = pneg %p642
        %p1163 = pneg %p666
        %p1164 = pneg %p663
        %p1165 = pneg %p687
        %p1166 = pneg %p684
        %p1167 = pneg %p708
        %p1168 = pneg %p705
        %p1169 = pneg %p729
        %p1170 = pneg %p726
        %p1171 = pneg %p750
        %p1172 = pneg %p747
        %p1173 = pneg %p771
        %p1174 = pneg %p768
        %p1175 = pneg %p797
        %p1176 = pneg %p794
        %s1177 = sand.u32 %s784, 1
        %s1178 = scalar_lea.sflag [#allocation18], %s1177
        %s1179 = sand.u32 %s784, 1
        %s1180 = smul.addr %s1179, 8
        %s1181 = scalar_lea.vmem [#allocation17], %s1180
        %p1182 = pneg %p823
        %p1183 = pneg %p820
        %s1184 = sand.u32 %s99, 1
        %s1185 = scalar_lea.sflag [#allocation20], %s1184
        %s1186 = sand.u32 %s810, 1
        %s1187 = smul.addr %s1186, 8
        %s1188 = scalar_lea.vmem [#allocation19], %s1187
        %p1189 = pneg %p849
        %p1190 = pneg %p846
        %s1191 = sand.u32 %s99, 1
        %s1192 = scalar_lea.sflag [#allocation20], %s1191
        %s1193 = sand.u32 %s836, 1
        %s1194 = smul.addr %s1193, 2
        %s1195 = scalar_lea.vmem [#allocation21], %s1194
        %p1196 = pneg %p875
        %p1197 = pneg %p872
        %s1198 = sand.u32 %s99, 1
        %s1199 = scalar_lea.sflag [#allocation23], %s1198
        %s1200 = sand.u32 %s862, 1
        %s1201 = smul.addr %s1200, 2
        %s1202 = scalar_lea.vmem [#allocation22], %s1201
        %p1203 = pneg %p901
        %p1204 = pneg %p898
        %s1205 = sand.u32 %s99, 1
        %s1206 = scalar_lea.sflag [#allocation23], %s1205
        %s1207 = sand.u32 %s888, 1
        %s1208 = smul.addr %s1207, 2
        %s1209 = scalar_lea.vmem [#allocation24], %s1208
        %p1210 = pneg %p927
        %p1211 = pneg %p924
        %s1212 = sand.u32 %s99, 1
        %s1213 = scalar_lea.sflag [#allocation26], %s1212
        %s1214 = sand.u32 %s914, 1
        %s1215 = smul.addr %s1214, 2
        %s1216 = scalar_lea.vmem [#allocation25], %s1215
        %p1217 = pneg %p953
        %p1218 = pneg %p950
        %s1219 = sand.u32 %s99, 1
        %s1220 = scalar_lea.sflag [#allocation26], %s1219
        %s1221 = sand.u32 %s940, 1
        %s1222 = smul.addr %s1221, 2
        %s1223 = scalar_lea.vmem [#allocation27], %s1222
        %p1224 = scmp.lt.s32.totalorder %s99, 2
        %s1225 = scalar_select %p1224, %s99, 2
        %s1226 = smul.addr %s1225, 8
        %s1227 = scalar_lea.vmem %s1, %s1226
        %p1228 = scmp.lt.s32.totalorder %s99, 2
        %s1229 = scalar_select %p1228, %s99, 2
        %s1230 = smul.addr %s1229, 8
        %s1231 = scalar_lea.vmem %s3, %s1230
        %s1232 = sadd.s32 %s99, 1
        %p1233 = scmp.lt.s32.totalorder %s1232, 2
        %s1234 = scalar_select %p1233, %s1232, 2
        %p1235 = scmp.lt.s32.totalorder %s1234, 2
        %s1236 = scalar_select %p1235, %s1234, 2
        %s1237 = smul.addr %s1236, 8
        %s1238 = scalar_lea.vmem %s5, %s1237
        %s1239 = sadd.s32 %s99, 1
        %p1240 = scmp.lt.s32.totalorder %s1239, 2
        %s1241 = scalar_select %p1240, %s1239, 2
        %p1242 = scmp.lt.s32.totalorder %s99, 2
        %s1243 = scalar_select %p1242, %s99, 2
        %s1244 = smul.addr %s1243, 8
        %s1245 = scalar_lea.vmem %s7, %s1244
        %p1247 = scmp.eq.s32.totalorder %s99, 0
        // Predicated region
        $region145: #{tpu_custom_call.1} parent=143 // pred_check
          %p1248 = pneg %p1247
        $region146: #{tpu_custom_call.1} parent=143 // pred_check_branch
          %1250 = sbr.rel (%p1248) target = $region148
        $region147: #{tpu_custom_call.1} parent=143 // pred_region
          %vm1251 = vcmask 58368
          %1252 = vst.msk [vmem:[#allocation2] sm:$0x3] %vm1251, 0.0
          %1253 = vst.msk [vmem:[#allocation3] sm:$0x3] %vm1251, 0.0
          %1254 = vst.msk [vmem:[#allocation4] sm:$0x3] %vm1251, 10.0
          %1255 = vst.msk [vmem:[#allocation5] sm:$0x3] %vm1251, 10.0
          %1256 = vst.msk [vmem:[#allocation6] sm:$0x3] %vm1251, 1.0
          %1257 = vst.msk [vmem:[#allocation7] sm:$0x3] %vm1251, 0.0
          %1258 = vst.msk [vmem:[#allocation8] sm:$0x3] %vm1251, 0.0
          %1259 = vst.msk [vmem:[#allocation9] sm:$0x3] %vm1251, 10.0
          %1260 = vst.msk [vmem:[#allocation10] sm:$0x3] %vm1251, 10.0
          %1261 = vst.msk [vmem:[#allocation11] sm:$0x3] %vm1251, 1.0
        $region148: #{tpu_custom_call.1} parent=143 // pred_fallthru
          _
        %v1262 = vld [vmem:[%s1227] sm:$0xff]
        %v1263 = vpack.c.bf16 %v1262, %v1262
        %v1264 = vld [vmem:[%s1245] sm:$0xff]
        %v1265 = vld [vmem:[%s9] sm:$0x7]
        %v1266 = vld [vmem:[%s11] sm:$0xff]
        %vm1267 = vcmask 48128
        %v1269 = vsel %vm1267, %v1263, 0
        %vm1271 = vcmask 1042432
        %v1273 = vsel %vm1271, %v1265, 0
        %1275 = vmatprep.subr.bf16.mxu0 0
        %1276 = vmatpush1.bf16.msra.mxu0 %v1273
        %1277 = vmatprep.subr.bf16.mxu0 0
        %1278 = vmatpush1.bf16.msra.mxu0 0
        %1279 = vmatprep.subr.bf16.mxu0 0
        %1280 = vmatpush1.bf16.msra.mxu0 0
        %1281 = vmatprep.subr.bf16.mxu0 0
        %1282 = vmatpush1.bf16.msra.mxu0 0
        %1283 = vmatprep.subr.bf16.mxu0 0
        %1284 = vmatpush1.bf16.msra.mxu0 0
        %1285 = vmatprep.subr.bf16.mxu0 0
        %1286 = vmatpush1.bf16.msra.mxu0 0
        %1287 = vmatprep.subr.bf16.mxu0 0
        %1288 = vmatpush1.bf16.msra.mxu0 0
        %1289 = vmatprep.subr.bf16.mxu0 0
        %1290 = vmatpush1.bf16.msra.mxu0 0
        %1291 = vmatprep.subr.bf16.mxu0 0
        %1292 = vmatpush1.bf16.msra.mxu0 0
        %1293 = vmatprep.subr.bf16.mxu0 0
        %1294 = vmatpush1.bf16.msra.mxu0 0
        %1295 = vmatprep.subr.bf16.mxu0 0
        %1296 = vmatpush1.bf16.msra.mxu0 0
        %1297 = vmatprep.subr.bf16.mxu0 0
        %1298 = vmatpush1.bf16.msra.mxu0 0
        %1299 = vmatprep.subr.bf16.mxu0 0
        %1300 = vmatpush1.bf16.msra.mxu0 0
        %1301 = vmatprep.subr.bf16.mxu0 0
        %1302 = vmatpush1.bf16.msra.mxu0 0
        %1303 = vmatprep.subr.bf16.mxu0 0
        %1304 = vmatpush1.bf16.msra.mxu0 0
        %1305 = vmatprep.subr.bf16.mxu0 0
        %1306 = vmatpush1.bf16.msra.mxu0 0
        %1307 = vmatprep.mubr.bf16.mxu0 0
        %1308 = vmatmul.mubr.bf16.gmra.mrb[0].mxu0 %v1269
        %v1309 = vpop.f32.mrb[0].mxu0
        %v1310 = vadd.f32 %v1266, %v1309
        %v1311 = vpop.f32.mrb[0].mxu0
        %v1312 = vpop.f32.mrb[0].mxu0
        %v1313 = vpop.f32.mrb[0].mxu0
        %1314 = vdwg.mxu0
        %v1315 = vmax.f32 %v1310, 0.0
        %v1316 = vpack.c.bf16 %v1315, %v1315
        %v1317 = vld [vmem:[%s13] sm:$0xf]
        %v1318 = vld [vmem:[%s13 + $0x4] sm:$0xf]
        %v1319 = vld [vmem:[%s13 + $0x8] sm:$0xf]
        %v1320 = vld [vmem:[%s13 + $0xc] sm:$0xf]
        %v1321 = vld [vmem:[%s15] sm:$0x1]
        %v1323 = vlaneseq
        %v1324 = vshrl.u32 %v1323, 7
        %v1325 = vsub.s32 0, %v1324
        %v1326 = vrot.slane %v1321, %v1325
        %v1332 = vunpack.c.l.b16 %v1317
        %v1333 = vunpack.c.l.b16 %v1318
        %v1334 = vunpack.c.l.b16 %v1319
        %v1335 = vunpack.c.l.b16 %v1320
        %v1336 = vpack.c.b16 %v1333, %v1332
        %v1337 = vpack.c.b16 %v1335, %v1334
        %vm1340 = vcmask 261120
        %v1342 = vsel %vm1340, %v1316, 0
        %1344 = vmatprep.subr.bf16.mxu0 0
        %1345 = vmatpush1.bf16.msra.mxu0 %v1336
        %1346 = vmatprep.subr.bf16.mxu0 0
        %1347 = vmatpush1.bf16.msra.mxu0 %v1337
        %1348 = vmatprep.subr.bf16.mxu0 0
        %1349 = vmatpush1.bf16.msra.mxu0 0
        %1350 = vmatprep.subr.bf16.mxu0 0
        %1351 = vmatpush1.bf16.msra.mxu0 0
        %1352 = vmatprep.subr.bf16.mxu0 0
        %1353 = vmatpush1.bf16.msra.mxu0 0
        %1354 = vmatprep.subr.bf16.mxu0 0
        %1355 = vmatpush1.bf16.msra.mxu0 0
        %1356 = vmatprep.subr.bf16.mxu0 0
        %1357 = vmatpush1.bf16.msra.mxu0 0
        %1358 = vmatprep.subr.bf16.mxu0 0
        %1359 = vmatpush1.bf16.msra.mxu0 0
        %1360 = vmatprep.subr.bf16.mxu0 0
        %1361 = vmatpush1.bf16.msra.mxu0 0
        %1362 = vmatprep.subr.bf16.mxu0 0
        %1363 = vmatpush1.bf16.msra.mxu0 0
        %1364 = vmatprep.subr.bf16.mxu0 0
        %1365 = vmatpush1.bf16.msra.mxu0 0
        %1366 = vmatprep.subr.bf16.mxu0 0
        %1367 = vmatpush1.bf16.msra.mxu0 0
        %1368 = vmatprep.subr.bf16.mxu0 0
        %1369 = vmatpush1.bf16.msra.mxu0 0
        %1370 = vmatprep.subr.bf16.mxu0 0
        %1371 = vmatpush1.bf16.msra.mxu0 0
        %1372 = vmatprep.subr.bf16.mxu0 0
        %1373 = vmatpush1.bf16.msra.mxu0 0
        %1374 = vmatprep.subr.bf16.mxu0 0
        %1375 = vmatpush1.bf16.msra.mxu0 0
        %1376 = vmatprep.mubr.bf16.mxu0 0
        %1377 = vmatmul.mubr.bf16.gmra.mrb[0].mxu0 %v1342
        %v1378 = vpop.f32.mrb[0].mxu0
        %v1379 = vadd.f32 %v1326, %v1378
        %v1380 = vpop.f32.mrb[0].mxu0
        %v1381 = vpop.f32.mrb[0].mxu0
        %v1382 = vpop.f32.mrb[0].mxu0
        %1383 = vdwg.mxu0
        %vm1384 = vcmp.gt.f32.partialorder %v1379, 0.0
        %v1385 = vadd.f32 %v1379, 1.0
        %v1386 = vmin.f32 %v1379, 0.0
        %v1387 = vmul.f32 %v1386, 1.442695
        %v1388 = vpow.pop %v1387
        %v1389 = vsel %vm1384, %v1385, %v1388
        %v1390 = vadd.f32 %v1389, 1e-06
        %vm1391 = vcmp.gt.f32.partialorder %v1264, 0.5
        %v1392 = vrcp.pop %v1390
        %v1393 = vmul.f32 1.0, %v1392
        %v1394 = vsel %vm1391, 1, 0
        %1395 = vset.pattern.permute.xlu0 0
        %1396 = vperm.xlu0 %1395, %v1394
        %v1397 = vpop.permute.xlu0 %1396
        %vm1398 = vcmp.eq.s32.totalorder %v1397, 1
        %v1399 = vsel %vm1398, %v1393, 0.0
        %1401 = vrot.lane.b32.xlu0 %v1379, 8
        %v1402 = vpop.permute.xlu0 %1401
        %v1404 = vmul.f32 %v1399, %v1402
        %v1406 = vrot.slane %v1399, 2
        %v1408 = vadd.f32 %v1399, %v1406
        %v1410 = vrot.slane %v1404, 2
        %v1412 = vadd.f32 %v1404, %v1410
        %v1413 = vrot.slane %v1399, 4
        %v1415 = vadd.f32 %v1408, %v1413
        %v1416 = vrot.slane %v1404, 4
        %v1418 = vadd.f32 %v1412, %v1416
        %v1419 = vrot.slane %v1399, 6
        %v1421 = vadd.f32 %v1415, %v1419
        %v1422 = vrot.slane %v1404, 6
        %v1424 = vadd.f32 %v1418, %v1422
        %v1425 = vld [vmem:[#allocation2] sm:$0x3]
        %v1426 = vld [vmem:[#allocation3] sm:$0x3]
        %v1427 = vld [vmem:[#allocation4] sm:$0x3]
        %v1428 = vld [vmem:[#allocation5] sm:$0x3]
        %v1429 = vld [vmem:[#allocation6] sm:$0x3]
        %1431 = vrot.lane.b32.xlu0 %v1421, 120
        %v1432 = vpop.permute.xlu0 %1431
        %v1434 = vmul.f32 %v1427, %v1432
        %v1435 = vadd.f32 %v1434, 1.0
        %v1436 = vrcp.pop %v1435
        %v1437 = vmul.f32 1.0, %v1436
        %1439 = vrot.lane.b32.xlu0 %v1425, 8
        %v1440 = vpop.permute.xlu0 %1439
        %v1442 = vmul.f32 %v1421, %v1440
        %v1443 = vsub.f32 %v1424, %v1442
        %1445 = vrot.lane.b32.xlu0 %v1437, 8
        %v1446 = vpop.permute.xlu0 %1445
        %v1448 = vmul.f32 %v1443, %v1446
        %1450 = vrot.lane.b32.xlu0 %v1448, 120
        %v1451 = vpop.permute.xlu0 %1450
        %v1453 = vmul.f32 %v1427, %v1451
        %v1454 = vadd.f32 %v1425, %v1453
        %v1455 = vmul.f32 %v1429, %v1451
        %v1456 = vadd.f32 %v1426, %v1455
        %v1457 = vmul.f32 %v1427, %v1437
        %v1458 = vmul.f32 %v1429, %v1437
        %v1459 = vmul.f32 %v1429, %v1429
        %v1460 = vmul.f32 %v1459, %v1432
        %v1461 = vmul.f32 %v1460, %v1437
        %v1462 = vsub.f32 %v1428, %v1461
        %1464 = vrot.lane.b32.xlu0 %v1456, 8
        %v1465 = vpop.permute.xlu0 %1464
        %vm1467 = vcmask 64512
        %v1468 = vsel %vm1467, %v1454, %v1465
        %vm1469 = vcmask 123904
        %1470 = vst.msk [vmem:[%s1195] sm:$0x3] %vm1469, %v1468
        %1472 = vrot.lane.b32.xlu0 %v1462, 8
        %v1473 = vpop.permute.xlu0 %1472
        %1476 = vrot.lane.b32.xlu0 %v1458, 16
        %v1477 = vpop.permute.xlu0 %1476
        %v1479 = vsel %vm1467, %v1457, %v1473
        %vm1480 = vcmask 130048
        %v1481 = vsel %vm1480, %v1479, %v1477
        %vm1482 = vcmask 189440
        %1483 = vst.msk [vmem:[%s1202] sm:$0x3] %vm1482, %v1481
        %v1484 = vld [vmem:[%s1238] sm:$0xff]
        %v1485 = vpack.c.bf16 %v1484, %v1484
        %v1486 = vld [vmem:[%s17] sm:$0x3]
        %v1487 = vld [vmem:[%s19] sm:$0xff]
        %vm1488 = vcmask 23552
        %v1490 = vsel %vm1488, %v1485, 0
        %vm1492 = vcmask 1040384
        %vm1493 = vcmask 1041408
        %v1494 = vsel %vm1492, 4294967295, 65535
        %v1495 = vsel %vm1493, %v1494, 0
        %v1497 = vand.u32 %v1486, %v1495
        %1499 = vmatprep.subr.bf16.mxu0 0
        %1500 = vmatpush1.bf16.msra.mxu0 %v1497
        %1501 = vmatprep.subr.bf16.mxu0 0
        %1502 = vmatpush1.bf16.msra.mxu0 0
        %1503 = vmatprep.subr.bf16.mxu0 0
        %1504 = vmatpush1.bf16.msra.mxu0 0
        %1505 = vmatprep.subr.bf16.mxu0 0
        %1506 = vmatpush1.bf16.msra.mxu0 0
        %1507 = vmatprep.subr.bf16.mxu0 0
        %1508 = vmatpush1.bf16.msra.mxu0 0
        %1509 = vmatprep.subr.bf16.mxu0 0
        %1510 = vmatpush1.bf16.msra.mxu0 0
        %1511 = vmatprep.subr.bf16.mxu0 0
        %1512 = vmatpush1.bf16.msra.mxu0 0
        %1513 = vmatprep.subr.bf16.mxu0 0
        %1514 = vmatpush1.bf16.msra.mxu0 0
        %1515 = vmatprep.subr.bf16.mxu0 0
        %1516 = vmatpush1.bf16.msra.mxu0 0
        %1517 = vmatprep.subr.bf16.mxu0 0
        %1518 = vmatpush1.bf16.msra.mxu0 0
        %1519 = vmatprep.subr.bf16.mxu0 0
        %1520 = vmatpush1.bf16.msra.mxu0 0
        %1521 = vmatprep.subr.bf16.mxu0 0
        %1522 = vmatpush1.bf16.msra.mxu0 0
        %1523 = vmatprep.subr.bf16.mxu0 0
        %1524 = vmatpush1.bf16.msra.mxu0 0
        %1525 = vmatprep.subr.bf16.mxu0 0
        %1526 = vmatpush1.bf16.msra.mxu0 0
        %1527 = vmatprep.subr.bf16.mxu0 0
        %1528 = vmatpush1.bf16.msra.mxu0 0
        %1529 = vmatprep.subr.bf16.mxu0 0
        %1530 = vmatpush1.bf16.msra.mxu0 0
        %1531 = vmatprep.mubr.bf16.mxu0 0
        %1532 = vmatmul.mubr.bf16.gmra.mrb[0].mxu0 %v1490
        %v1533 = vpop.f32.mrb[0].mxu0
        %v1534 = vadd.f32 %v1487, %v1533
        %v1535 = vpop.f32.mrb[0].mxu0
        %v1536 = vpop.f32.mrb[0].mxu0
        %v1537 = vpop.f32.mrb[0].mxu0
        %1538 = vdwg.mxu0
        %v1539 = vmax.f32 %v1534, 0.0
        %v1540 = vpack.c.bf16 %v1539, %v1539
        %v1541 = vld [vmem:[%s21] sm:$0xf]
        %v1542 = vld [vmem:[%s21 + $0x4] sm:$0xf]
        %v1543 = vld [vmem:[%s21 + $0x8] sm:$0xf]
        %v1544 = vld [vmem:[%s21 + $0xc] sm:$0xf]
        %v1545 = vld [vmem:[%s23] sm:$0x1]
        %v1547 = vlaneseq
        %v1548 = vshrl.u32 %v1547, 7
        %v1549 = vsub.s32 0, %v1548
        %v1550 = vrot.slane %v1545, %v1549
        %v1556 = vunpack.c.l.b16 %v1541
        %v1557 = vunpack.c.l.b16 %v1542
        %v1558 = vunpack.c.l.b16 %v1543
        %v1559 = vunpack.c.l.b16 %v1544
        %v1560 = vpack.c.b16 %v1557, %v1556
        %v1561 = vpack.c.b16 %v1559, %v1558
        %v1565 = vsel %vm1340, %v1540, 0
        %1567 = vmatprep.subr.bf16.mxu0 0
        %1568 = vmatpush1.bf16.msra.mxu0 %v1560
        %1569 = vmatprep.subr.bf16.mxu0 0
        %1570 = vmatpush1.bf16.msra.mxu0 %v1561
        %1571 = vmatprep.subr.bf16.mxu0 0
        %1572 = vmatpush1.bf16.msra.mxu0 0
        %1573 = vmatprep.subr.bf16.mxu0 0
        %1574 = vmatpush1.bf16.msra.mxu0 0
        %1575 = vmatprep.subr.bf16.mxu0 0
        %1576 = vmatpush1.bf16.msra.mxu0 0
        %1577 = vmatprep.subr.bf16.mxu0 0
        %1578 = vmatpush1.bf16.msra.mxu0 0
        %1579 = vmatprep.subr.bf16.mxu0 0
        %1580 = vmatpush1.bf16.msra.mxu0 0
        %1581 = vmatprep.subr.bf16.mxu0 0
        %1582 = vmatpush1.bf16.msra.mxu0 0
        %1583 = vmatprep.subr.bf16.mxu0 0
        %1584 = vmatpush1.bf16.msra.mxu0 0
        %1585 = vmatprep.subr.bf16.mxu0 0
        %1586 = vmatpush1.bf16.msra.mxu0 0
        %1587 = vmatprep.subr.bf16.mxu0 0
        %1588 = vmatpush1.bf16.msra.mxu0 0
        %1589 = vmatprep.subr.bf16.mxu0 0
        %1590 = vmatpush1.bf16.msra.mxu0 0
        %1591 = vmatprep.subr.bf16.mxu0 0
        %1592 = vmatpush1.bf16.msra.mxu0 0
        %1593 = vmatprep.subr.bf16.mxu0 0
        %1594 = vmatpush1.bf16.msra.mxu0 0
        %1595 = vmatprep.subr.bf16.mxu0 0
        %1596 = vmatpush1.bf16.msra.mxu0 0
        %1597 = vmatprep.subr.bf16.mxu0 0
        %1598 = vmatpush1.bf16.msra.mxu0 0
        %1599 = vmatprep.mubr.bf16.mxu0 0
        %1600 = vmatmul.mubr.bf16.gmra.mrb[0].mxu0 %v1565
        %v1601 = vpop.f32.mrb[0].mxu0
        %v1602 = vadd.f32 %v1550, %v1601
        %v1603 = vpop.f32.mrb[0].mxu0
        %v1604 = vpop.f32.mrb[0].mxu0
        %v1605 = vpop.f32.mrb[0].mxu0
        %1606 = vdwg.mxu0
        %vm1607 = vcmp.gt.f32.partialorder %v1602, 0.0
        %v1608 = vadd.f32 %v1602, 1.0
        %v1609 = vmin.f32 %v1602, 0.0
        %v1610 = vmul.f32 %v1609, 1.442695
        %v1611 = vpow.pop %v1610
        %v1612 = vsel %vm1607, %v1608, %v1611
        %v1613 = vadd.f32 %v1612, 1e-06
        %v1614 = vrcp.pop %v1613
        %v1615 = vmul.f32 1.0, %v1614
        %1617 = vrot.lane.b32.xlu0 %v1602, 16
        %v1618 = vpop.permute.xlu0 %1617
        %v1620 = vmul.f32 %v1615, %v1618
        %v1622 = vrot.slane %v1615, 2
        %v1624 = vadd.f32 %v1615, %v1622
        %v1626 = vrot.slane %v1620, 2
        %v1628 = vadd.f32 %v1620, %v1626
        %v1629 = vrot.slane %v1615, 4
        %v1631 = vadd.f32 %v1624, %v1629
        %v1632 = vrot.slane %v1620, 4
        %v1634 = vadd.f32 %v1628, %v1632
        %v1635 = vrot.slane %v1615, 6
        %v1637 = vadd.f32 %v1631, %v1635
        %v1638 = vrot.slane %v1620, 6
        %v1640 = vadd.f32 %v1634, %v1638
        %v1641 = vadd.f32 %v1637, 1.0
        %v1642 = vrcp.pop %v1641
        %v1643 = vmul.f32 1.0, %v1642
        %v1644 = vmul.f32 %v1640, %v1643
        %1646 = vrot.lane.b32.xlu0 %v1644, 112
        %v1647 = vpop.permute.xlu0 %1646
        %1649 = vst.msk [vmem:[%s1223] sm:$0x3] %vm1469, %v1647
        %v1650 = vld [vmem:[%s25] sm:$0x1]
        %v1651 = vld [vmem:[%s25 + $0x1] sm:$0x1]
        %v1652 = vld [vmem:[%s25 + $0x2] sm:$0x1]
        %v1653 = vld [vmem:[%s25 + $0x3] sm:$0x1]
        %v1654 = vld [vmem:[%s27] sm:$0x1]
        %v1655 = vld [vmem:[%s27 + $0x1] sm:$0x1]
        %v1656 = vld [vmem:[%s27 + $0x2] sm:$0x1]
        %v1657 = vld [vmem:[%s27 + $0x3] sm:$0x1]
        %v1658 = vld [vmem:[%s29] sm:$0x1]
        %v1659 = vld [vmem:[%s29 + $0x1] sm:$0x1]
        %v1660 = vlaneseq
        %v1661 = vshrl.u32 %v1660, 7
        %v1662 = vsub.s32 0, %v1661
        %v1663 = vrot.slane %v1650, %v1662
        %v1664 = vmul.f32 %v1663, %v1454
        %v1665 = vlaneseq
        %v1666 = vshrl.u32 %v1665, 7
        %v1667 = vsub.s32 0, %v1666
        %v1668 = vrot.slane %v1651, %v1667
        %v1669 = vmul.f32 %v1668, %v1456
        %v1670 = vadd.f32 %v1664, %v1669
        %v1671 = vlaneseq
        %v1672 = vshrl.u32 %v1671, 7
        %v1673 = vsub.s32 0, %v1672
        %v1674 = vrot.slane %v1654, %v1673
        %v1675 = vmul.f32 %v1674, %v1647
        %v1676 = vadd.f32 %v1670, %v1675
        %v1677 = vlaneseq
        %v1678 = vshrl.u32 %v1677, 7
        %v1679 = vsub.s32 0, %v1678
        %v1680 = vrot.slane %v1655, %v1679
        %1681 = vrot.lane.b32.xlu0 %v1644, 104
        %v1682 = vpop.permute.xlu0 %1681
        %v1684 = vmul.f32 %v1680, %v1682
        %v1685 = vadd.f32 %v1676, %v1684
        %v1686 = vlaneseq
        %v1687 = vshrl.u32 %v1686, 7
        %v1688 = vsub.s32 0, %v1687
        %v1689 = vrot.slane %v1652, %v1688
        %v1690 = vmul.f32 %v1689, %v1454
        %v1691 = vlaneseq
        %v1692 = vshrl.u32 %v1691, 7
        %v1693 = vsub.s32 0, %v1692
        %v1694 = vrot.slane %v1653, %v1693
        %v1695 = vmul.f32 %v1694, %v1456
        %v1696 = vadd.f32 %v1690, %v1695
        %v1697 = vlaneseq
        %v1698 = vshrl.u32 %v1697, 7
        %v1699 = vsub.s32 0, %v1698
        %v1700 = vrot.slane %v1656, %v1699
        %v1701 = vmul.f32 %v1700, %v1647
        %v1702 = vadd.f32 %v1696, %v1701
        %v1703 = vlaneseq
        %v1704 = vshrl.u32 %v1703, 7
        %v1705 = vsub.s32 0, %v1704
        %v1706 = vrot.slane %v1657, %v1705
        %v1707 = vmul.f32 %v1706, %v1682
        %v1708 = vadd.f32 %v1702, %v1707
        %v1709 = vmul.f32 %v1650, %v1650
        %v1710 = vlaneseq
        %v1711 = vshrl.u32 %v1710, 7
        %v1712 = vsub.s32 0, %v1711
        %v1713 = vrot.slane %v1709, %v1712
        %v1714 = vmul.f32 %v1713, %v1457
        %v1715 = vmul.f32 %v1650, 2.0
        %v1716 = vmul.f32 %v1715, %v1651
        %v1717 = vlaneseq
        %v1718 = vshrl.u32 %v1717, 7
        %v1719 = vsub.s32 0, %v1718
        %v1720 = vrot.slane %v1716, %v1719
        %v1721 = vmul.f32 %v1720, %v1458
        %v1722 = vadd.f32 %v1714, %v1721
        %v1723 = vmul.f32 %v1651, %v1651
        %v1724 = vlaneseq
        %v1725 = vshrl.u32 %v1724, 7
        %v1726 = vsub.s32 0, %v1725
        %v1727 = vrot.slane %v1723, %v1726
        %v1728 = vmul.f32 %v1727, %v1462
        %v1729 = vadd.f32 %v1722, %v1728
        %v1730 = vmul.f32 %v1654, %v1654
        %v1731 = vlaneseq
        %v1732 = vshrl.u32 %v1731, 7
        %v1733 = vsub.s32 0, %v1732
        %v1734 = vrot.slane %v1730, %v1733
        %1736 = vrot.lane.b32.xlu0 %v1643, 112
        %v1737 = vpop.permute.xlu0 %1736
        %v1739 = vmul.f32 %v1734, %v1737
        %v1740 = vadd.f32 %v1729, %v1739
        %v1741 = vmul.f32 %v1655, %v1655
        %v1742 = vlaneseq
        %v1743 = vshrl.u32 %v1742, 7
        %v1744 = vsub.s32 0, %v1743
        %v1745 = vrot.slane %v1741, %v1744
        %1746 = vrot.lane.b32.xlu0 %v1643, 104
        %v1747 = vpop.permute.xlu0 %1746
        %v1749 = vmul.f32 %v1745, %v1747
        %v1750 = vadd.f32 %v1740, %v1749
        %v1751 = vlaneseq
        %v1752 = vshrl.u32 %v1751, 7
        %v1753 = vsub.s32 0, %v1752
        %v1754 = vrot.slane %v1658, %v1753
        %v1755 = vadd.f32 %v1750, %v1754
        %v1756 = vmul.f32 %v1652, %v1652
        %v1757 = vlaneseq
        %v1758 = vshrl.u32 %v1757, 7
        %v1759 = vsub.s32 0, %v1758
        %v1760 = vrot.slane %v1756, %v1759
        %v1761 = vmul.f32 %v1760, %v1457
        %v1762 = vmul.f32 %v1652, 2.0
        %v1763 = vmul.f32 %v1762, %v1653
        %v1764 = vlaneseq
        %v1765 = vshrl.u32 %v1764, 7
        %v1766 = vsub.s32 0, %v1765
        %v1767 = vrot.slane %v1763, %v1766
        %v1768 = vmul.f32 %v1767, %v1458
        %v1769 = vadd.f32 %v1761, %v1768
        %v1770 = vmul.f32 %v1653, %v1653
        %v1771 = vlaneseq
        %v1772 = vshrl.u32 %v1771, 7
        %v1773 = vsub.s32 0, %v1772
        %v1774 = vrot.slane %v1770, %v1773
        %v1775 = vmul.f32 %v1774, %v1462
        %v1776 = vadd.f32 %v1769, %v1775
        %v1777 = vmul.f32 %v1656, %v1656
        %v1778 = vlaneseq
        %v1779 = vshrl.u32 %v1778, 7
        %v1780 = vsub.s32 0, %v1779
        %v1781 = vrot.slane %v1777, %v1780
        %v1782 = vmul.f32 %v1781, %v1737
        %v1783 = vadd.f32 %v1776, %v1782
        %v1784 = vmul.f32 %v1657, %v1657
        %v1785 = vlaneseq
        %v1786 = vshrl.u32 %v1785, 7
        %v1787 = vsub.s32 0, %v1786
        %v1788 = vrot.slane %v1784, %v1787
        %v1789 = vmul.f32 %v1788, %v1747
        %v1790 = vadd.f32 %v1783, %v1789
        %v1791 = vlaneseq
        %v1792 = vshrl.u32 %v1791, 7
        %v1793 = vsub.s32 0, %v1792
        %v1794 = vrot.slane %v1659, %v1793
        %v1795 = vadd.f32 %v1790, %v1794
        %v1796 = vmul.f32 %v1650, %v1652
        %v1797 = vlaneseq
        %v1798 = vshrl.u32 %v1797, 7
        %v1799 = vsub.s32 0, %v1798
        %v1800 = vrot.slane %v1796, %v1799
        %v1801 = vmul.f32 %v1800, %v1457
        %v1802 = vmul.f32 %v1650, %v1653
        %v1803 = vmul.f32 %v1651, %v1652
        %v1804 = vadd.f32 %v1802, %v1803
        %v1805 = vlaneseq
        %v1806 = vshrl.u32 %v1805, 7
        %v1807 = vsub.s32 0, %v1806
        %v1808 = vrot.slane %v1804, %v1807
        %v1809 = vmul.f32 %v1808, %v1458
        %v1810 = vadd.f32 %v1801, %v1809
        %v1811 = vmul.f32 %v1651, %v1653
        %v1812 = vlaneseq
        %v1813 = vshrl.u32 %v1812, 7
        %v1814 = vsub.s32 0, %v1813
        %v1815 = vrot.slane %v1811, %v1814
        %v1816 = vmul.f32 %v1815, %v1462
        %v1817 = vadd.f32 %v1810, %v1816
        %v1818 = vmul.f32 %v1654, %v1656
        %v1819 = vlaneseq
        %v1820 = vshrl.u32 %v1819, 7
        %v1821 = vsub.s32 0, %v1820
        %v1822 = vrot.slane %v1818, %v1821
        %v1823 = vmul.f32 %v1822, %v1737
        %v1824 = vadd.f32 %v1817, %v1823
        %v1825 = vmul.f32 %v1655, %v1657
        %v1826 = vlaneseq
        %v1827 = vshrl.u32 %v1826, 7
        %v1828 = vsub.s32 0, %v1827
        %v1829 = vrot.slane %v1825, %v1828
        %v1830 = vmul.f32 %v1829, %v1747
        %v1831 = vadd.f32 %v1824, %v1830
        %1833 = vrot.lane.b32.xlu0 %v1708, 8
        %v1834 = vpop.permute.xlu0 %1833
        %v1836 = vsel %vm1467, %v1685, %v1834
        %1837 = vst.msk [vmem:[%s1209] sm:$0x3] %vm1469, %v1836
        %1839 = vrot.lane.b32.xlu0 %v1795, 8
        %v1840 = vpop.permute.xlu0 %1839
        %1843 = vrot.lane.b32.xlu0 %v1831, 16
        %v1844 = vpop.permute.xlu0 %1843
        %v1846 = vsel %vm1467, %v1755, %v1840
        %v1847 = vsel %vm1480, %v1846, %v1844
        %1848 = vst.msk [vmem:[%s1216] sm:$0x3] %vm1482, %v1847
        %vm1849 = vcmask 58368
        %1850 = vst.msk [vmem:[#allocation2] sm:$0x3] %vm1849, %v1685
        %1851 = vst.msk [vmem:[#allocation3] sm:$0x3] %vm1849, %v1708
        %1852 = vst.msk [vmem:[#allocation4] sm:$0x3] %vm1849, %v1755
        %1853 = vst.msk [vmem:[#allocation5] sm:$0x3] %vm1849, %v1795
        %1854 = vst.msk [vmem:[#allocation6] sm:$0x3] %vm1849, %v1831
        %v1855 = vld [vmem:[%s31] sm:$0x7]
        %v1856 = vld [vmem:[%s33] sm:$0x1]
        %v1858 = vlaneseq
        %v1859 = vshrl.u32 %v1858, 7
        %v1860 = vsub.s32 0, %v1859
        %v1861 = vrot.slane %v1856, %v1860
        %v1864 = vsel %vm1271, %v1855, 0
        %1866 = vmatprep.subr.bf16.mxu0 0
        %1867 = vmatpush1.bf16.msra.mxu0 %v1864
        %1868 = vmatprep.subr.bf16.mxu0 0
        %1869 = vmatpush1.bf16.msra.mxu0 0
        %1870 = vmatprep.subr.bf16.mxu0 0
        %1871 = vmatpush1.bf16.msra.mxu0 0
        %1872 = vmatprep.subr.bf16.mxu0 0
        %1873 = vmatpush1.bf16.msra.mxu0 0
        %1874 = vmatprep.subr.bf16.mxu0 0
        %1875 = vmatpush1.bf16.msra.mxu0 0
        %1876 = vmatprep.subr.bf16.mxu0 0
        %1877 = vmatpush1.bf16.msra.mxu0 0
        %1878 = vmatprep.subr.bf16.mxu0 0
        %1879 = vmatpush1.bf16.msra.mxu0 0
        %1880 = vmatprep.subr.bf16.mxu0 0
        %1881 = vmatpush1.bf16.msra.mxu0 0
        %1882 = vmatprep.subr.bf16.mxu0 0
        %1883 = vmatpush1.bf16.msra.mxu0 0
        %1884 = vmatprep.subr.bf16.mxu0 0
        %1885 = vmatpush1.bf16.msra.mxu0 0
        %1886 = vmatprep.subr.bf16.mxu0 0
        %1887 = vmatpush1.bf16.msra.mxu0 0
        %1888 = vmatprep.subr.bf16.mxu0 0
        %1889 = vmatpush1.bf16.msra.mxu0 0
        %1890 = vmatprep.subr.bf16.mxu0 0
        %1891 = vmatpush1.bf16.msra.mxu0 0
        %1892 = vmatprep.subr.bf16.mxu0 0
        %1893 = vmatpush1.bf16.msra.mxu0 0
        %1894 = vmatprep.subr.bf16.mxu0 0
        %1895 = vmatpush1.bf16.msra.mxu0 0
        %1896 = vmatprep.subr.bf16.mxu0 0
        %1897 = vmatpush1.bf16.msra.mxu0 0
        %1898 = vmatprep.mubr.bf16.mxu0 0
        %1899 = vmatmul.mubr.bf16.gmra.mrb[0].mxu0 %v1269
        %v1900 = vpop.f32.mrb[0].mxu0
        %v1901 = vadd.f32 %v1861, %v1900
        %v1902 = vpop.f32.mrb[0].mxu0
        %v1903 = vpop.f32.mrb[0].mxu0
        %v1904 = vpop.f32.mrb[0].mxu0
        %1905 = vdwg.mxu0
        %v1906 = vmax.f32 %v1901, 0.0
        %v1907 = vpack.c.bf16 %v1906, %v1906
        %v1908 = vld [vmem:[%s35] sm:$0xf]
        %v1909 = vld [vmem:[%s35 + $0x4] sm:$0xf]
        %v1910 = vld [vmem:[%s35 + $0x8] sm:$0xf]
        %v1911 = vld [vmem:[%s35 + $0xc] sm:$0xf]
        %v1912 = vld [vmem:[%s37] sm:$0x1]
        %v1914 = vlaneseq
        %v1915 = vshrl.u32 %v1914, 7
        %v1916 = vsub.s32 0, %v1915
        %v1917 = vrot.slane %v1912, %v1916
        %v1923 = vunpack.c.l.b16 %v1908
        %v1924 = vunpack.c.l.b16 %v1909
        %v1925 = vunpack.c.l.b16 %v1910
        %v1926 = vunpack.c.l.b16 %v1911
        %v1927 = vpack.c.b16 %v1924, %v1923
        %v1928 = vpack.c.b16 %v1926, %v1925
        %v1932 = vsel %vm1340, %v1907, 0
        %1934 = vmatprep.subr.bf16.mxu0 0
        %1935 = vmatpush1.bf16.msra.mxu0 %v1927
        %1936 = vmatprep.subr.bf16.mxu0 0
        %1937 = vmatpush1.bf16.msra.mxu0 %v1928
        %1938 = vmatprep.subr.bf16.mxu0 0
        %1939 = vmatpush1.bf16.msra.mxu0 0
        %1940 = vmatprep.subr.bf16.mxu0 0
        %1941 = vmatpush1.bf16.msra.mxu0 0
        %1942 = vmatprep.subr.bf16.mxu0 0
        %1943 = vmatpush1.bf16.msra.mxu0 0
        %1944 = vmatprep.subr.bf16.mxu0 0
        %1945 = vmatpush1.bf16.msra.mxu0 0
        %1946 = vmatprep.subr.bf16.mxu0 0
        %1947 = vmatpush1.bf16.msra.mxu0 0
        %1948 = vmatprep.subr.bf16.mxu0 0
        %1949 = vmatpush1.bf16.msra.mxu0 0
        %1950 = vmatprep.subr.bf16.mxu0 0
        %1951 = vmatpush1.bf16.msra.mxu0 0
        %1952 = vmatprep.subr.bf16.mxu0 0
        %1953 = vmatpush1.bf16.msra.mxu0 0
        %1954 = vmatprep.subr.bf16.mxu0 0
        %1955 = vmatpush1.bf16.msra.mxu0 0
        %1956 = vmatprep.subr.bf16.mxu0 0
        %1957 = vmatpush1.bf16.msra.mxu0 0
        %1958 = vmatprep.subr.bf16.mxu0 0
        %1959 = vmatpush1.bf16.msra.mxu0 0
        %1960 = vmatprep.subr.bf16.mxu0 0
        %1961 = vmatpush1.bf16.msra.mxu0 0
        %1962 = vmatprep.subr.bf16.mxu0 0
        %1963 = vmatpush1.bf16.msra.mxu0 0
        %1964 = vmatprep.subr.bf16.mxu0 0
        %1965 = vmatpush1.bf16.msra.mxu0 0
        %1966 = vmatprep.mubr.bf16.mxu0 0
        %1967 = vmatmul.mubr.bf16.gmra.mrb[0].mxu0 %v1932
        %v1968 = vpop.f32.mrb[0].mxu0
        %v1969 = vadd.f32 %v1917, %v1968
        %v1970 = vpop.f32.mrb[0].mxu0
        %v1971 = vpop.f32.mrb[0].mxu0
        %v1972 = vpop.f32.mrb[0].mxu0
        %1973 = vdwg.mxu0
        %vm1974 = vcmp.gt.f32.partialorder %v1969, 0.0
        %v1975 = vadd.f32 %v1969, 1.0
        %v1976 = vmin.f32 %v1969, 0.0
        %v1977 = vmul.f32 %v1976, 1.442695
        %v1978 = vpow.pop %v1977
        %v1979 = vsel %vm1974, %v1975, %v1978
        %v1980 = vadd.f32 %v1979, 1e-06
        %v1981 = vrcp.pop %v1980
        %v1982 = vmul.f32 1.0, %v1981
        %v1983 = vsel %vm1398, %v1982, 0.0
        %v1984 = vld [vmem:[%s1231] sm:$0xff]
        %v1985 = vpack.c.bf16 %v1984, %v1984
        %v1986 = vld [vmem:[%s43] sm:$0x3]
        %v1988 = vsel %vm1488, %v1985, 0
        %v1991 = vand.u32 %v1986, %v1495
        %1993 = vmatprep.subr.bf16.mxu0 0
        %1994 = vmatpush1.bf16.msra.mxu0 %v1991
        %1995 = vmatprep.subr.bf16.mxu0 0
        %1996 = vmatpush1.bf16.msra.mxu0 0
        %1997 = vmatprep.subr.bf16.mxu0 0
        %1998 = vmatpush1.bf16.msra.mxu0 0
        %1999 = vmatprep.subr.bf16.mxu0 0
        %2000 = vmatpush1.bf16.msra.mxu0 0
        %2001 = vmatprep.subr.bf16.mxu0 0
        %2002 = vmatpush1.bf16.msra.mxu0 0
        %2003 = vmatprep.subr.bf16.mxu0 0
        %2004 = vmatpush1.bf16.msra.mxu0 0
        %2005 = vmatprep.subr.bf16.mxu0 0
        %2006 = vmatpush1.bf16.msra.mxu0 0
        %2007 = vmatprep.subr.bf16.mxu0 0
        %2008 = vmatpush1.bf16.msra.mxu0 0
        %2009 = vmatprep.subr.bf16.mxu0 0
        %2010 = vmatpush1.bf16.msra.mxu0 0
        %2011 = vmatprep.subr.bf16.mxu0 0
        %2012 = vmatpush1.bf16.msra.mxu0 0
        %2013 = vmatprep.subr.bf16.mxu0 0
        %2014 = vmatpush1.bf16.msra.mxu0 0
        %2015 = vmatprep.subr.bf16.mxu0 0
        %2016 = vmatpush1.bf16.msra.mxu0 0
        %2017 = vmatprep.subr.bf16.mxu0 0
        %2018 = vmatpush1.bf16.msra.mxu0 0
        %2019 = vmatprep.subr.bf16.mxu0 0
        %2020 = vmatpush1.bf16.msra.mxu0 0
        %2021 = vmatprep.subr.bf16.mxu0 0
        %2022 = vmatpush1.bf16.msra.mxu0 0
        %2023 = vmatprep.subr.bf16.mxu0 0
        %2024 = vmatpush1.bf16.msra.mxu0 0
        %2025 = vmatprep.mubr.bf16.mxu0 0
        %2026 = vmatmul.mubr.bf16.gmra.mrb[0].mxu0 %v1988
        %v2027 = vpop.f32.mrb[0].mxu0
        %v2028 = vadd.f32 0.0, %v2027
        %v2029 = vpop.f32.mrb[0].mxu0
        %v2030 = vpop.f32.mrb[0].mxu0
        %v2031 = vpop.f32.mrb[0].mxu0
        %2032 = vdwg.mxu0
        %v2033 = vld [vmem:[%s41] sm:$0x1]
        %v2034 = vld [vmem:[%s41 + $0x1] sm:$0x1]
        %v2035 = vld [vmem:[%s41 + $0x2] sm:$0x1]
        %v2036 = vld [vmem:[%s41 + $0x3] sm:$0x1]
        %v2037 = vld [vmem:[%s45] sm:$0x1]
        %v2038 = vld [vmem:[%s45 + $0x1] sm:$0x1]
        %v2039 = vlaneseq
        %v2040 = vshrl.u32 %v2039, 7
        %v2041 = vsub.s32 0, %v2040
        %v2042 = vrot.slane %v2033, %v2041
        %v2043 = vmul.f32 %v2042, %v1454
        %v2044 = vlaneseq
        %v2045 = vshrl.u32 %v2044, 7
        %v2046 = vsub.s32 0, %v2045
        %v2047 = vrot.slane %v2034, %v2046
        %v2048 = vmul.f32 %v2047, %v1456
        %v2049 = vadd.f32 %v2043, %v2048
        %v2050 = vlaneseq
        %v2051 = vshrl.u32 %v2050, 7
        %v2052 = vsub.s32 0, %v2051
        %v2053 = vrot.slane %v2035, %v2052
        %v2054 = vmul.f32 %v2053, %v1454
        %v2055 = vlaneseq
        %v2056 = vshrl.u32 %v2055, 7
        %v2057 = vsub.s32 0, %v2056
        %v2058 = vrot.slane %v2036, %v2057
        %v2059 = vmul.f32 %v2058, %v1456
        %v2060 = vadd.f32 %v2054, %v2059
        %v2061 = vmul.f32 %v2033, %v2033
        %v2062 = vlaneseq
        %v2063 = vshrl.u32 %v2062, 7
        %v2064 = vsub.s32 0, %v2063
        %v2065 = vrot.slane %v2061, %v2064
        %v2066 = vmul.f32 %v2065, %v1457
        %v2067 = vmul.f32 %v2033, 2.0
        %v2068 = vmul.f32 %v2067, %v2034
        %v2069 = vlaneseq
        %v2070 = vshrl.u32 %v2069, 7
        %v2071 = vsub.s32 0, %v2070
        %v2072 = vrot.slane %v2068, %v2071
        %v2073 = vmul.f32 %v2072, %v1458
        %v2074 = vadd.f32 %v2066, %v2073
        %v2075 = vmul.f32 %v2034, %v2034
        %v2076 = vlaneseq
        %v2077 = vshrl.u32 %v2076, 7
        %v2078 = vsub.s32 0, %v2077
        %v2079 = vrot.slane %v2075, %v2078
        %v2080 = vmul.f32 %v2079, %v1462
        %v2081 = vadd.f32 %v2074, %v2080
        %v2082 = vlaneseq
        %v2083 = vshrl.u32 %v2082, 7
        %v2084 = vsub.s32 0, %v2083
        %v2085 = vrot.slane %v2037, %v2084
        %v2086 = vadd.f32 %v2081, %v2085
        %v2087 = vmul.f32 %v2035, %v2035
        %v2088 = vlaneseq
        %v2089 = vshrl.u32 %v2088, 7
        %v2090 = vsub.s32 0, %v2089
        %v2091 = vrot.slane %v2087, %v2090
        %v2092 = vmul.f32 %v2091, %v1457
        %v2093 = vmul.f32 %v2035, 2.0
        %v2094 = vmul.f32 %v2093, %v2036
        %v2095 = vlaneseq
        %v2096 = vshrl.u32 %v2095, 7
        %v2097 = vsub.s32 0, %v2096
        %v2098 = vrot.slane %v2094, %v2097
        %v2099 = vmul.f32 %v2098, %v1458
        %v2100 = vadd.f32 %v2092, %v2099
        %v2101 = vmul.f32 %v2036, %v2036
        %v2102 = vlaneseq
        %v2103 = vshrl.u32 %v2102, 7
        %v2104 = vsub.s32 0, %v2103
        %v2105 = vrot.slane %v2101, %v2104
        %v2106 = vmul.f32 %v2105, %v1462
        %v2107 = vadd.f32 %v2100, %v2106
        %v2108 = vlaneseq
        %v2109 = vshrl.u32 %v2108, 7
        %v2110 = vsub.s32 0, %v2109
        %v2111 = vrot.slane %v2038, %v2110
        %v2112 = vadd.f32 %v2107, %v2111
        %v2113 = vmul.f32 %v2033, %v2035
        %v2114 = vlaneseq
        %v2115 = vshrl.u32 %v2114, 7
        %v2116 = vsub.s32 0, %v2115
        %v2117 = vrot.slane %v2113, %v2116
        %v2118 = vmul.f32 %v2117, %v1457
        %v2119 = vmul.f32 %v2033, %v2036
        %v2120 = vmul.f32 %v2034, %v2035
        %v2121 = vadd.f32 %v2119, %v2120
        %v2122 = vlaneseq
        %v2123 = vshrl.u32 %v2122, 7
        %v2124 = vsub.s32 0, %v2123
        %v2125 = vrot.slane %v2121, %v2124
        %v2126 = vmul.f32 %v2125, %v1458
        %v2127 = vadd.f32 %v2118, %v2126
        %v2128 = vmul.f32 %v2034, %v2036
        %v2129 = vlaneseq
        %v2130 = vshrl.u32 %v2129, 7
        %v2131 = vsub.s32 0, %v2130
        %v2132 = vrot.slane %v2128, %v2131
        %v2133 = vmul.f32 %v2132, %v1462
        %v2134 = vadd.f32 %v2127, %v2133
        %v2135 = vld [vmem:[%s39] sm:$0x1]
        %v2136 = vld [vmem:[%s39 + $0x1] sm:$0x1]
        %v2137 = vld [vmem:[%s39 + $0x2] sm:$0x1]
        %v2138 = vld [vmem:[%s39 + $0x3] sm:$0x1]
        %v2139 = vld [vmem:[#allocation7] sm:$0x3]
        %v2140 = vld [vmem:[#allocation8] sm:$0x3]
        %v2141 = vld [vmem:[#allocation9] sm:$0x3]
        %v2142 = vld [vmem:[#allocation10] sm:$0x3]
        %v2143 = vld [vmem:[#allocation11] sm:$0x3]
        %2145 = vrot.lane.b32.xlu0 %v1983, 120
        %v2146 = vpop.permute.xlu0 %2145
        %v2148 = vmul.f32 %v2141, %v2146
        %v2149 = vadd.f32 %v2148, 1.0
        %v2150 = vrcp.pop %v2149
        %v2151 = vmul.f32 1.0, %v2150
        %v2152 = vsub.f32 %v1969, %v2139
        %2154 = vrot.lane.b32.xlu0 %v2152, 8
        %v2155 = vpop.permute.xlu0 %2154
        %v2157 = vmul.f32 %v1983, %v2155
        %2159 = vrot.lane.b32.xlu0 %v2151, 8
        %v2160 = vpop.permute.xlu0 %2159
        %v2162 = vmul.f32 %v2157, %v2160
        %2164 = vrot.lane.b32.xlu0 %v2162, 120
        %v2165 = vpop.permute.xlu0 %2164
        %v2167 = vmul.f32 %v2141, %v2165
        %v2168 = vadd.f32 %v2139, %v2167
        %v2169 = vmul.f32 %v2143, %v2165
        %v2170 = vadd.f32 %v2140, %v2169
        %v2171 = vmul.f32 %v2141, %v2151
        %v2172 = vmul.f32 %v2143, %v2151
        %v2173 = vmul.f32 %v2143, %v2143
        %v2174 = vmul.f32 %v2173, %v2146
        %v2175 = vmul.f32 %v2174, %v2151
        %v2176 = vsub.f32 %v2142, %v2175
        %v2177 = vlaneseq
        %v2178 = vshrl.u32 %v2177, 7
        %v2179 = vsub.s32 0, %v2178
        %v2180 = vrot.slane %v2135, %v2179
        %v2181 = vmul.f32 %v2180, %v2168
        %v2182 = vlaneseq
        %v2183 = vshrl.u32 %v2182, 7
        %v2184 = vsub.s32 0, %v2183
        %v2185 = vrot.slane %v2136, %v2184
        %v2186 = vmul.f32 %v2185, %v2170
        %v2187 = vadd.f32 %v2181, %v2186
        %v2188 = vadd.f32 %v2187, %v2028
        %v2189 = vadd.f32 %v2188, %v2049
        %v2190 = vlaneseq
        %v2191 = vshrl.u32 %v2190, 7
        %v2192 = vsub.s32 0, %v2191
        %v2193 = vrot.slane %v2137, %v2192
        %v2194 = vmul.f32 %v2193, %v2168
        %v2195 = vlaneseq
        %v2196 = vshrl.u32 %v2195, 7
        %v2197 = vsub.s32 0, %v2196
        %v2198 = vrot.slane %v2138, %v2197
        %v2199 = vmul.f32 %v2198, %v2170
        %v2200 = vadd.f32 %v2194, %v2199
        %2202 = vrot.lane.b32.xlu0 %v2028, 120
        %v2203 = vpop.permute.xlu0 %2202
        %v2205 = vadd.f32 %v2200, %v2203
        %v2206 = vadd.f32 %v2205, %v2060
        %v2207 = vmul.f32 %v2135, %v2135
        %v2208 = vlaneseq
        %v2209 = vshrl.u32 %v2208, 7
        %v2210 = vsub.s32 0, %v2209
        %v2211 = vrot.slane %v2207, %v2210
        %v2212 = vmul.f32 %v2211, %v2171
        %v2213 = vmul.f32 %v2135, 2.0
        %v2214 = vmul.f32 %v2213, %v2136
        %v2215 = vlaneseq
        %v2216 = vshrl.u32 %v2215, 7
        %v2217 = vsub.s32 0, %v2216
        %v2218 = vrot.slane %v2214, %v2217
        %v2219 = vmul.f32 %v2218, %v2172
        %v2220 = vadd.f32 %v2212, %v2219
        %v2221 = vmul.f32 %v2136, %v2136
        %v2222 = vlaneseq
        %v2223 = vshrl.u32 %v2222, 7
        %v2224 = vsub.s32 0, %v2223
        %v2225 = vrot.slane %v2221, %v2224
        %v2226 = vmul.f32 %v2225, %v2176
        %v2227 = vadd.f32 %v2220, %v2226
        %v2228 = vadd.f32 %v2227, %v2086
        %v2229 = vmul.f32 %v2137, %v2137
        %v2230 = vlaneseq
        %v2231 = vshrl.u32 %v2230, 7
        %v2232 = vsub.s32 0, %v2231
        %v2233 = vrot.slane %v2229, %v2232
        %v2234 = vmul.f32 %v2233, %v2171
        %v2235 = vmul.f32 %v2137, 2.0
        %v2236 = vmul.f32 %v2235, %v2138
        %v2237 = vlaneseq
        %v2238 = vshrl.u32 %v2237, 7
        %v2239 = vsub.s32 0, %v2238
        %v2240 = vrot.slane %v2236, %v2239
        %v2241 = vmul.f32 %v2240, %v2172
        %v2242 = vadd.f32 %v2234, %v2241
        %v2243 = vmul.f32 %v2138, %v2138
        %v2244 = vlaneseq
        %v2245 = vshrl.u32 %v2244, 7
        %v2246 = vsub.s32 0, %v2245
        %v2247 = vrot.slane %v2243, %v2246
        %v2248 = vmul.f32 %v2247, %v2176
        %v2249 = vadd.f32 %v2242, %v2248
        %v2250 = vadd.f32 %v2249, %v2112
        %v2251 = vmul.f32 %v2135, %v2137
        %v2252 = vlaneseq
        %v2253 = vshrl.u32 %v2252, 7
        %v2254 = vsub.s32 0, %v2253
        %v2255 = vrot.slane %v2251, %v2254
        %v2256 = vmul.f32 %v2255, %v2171
        %v2257 = vmul.f32 %v2135, %v2138
        %v2258 = vmul.f32 %v2136, %v2137
        %v2259 = vadd.f32 %v2257, %v2258
        %v2260 = vlaneseq
        %v2261 = vshrl.u32 %v2260, 7
        %v2262 = vsub.s32 0, %v2261
        %v2263 = vrot.slane %v2259, %v2262
        %v2264 = vmul.f32 %v2263, %v2172
        %v2265 = vadd.f32 %v2256, %v2264
        %v2266 = vmul.f32 %v2136, %v2138
        %v2267 = vlaneseq
        %v2268 = vshrl.u32 %v2267, 7
        %v2269 = vsub.s32 0, %v2268
        %v2270 = vrot.slane %v2266, %v2269
        %v2271 = vmul.f32 %v2270, %v2176
        %v2272 = vadd.f32 %v2265, %v2271
        %v2273 = vadd.f32 %v2272, %v2134
        %2274 = vst.msk [vmem:[#allocation12] sm:$0x3] %vm1849, %v2189
        %2275 = vst.msk [vmem:[#allocation13] sm:$0x3] %vm1849, %v2206
        %2276 = vst.msk [vmem:[#allocation14] sm:$0x3] %vm1849, %v2228
        %2277 = vst.msk [vmem:[#allocation15] sm:$0x3] %vm1849, %v2250
        %2278 = vst.msk [vmem:[#allocation16] sm:$0x3] %vm1849, %v2273
        %v2279 = vrot.slane %v1983, 2
        %2280 = vrot.lane.b32.xlu0 %v2279, 120
        %v2281 = vpop.permute.xlu0 %2280
        %v2283 = vmul.f32 %v2228, %v2281
        %v2284 = vadd.f32 %v2283, 1.0
        %v2285 = vrcp.pop %v2284
        %v2286 = vmul.f32 1.0, %v2285
        %v2288 = vrot.slane %v2189, 6
        %v2290 = vsub.f32 %v1969, %v2288
        %2292 = vrot.lane.b32.xlu0 %v2290, 8
        %v2293 = vpop.permute.xlu0 %2292
        %v2295 = vmul.f32 %v1983, %v2293
        %v2297 = vrot.slane %v2286, 6
        %2298 = vrot.lane.b32.xlu0 %v2297, 8
        %v2299 = vpop.permute.xlu0 %2298
        %v2301 = vmul.f32 %v2295, %v2299
        %v2303 = vrot.slane %v2301, 2
        %2304 = vrot.lane.b32.xlu0 %v2303, 120
        %v2305 = vpop.permute.xlu0 %2304
        %v2307 = vmul.f32 %v2228, %v2305
        %v2308 = vadd.f32 %v2189, %v2307
        %v2309 = vmul.f32 %v2273, %v2305
        %v2310 = vadd.f32 %v2206, %v2309
        %v2311 = vmul.f32 %v2228, %v2286
        %v2312 = vmul.f32 %v2273, %v2286
        %v2313 = vmul.f32 %v2273, %v2273
        %v2314 = vmul.f32 %v2313, %v2281
        %v2315 = vmul.f32 %v2314, %v2286
        %v2316 = vsub.f32 %v2250, %v2315
        %v2317 = vmul.f32 %v2180, %v2308
        %v2318 = vmul.f32 %v2185, %v2310
        %v2319 = vadd.f32 %v2317, %v2318
        %v2320 = vrot.slane %v2028, 2
        %v2322 = vadd.f32 %v2319, %v2320
        %v2323 = vadd.f32 %v2322, %v2049
        %v2324 = vmul.f32 %v2193, %v2308
        %v2325 = vmul.f32 %v2198, %v2310
        %v2326 = vadd.f32 %v2324, %v2325
        %2327 = vrot.lane.b32.xlu0 %v2320, 120
        %v2328 = vpop.permute.xlu0 %2327
        %v2330 = vadd.f32 %v2326, %v2328
        %v2331 = vadd.f32 %v2330, %v2060
        %v2332 = vmul.f32 %v2211, %v2311
        %v2333 = vmul.f32 %v2218, %v2312
        %v2334 = vadd.f32 %v2332, %v2333
        %v2335 = vmul.f32 %v2225, %v2316
        %v2336 = vadd.f32 %v2334, %v2335
        %v2337 = vadd.f32 %v2336, %v2086
        %v2338 = vmul.f32 %v2233, %v2311
        %v2339 = vmul.f32 %v2240, %v2312
        %v2340 = vadd.f32 %v2338, %v2339
        %v2341 = vmul.f32 %v2247, %v2316
        %v2342 = vadd.f32 %v2340, %v2341
        %v2343 = vadd.f32 %v2342, %v2112
        %v2344 = vmul.f32 %v2255, %v2311
        %v2345 = vmul.f32 %v2263, %v2312
        %v2346 = vadd.f32 %v2344, %v2345
        %v2347 = vmul.f32 %v2270, %v2316
        %v2348 = vadd.f32 %v2346, %v2347
        %v2349 = vadd.f32 %v2348, %v2134
        %2350 = vst.msk [vmem:[#allocation12 + $0x2] sm:$0x3] %vm1849, %v2323
        %2351 = vst.msk [vmem:[#allocation13 + $0x2] sm:$0x3] %vm1849, %v2331
        %2352 = vst.msk [vmem:[#allocation14 + $0x2] sm:$0x3] %vm1849, %v2337
        %2353 = vst.msk [vmem:[#allocation15 + $0x2] sm:$0x3] %vm1849, %v2343
        %2354 = vst.msk [vmem:[#allocation16 + $0x2] sm:$0x3] %vm1849, %v2349
        %v2355 = vrot.slane %v1983, 4
        %2356 = vrot.lane.b32.xlu0 %v2355, 120
        %v2357 = vpop.permute.xlu0 %2356
        %v2359 = vmul.f32 %v2337, %v2357
        %v2360 = vadd.f32 %v2359, 1.0
        %v2361 = vrcp.pop %v2360
        %v2362 = vmul.f32 1.0, %v2361
        %v2364 = vrot.slane %v2323, 4
        %v2366 = vsub.f32 %v1969, %v2364
        %2368 = vrot.lane.b32.xlu0 %v2366, 8
        %v2369 = vpop.permute.xlu0 %2368
        %v2371 = vmul.f32 %v1983, %v2369
        %v2373 = vrot.slane %v2362, 4
        %2374 = vrot.lane.b32.xlu0 %v2373, 8
        %v2375 = vpop.permute.xlu0 %2374
        %v2377 = vmul.f32 %v2371, %v2375
        %v2379 = vrot.slane %v2377, 4
        %2380 = vrot.lane.b32.xlu0 %v2379, 120
        %v2381 = vpop.permute.xlu0 %2380
        %v2383 = vmul.f32 %v2337, %v2381
        %v2384 = vadd.f32 %v2323, %v2383
        %v2385 = vmul.f32 %v2349, %v2381
        %v2386 = vadd.f32 %v2331, %v2385
        %v2387 = vmul.f32 %v2337, %v2362
        %v2388 = vmul.f32 %v2349, %v2362
        %v2389 = vmul.f32 %v2349, %v2349
        %v2390 = vmul.f32 %v2389, %v2357
        %v2391 = vmul.f32 %v2390, %v2362
        %v2392 = vsub.f32 %v2343, %v2391
        %v2393 = vmul.f32 %v2180, %v2384
        %v2394 = vmul.f32 %v2185, %v2386
        %v2395 = vadd.f32 %v2393, %v2394
        %v2396 = vrot.slane %v2028, 4
        %v2398 = vadd.f32 %v2395, %v2396
        %v2399 = vadd.f32 %v2398, %v2049
        %v2400 = vmul.f32 %v2193, %v2384
        %v2401 = vmul.f32 %v2198, %v2386
        %v2402 = vadd.f32 %v2400, %v2401
        %2403 = vrot.lane.b32.xlu0 %v2396, 120
        %v2404 = vpop.permute.xlu0 %2403
        %v2406 = vadd.f32 %v2402, %v2404
        %v2407 = vadd.f32 %v2406, %v2060
        %v2408 = vmul.f32 %v2211, %v2387
        %v2409 = vmul.f32 %v2218, %v2388
        %v2410 = vadd.f32 %v2408, %v2409
        %v2411 = vmul.f32 %v2225, %v2392
        %v2412 = vadd.f32 %v2410, %v2411
        %v2413 = vadd.f32 %v2412, %v2086
        %v2414 = vmul.f32 %v2233, %v2387
        %v2415 = vmul.f32 %v2240, %v2388
        %v2416 = vadd.f32 %v2414, %v2415
        %v2417 = vmul.f32 %v2247, %v2392
        %v2418 = vadd.f32 %v2416, %v2417
        %v2419 = vadd.f32 %v2418, %v2112
        %v2420 = vmul.f32 %v2255, %v2387
        %v2421 = vmul.f32 %v2263, %v2388
        %v2422 = vadd.f32 %v2420, %v2421
        %v2423 = vmul.f32 %v2270, %v2392
        %v2424 = vadd.f32 %v2422, %v2423
        %v2425 = vadd.f32 %v2424, %v2134
        %2426 = vst.msk [vmem:[#allocation12 + $0x4] sm:$0x3] %vm1849, %v2399
        %2427 = vst.msk [vmem:[#allocation13 + $0x4] sm:$0x3] %vm1849, %v2407
        %2428 = vst.msk [vmem:[#allocation14 + $0x4] sm:$0x3] %vm1849, %v2413
        %2429 = vst.msk [vmem:[#allocation15 + $0x4] sm:$0x3] %vm1849, %v2419
        %2430 = vst.msk [vmem:[#allocation16 + $0x4] sm:$0x3] %vm1849, %v2425
        %v2431 = vrot.slane %v1983, 6
        %2432 = vrot.lane.b32.xlu0 %v2431, 120
        %v2433 = vpop.permute.xlu0 %2432
        %v2435 = vmul.f32 %v2413, %v2433
        %v2436 = vadd.f32 %v2435, 1.0
        %v2437 = vrcp.pop %v2436
        %v2438 = vmul.f32 1.0, %v2437
        %v2440 = vrot.slane %v2399, 2
        %v2442 = vsub.f32 %v1969, %v2440
        %2444 = vrot.lane.b32.xlu0 %v2442, 8
        %v2445 = vpop.permute.xlu0 %2444
        %v2447 = vmul.f32 %v1983, %v2445
        %v2449 = vrot.slane %v2438, 2
        %2450 = vrot.lane.b32.xlu0 %v2449, 8
        %v2451 = vpop.permute.xlu0 %2450
        %v2453 = vmul.f32 %v2447, %v2451
        %v2455 = vrot.slane %v2453, 6
        %2456 = vrot.lane.b32.xlu0 %v2455, 120
        %v2457 = vpop.permute.xlu0 %2456
        %v2459 = vmul.f32 %v2413, %v2457
        %v2460 = vadd.f32 %v2399, %v2459
        %v2461 = vmul.f32 %v2425, %v2457
        %v2462 = vadd.f32 %v2407, %v2461
        %v2463 = vmul.f32 %v2413, %v2438
        %v2464 = vmul.f32 %v2425, %v2438
        %v2465 = vmul.f32 %v2425, %v2425
        %v2466 = vmul.f32 %v2465, %v2433
        %v2467 = vmul.f32 %v2466, %v2438
        %v2468 = vsub.f32 %v2419, %v2467
        %v2469 = vmul.f32 %v2180, %v2460
        %v2470 = vmul.f32 %v2185, %v2462
        %v2471 = vadd.f32 %v2469, %v2470
        %v2472 = vrot.slane %v2028, 6
        %v2474 = vadd.f32 %v2471, %v2472
        %v2475 = vadd.f32 %v2474, %v2049
        %v2476 = vmul.f32 %v2193, %v2460
        %v2477 = vmul.f32 %v2198, %v2462
        %v2478 = vadd.f32 %v2476, %v2477
        %2479 = vrot.lane.b32.xlu0 %v2472, 120
        %v2480 = vpop.permute.xlu0 %2479
        %v2482 = vadd.f32 %v2478, %v2480
        %v2483 = vadd.f32 %v2482, %v2060
        %v2484 = vmul.f32 %v2211, %v2463
        %v2485 = vmul.f32 %v2218, %v2464
        %v2486 = vadd.f32 %v2484, %v2485
        %v2487 = vmul.f32 %v2225, %v2468
        %v2488 = vadd.f32 %v2486, %v2487
        %v2489 = vadd.f32 %v2488, %v2086
        %v2490 = vmul.f32 %v2233, %v2463
        %v2491 = vmul.f32 %v2240, %v2464
        %v2492 = vadd.f32 %v2490, %v2491
        %v2493 = vmul.f32 %v2247, %v2468
        %v2494 = vadd.f32 %v2492, %v2493
        %v2495 = vadd.f32 %v2494, %v2112
        %v2496 = vmul.f32 %v2255, %v2463
        %v2497 = vmul.f32 %v2263, %v2464
        %v2498 = vadd.f32 %v2496, %v2497
        %v2499 = vmul.f32 %v2270, %v2468
        %v2500 = vadd.f32 %v2498, %v2499
        %v2501 = vadd.f32 %v2500, %v2134
        %2502 = vst.msk [vmem:[#allocation12 + $0x6] sm:$0x3] %vm1849, %v2475
        %2503 = vst.msk [vmem:[#allocation13 + $0x6] sm:$0x3] %vm1849, %v2483
        %2504 = vst.msk [vmem:[#allocation14 + $0x6] sm:$0x3] %vm1849, %v2489
        %2505 = vst.msk [vmem:[#allocation15 + $0x6] sm:$0x3] %vm1849, %v2495
        %2506 = vst.msk [vmem:[#allocation16 + $0x6] sm:$0x3] %vm1849, %v2501
        %2507 = vst.msk [vmem:[#allocation7] sm:$0x3] %vm1849, %v2475
        %2508 = vst.msk [vmem:[#allocation8] sm:$0x3] %vm1849, %v2483
        %2509 = vst.msk [vmem:[#allocation9] sm:$0x3] %vm1849, %v2489
        %2510 = vst.msk [vmem:[#allocation10] sm:$0x3] %vm1849, %v2495
        %2511 = vst.msk [vmem:[#allocation11] sm:$0x3] %vm1849, %v2501
        %v2512 = vld [vmem:[#allocation12] sm:$0xff]
        %v2513 = vld [vmem:[#allocation13] sm:$0xff]
        %2515 = vrot.lane.b32.xlu0 %v2513, 8
        %v2516 = vpop.permute.xlu0 %2515
        %v2518 = vsel %vm1467, %v2512, %v2516
        %v2519 = vpack.c.bf16 %v2518, %v2518
        %v2520 = vld [vmem:[%s47] sm:$0xf]
        %v2521 = vld [vmem:[%s47 + $0x4] sm:$0xf]
        %v2522 = vld [vmem:[%s49] sm:$0x1]
        %v2524 = vlaneseq
        %v2525 = vshrl.u32 %v2524, 7
        %v2526 = vsub.s32 0, %v2525
        %v2527 = vrot.slane %v2522, %v2526
        %v2531 = vunpack.c.l.b16 %v2520
        %v2532 = vunpack.c.l.b16 %v2521
        %v2533 = vpack.c.b16 %v2532, %v2531
        %v2536 = vsel %vm1480, %v2519, 0
        %2538 = vmatprep.subr.bf16.mxu0 0
        %2539 = vmatpush1.bf16.msra.mxu0 %v2533
        %2540 = vmatprep.subr.bf16.mxu0 0
        %2541 = vmatpush1.bf16.msra.mxu0 0
        %2542 = vmatprep.subr.bf16.mxu0 0
        %2543 = vmatpush1.bf16.msra.mxu0 0
        %2544 = vmatprep.subr.bf16.mxu0 0
        %2545 = vmatpush1.bf16.msra.mxu0 0
        %2546 = vmatprep.subr.bf16.mxu0 0
        %2547 = vmatpush1.bf16.msra.mxu0 0
        %2548 = vmatprep.subr.bf16.mxu0 0
        %2549 = vmatpush1.bf16.msra.mxu0 0
        %2550 = vmatprep.subr.bf16.mxu0 0
        %2551 = vmatpush1.bf16.msra.mxu0 0
        %2552 = vmatprep.subr.bf16.mxu0 0
        %2553 = vmatpush1.bf16.msra.mxu0 0
        %2554 = vmatprep.subr.bf16.mxu0 0
        %2555 = vmatpush1.bf16.msra.mxu0 0
        %2556 = vmatprep.subr.bf16.mxu0 0
        %2557 = vmatpush1.bf16.msra.mxu0 0
        %2558 = vmatprep.subr.bf16.mxu0 0
        %2559 = vmatpush1.bf16.msra.mxu0 0
        %2560 = vmatprep.subr.bf16.mxu0 0
        %2561 = vmatpush1.bf16.msra.mxu0 0
        %2562 = vmatprep.subr.bf16.mxu0 0
        %2563 = vmatpush1.bf16.msra.mxu0 0
        %2564 = vmatprep.subr.bf16.mxu0 0
        %2565 = vmatpush1.bf16.msra.mxu0 0
        %2566 = vmatprep.subr.bf16.mxu0 0
        %2567 = vmatpush1.bf16.msra.mxu0 0
        %2568 = vmatprep.subr.bf16.mxu0 0
        %2569 = vmatpush1.bf16.msra.mxu0 0
        %2570 = vmatprep.mubr.bf16.mxu0 0
        %2571 = vmatmul.mubr.bf16.gmra.mrb[0].mxu0 %v2536
        %v2572 = vpop.f32.mrb[0].mxu0
        %v2573 = vadd.f32 %v2527, %v2572
        %v2574 = vpop.f32.mrb[0].mxu0
        %v2575 = vpop.f32.mrb[0].mxu0
        %v2576 = vpop.f32.mrb[0].mxu0
        %2577 = vdwg.mxu0
        %v2578 = vmax.f32 %v2573, 0.0
        %v2579 = vpack.c.bf16 %v2578, %v2578
        %v2580 = vld [vmem:[%s51] sm:$0xf]
        %v2581 = vld [vmem:[%s51 + $0x4] sm:$0xf]
        %v2582 = vld [vmem:[%s51 + $0x8] sm:$0xf]
        %v2583 = vld [vmem:[%s51 + $0xc] sm:$0xf]
        %v2584 = vld [vmem:[%s53] sm:$0x1]
        %v2586 = vlaneseq
        %v2587 = vshrl.u32 %v2586, 7
        %v2588 = vsub.s32 0, %v2587
        %v2589 = vrot.slane %v2584, %v2588
        %v2595 = vunpack.c.l.b16 %v2580
        %v2596 = vunpack.c.l.b16 %v2581
        %v2597 = vunpack.c.l.b16 %v2582
        %v2598 = vunpack.c.l.b16 %v2583
        %v2599 = vpack.c.b16 %v2596, %v2595
        %v2600 = vpack.c.b16 %v2598, %v2597
        %v2604 = vsel %vm1340, %v2579, 0
        %2606 = vmatprep.subr.bf16.mxu0 0
        %2607 = vmatpush1.bf16.msra.mxu0 %v2599
        %2608 = vmatprep.subr.bf16.mxu0 0
        %2609 = vmatpush1.bf16.msra.mxu0 %v2600
        %2610 = vmatprep.subr.bf16.mxu0 0
        %2611 = vmatpush1.bf16.msra.mxu0 0
        %2612 = vmatprep.subr.bf16.mxu0 0
        %2613 = vmatpush1.bf16.msra.mxu0 0
        %2614 = vmatprep.subr.bf16.mxu0 0
        %2615 = vmatpush1.bf16.msra.mxu0 0
        %2616 = vmatprep.subr.bf16.mxu0 0
        %2617 = vmatpush1.bf16.msra.mxu0 0
        %2618 = vmatprep.subr.bf16.mxu0 0
        %2619 = vmatpush1.bf16.msra.mxu0 0
        %2620 = vmatprep.subr.bf16.mxu0 0
        %2621 = vmatpush1.bf16.msra.mxu0 0
        %2622 = vmatprep.subr.bf16.mxu0 0
        %2623 = vmatpush1.bf16.msra.mxu0 0
        %2624 = vmatprep.subr.bf16.mxu0 0
        %2625 = vmatpush1.bf16.msra.mxu0 0
        %2626 = vmatprep.subr.bf16.mxu0 0
        %2627 = vmatpush1.bf16.msra.mxu0 0
        %2628 = vmatprep.subr.bf16.mxu0 0
        %2629 = vmatpush1.bf16.msra.mxu0 0
        %2630 = vmatprep.subr.bf16.mxu0 0
        %2631 = vmatpush1.bf16.msra.mxu0 0
        %2632 = vmatprep.subr.bf16.mxu0 0
        %2633 = vmatpush1.bf16.msra.mxu0 0
        %2634 = vmatprep.subr.bf16.mxu0 0
        %2635 = vmatpush1.bf16.msra.mxu0 0
        %2636 = vmatprep.subr.bf16.mxu0 0
        %2637 = vmatpush1.bf16.msra.mxu0 0
        %2638 = vmatprep.mubr.bf16.mxu0 0
        %2639 = vmatmul.mubr.bf16.gmra.mrb[0].mxu0 %v2604
        %v2640 = vpop.f32.mrb[0].mxu0
        %v2641 = vadd.f32 %v2589, %v2640
        %v2642 = vpop.f32.mrb[0].mxu0
        %v2643 = vpop.f32.mrb[0].mxu0
        %v2644 = vpop.f32.mrb[0].mxu0
        %2645 = vdwg.mxu0
        %2646 = vst.msk [vmem:[%s1181] sm:$0xff] %vm1267, %v2641
        %v2647 = vld [vmem:[#allocation14] sm:$0xff]
        %v2648 = vld [vmem:[#allocation15] sm:$0xff]
        %v2649 = vld [vmem:[#allocation16] sm:$0xff]
        %2651 = vrot.lane.b32.xlu0 %v2648, 8
        %v2652 = vpop.permute.xlu0 %2651
        %2655 = vrot.lane.b32.xlu0 %v2649, 16
        %v2656 = vpop.permute.xlu0 %2655
        %v2658 = vsel %vm1467, %v2647, %v2652
        %v2659 = vsel %vm1480, %v2658, %v2656
        %v2660 = vpack.c.bf16 %v2659, %v2659
        %v2661 = vld [vmem:[%s55] sm:$0xf]
        %v2662 = vld [vmem:[%s55 + $0x4] sm:$0xf]
        %v2663 = vld [vmem:[%s55 + $0x8] sm:$0xf]
        %v2664 = vld [vmem:[%s57] sm:$0x1]
        %v2666 = vlaneseq
        %v2667 = vshrl.u32 %v2666, 7
        %v2668 = vsub.s32 0, %v2667
        %v2669 = vrot.slane %v2664, %v2668
        %v2674 = vunpack.c.l.b16 %v2661
        %v2675 = vunpack.c.l.b16 %v2662
        %v2676 = vunpack.c.l.b16 %v2663
        %v2677 = vpack.c.b16 %v2675, %v2674
        %v2678 = vpack.c.b16 %v2676, %v2676
        %vm2680 = vcmask 195584
        %v2682 = vsel %vm2680, %v2660, 0
        %vm2684 = vcmask 1043456
        %v2686 = vsel %vm2684, %v2678, 0
        %2688 = vmatprep.subr.bf16.mxu0 0
        %2689 = vmatpush1.bf16.msra.mxu0 %v2677
        %2690 = vmatprep.subr.bf16.mxu0 0
        %2691 = vmatpush1.bf16.msra.mxu0 %v2686
        %2692 = vmatprep.subr.bf16.mxu0 0
        %2693 = vmatpush1.bf16.msra.mxu0 0
        %2694 = vmatprep.subr.bf16.mxu0 0
        %2695 = vmatpush1.bf16.msra.mxu0 0
        %2696 = vmatprep.subr.bf16.mxu0 0
        %2697 = vmatpush1.bf16.msra.mxu0 0
        %2698 = vmatprep.subr.bf16.mxu0 0
        %2699 = vmatpush1.bf16.msra.mxu0 0
        %2700 = vmatprep.subr.bf16.mxu0 0
        %2701 = vmatpush1.bf16.msra.mxu0 0
        %2702 = vmatprep.subr.bf16.mxu0 0
        %2703 = vmatpush1.bf16.msra.mxu0 0
        %2704 = vmatprep.subr.bf16.mxu0 0
        %2705 = vmatpush1.bf16.msra.mxu0 0
        %2706 = vmatprep.subr.bf16.mxu0 0
        %2707 = vmatpush1.bf16.msra.mxu0 0
        %2708 = vmatprep.subr.bf16.mxu0 0
        %2709 = vmatpush1.bf16.msra.mxu0 0
        %2710 = vmatprep.subr.bf16.mxu0 0
        %2711 = vmatpush1.bf16.msra.mxu0 0
        %2712 = vmatprep.subr.bf16.mxu0 0
        %2713 = vmatpush1.bf16.msra.mxu0 0
        %2714 = vmatprep.subr.bf16.mxu0 0
        %2715 = vmatpush1.bf16.msra.mxu0 0
        %2716 = vmatprep.subr.bf16.mxu0 0
        %2717 = vmatpush1.bf16.msra.mxu0 0
        %2718 = vmatprep.subr.bf16.mxu0 0
        %2719 = vmatpush1.bf16.msra.mxu0 0
        %2720 = vmatprep.mubr.bf16.mxu0 0
        %2721 = vmatmul.mubr.bf16.gmra.mrb[0].mxu0 %v2682
        %v2722 = vpop.f32.mrb[0].mxu0
        %v2723 = vadd.f32 %v2669, %v2722
        %v2724 = vpop.f32.mrb[0].mxu0
        %v2725 = vpop.f32.mrb[0].mxu0
        %v2726 = vpop.f32.mrb[0].mxu0
        %2727 = vdwg.mxu0
        %v2728 = vmax.f32 %v2723, 0.0
        %v2729 = vpack.c.bf16 %v2728, %v2728
        %v2730 = vld [vmem:[%s59] sm:$0xf]
        %v2731 = vld [vmem:[%s59 + $0x4] sm:$0xf]
        %v2732 = vld [vmem:[%s59 + $0x8] sm:$0xf]
        %v2733 = vld [vmem:[%s59 + $0xc] sm:$0xf]
        %v2734 = vld [vmem:[%s61] sm:$0x1]
        %v2736 = vlaneseq
        %v2737 = vshrl.u32 %v2736, 7
        %v2738 = vsub.s32 0, %v2737
        %v2739 = vrot.slane %v2734, %v2738
        %v2745 = vunpack.c.l.b16 %v2730
        %v2746 = vunpack.c.l.b16 %v2731
        %v2747 = vunpack.c.l.b16 %v2732
        %v2748 = vunpack.c.l.b16 %v2733
        %v2749 = vpack.c.b16 %v2746, %v2745
        %v2750 = vpack.c.b16 %v2748, %v2747
        %v2754 = vsel %vm1340, %v2729, 0
        %2756 = vmatprep.subr.bf16.mxu0 0
        %2757 = vmatpush1.bf16.msra.mxu0 %v2749
        %2758 = vmatprep.subr.bf16.mxu0 0
        %2759 = vmatpush1.bf16.msra.mxu0 %v2750
        %2760 = vmatprep.subr.bf16.mxu0 0
        %2761 = vmatpush1.bf16.msra.mxu0 0
        %2762 = vmatprep.subr.bf16.mxu0 0
        %2763 = vmatpush1.bf16.msra.mxu0 0
        %2764 = vmatprep.subr.bf16.mxu0 0
        %2765 = vmatpush1.bf16.msra.mxu0 0
        %2766 = vmatprep.subr.bf16.mxu0 0
        %2767 = vmatpush1.bf16.msra.mxu0 0
        %2768 = vmatprep.subr.bf16.mxu0 0
        %2769 = vmatpush1.bf16.msra.mxu0 0
        %2770 = vmatprep.subr.bf16.mxu0 0
        %2771 = vmatpush1.bf16.msra.mxu0 0
        %2772 = vmatprep.subr.bf16.mxu0 0
        %2773 = vmatpush1.bf16.msra.mxu0 0
        %2774 = vmatprep.subr.bf16.mxu0 0
        %2775 = vmatpush1.bf16.msra.mxu0 0
        %2776 = vmatprep.subr.bf16.mxu0 0
        %2777 = vmatpush1.bf16.msra.mxu0 0
        %2778 = vmatprep.subr.bf16.mxu0 0
        %2779 = vmatpush1.bf16.msra.mxu0 0
        %2780 = vmatprep.subr.bf16.mxu0 0
        %2781 = vmatpush1.bf16.msra.mxu0 0
        %2782 = vmatprep.subr.bf16.mxu0 0
        %2783 = vmatpush1.bf16.msra.mxu0 0
        %2784 = vmatprep.subr.bf16.mxu0 0
        %2785 = vmatpush1.bf16.msra.mxu0 0
        %2786 = vmatprep.subr.bf16.mxu0 0
        %2787 = vmatpush1.bf16.msra.mxu0 0
        %2788 = vmatprep.mubr.bf16.mxu0 0
        %2789 = vmatmul.mubr.bf16.gmra.mrb[0].mxu0 %v2754
        %v2790 = vpop.f32.mrb[0].mxu0
        %v2791 = vadd.f32 %v2739, %v2790
        %v2792 = vpop.f32.mrb[0].mxu0
        %v2793 = vpop.f32.mrb[0].mxu0
        %v2794 = vpop.f32.mrb[0].mxu0
        %2795 = vdwg.mxu0
        %vm2796 = vcmp.gt.f32.partialorder %v2791, 0.0
        %v2797 = vadd.f32 %v2791, 1.0
        %v2798 = vmin.f32 %v2791, 0.0
        %v2799 = vmul.f32 %v2798, 1.442695
        %v2800 = vpow.pop %v2799
        %v2801 = vsel %vm2796, %v2797, %v2800
        %v2802 = vadd.f32 %v2801, 1e-06
        %2803 = vst.msk [vmem:[%s1188] sm:$0xff] %vm1267, %v2802
        %s2804 = sand.u32 %s784, 1
        %s2805 = scalar_lea.sflag [#allocation18], %s2804
        %s2806 = sand.u32 %s784, 1
        %s2807 = smul.addr %s2806, 8
        %s2808 = scalar_lea.vmem [#allocation17], %s2807
        %s2809 = sand.u32 %s99, 1
        %s2810 = scalar_lea.sflag [#allocation20], %s2809
        %s2811 = sand.u32 %s810, 1
        %s2812 = smul.addr %s2811, 8
        %s2813 = scalar_lea.vmem [#allocation19], %s2812
        %s2814 = sand.u32 %s99, 1
        %s2815 = scalar_lea.sflag [#allocation20], %s2814
        %s2816 = sand.u32 %s836, 1
        %s2817 = smul.addr %s2816, 2
        %s2818 = scalar_lea.vmem [#allocation21], %s2817
        %s2819 = sand.u32 %s99, 1
        %s2820 = scalar_lea.sflag [#allocation23], %s2819
        %s2821 = sand.u32 %s862, 1
        %s2822 = smul.addr %s2821, 2
        %s2823 = scalar_lea.vmem [#allocation22], %s2822
        %s2824 = sand.u32 %s99, 1
        %s2825 = scalar_lea.sflag [#allocation23], %s2824
        %s2826 = sand.u32 %s888, 1
        %s2827 = smul.addr %s2826, 2
        %s2828 = scalar_lea.vmem [#allocation24], %s2827
        %s2829 = sand.u32 %s99, 1
        %s2830 = scalar_lea.sflag [#allocation26], %s2829
        %s2831 = sand.u32 %s914, 1
        %s2832 = smul.addr %s2831, 2
        %s2833 = scalar_lea.vmem [#allocation25], %s2832
        %s2834 = sand.u32 %s99, 1
        %s2835 = scalar_lea.sflag [#allocation26], %s2834
        %s2836 = sand.u32 %s940, 1
        %s2837 = smul.addr %s2836, 2
        %s2838 = scalar_lea.vmem [#allocation27], %s2837
        // Predicated region
        $region149: #{tpu_custom_call.1} parent=143 // pred_check
          %p2839 = pneg %p794
        $region150: #{tpu_custom_call.1} parent=143 // pred_check_branch
          %2841 = sbr.rel (%p2839) target = $region152
        $region151: #{tpu_custom_call.1} parent=143 // pred_region
          %s2843 = ssub.s32 128, 128
          %2844 = vsyncadd %s2805, %s2843
          %s2845 = smul.addr %s99, 128
          %s2846 = scalar_lea.hbm %s63, %s2845
          %s2848 = sshll.u32 %s2808, 4
          %s2849 = int_to_ptr.vmem [resolvable:$true] %s2848
          %2851 = dma.vmem_to_hbm [thread:$0]  %s2849, 128, %s2846, %s2805
        $region152: #{tpu_custom_call.1} parent=143 // pred_fallthru
          _
        // Predicated region
        $region153: #{tpu_custom_call.1} parent=143 // pred_check
          %p2852 = pneg %p820
        $region154: #{tpu_custom_call.1} parent=143 // pred_check_branch
          %2854 = sbr.rel (%p2852) target = $region156
        $region155: #{tpu_custom_call.1} parent=143 // pred_region
          %s2856 = ssub.s32 128, 128
          %2857 = vsyncadd %s2810, %s2856
          %s2858 = smul.addr %s99, 128
          %s2859 = scalar_lea.hbm %s65, %s2858
          %s2861 = sshll.u32 %s2813, 4
          %s2862 = int_to_ptr.vmem [resolvable:$true] %s2861
          %2864 = dma.vmem_to_hbm [thread:$0]  %s2862, 128, %s2859, %s2810
        $region156: #{tpu_custom_call.1} parent=143 // pred_fallthru
          _
        // Predicated region
        $region157: #{tpu_custom_call.1} parent=143 // pred_check
          %p2865 = pneg %p846
        $region158: #{tpu_custom_call.1} parent=143 // pred_check_branch
          %2867 = sbr.rel (%p2865) target = $region160
        $region159: #{tpu_custom_call.1} parent=143 // pred_region
          %s2869 = ssub.s32 32, 32
          %2870 = vsyncadd %s2815, %s2869
          %s2871 = smul.addr %s99, 32
          %s2872 = scalar_lea.hbm %s67, %s2871
          %s2874 = sshll.u32 %s2818, 4
          %s2875 = int_to_ptr.vmem [resolvable:$true] %s2874
          %2877 = dma.vmem_to_hbm [thread:$0]  %s2875, 32, %s2872, %s2815
        $region160: #{tpu_custom_call.1} parent=143 // pred_fallthru
          _
        // Predicated region
        $region161: #{tpu_custom_call.1} parent=143 // pred_check
          %p2878 = pneg %p872
        $region162: #{tpu_custom_call.1} parent=143 // pred_check_branch
          %2880 = sbr.rel (%p2878) target = $region164
        $region163: #{tpu_custom_call.1} parent=143 // pred_region
          %s2882 = ssub.s32 32, 32
          %2883 = vsyncadd %s2820, %s2882
          %s2884 = smul.addr %s99, 32
          %s2885 = scalar_lea.hbm %s69, %s2884
          %s2887 = sshll.u32 %s2823, 4
          %s2888 = int_to_ptr.vmem [resolvable:$true] %s2887
          %2890 = dma.vmem_to_hbm [thread:$0]  %s2888, 32, %s2885, %s2820
        $region164: #{tpu_custom_call.1} parent=143 // pred_fallthru
          _
        // Predicated region
        $region165: #{tpu_custom_call.1} parent=143 // pred_check
          %p2891 = pneg %p898
        $region166: #{tpu_custom_call.1} parent=143 // pred_check_branch
          %2893 = sbr.rel (%p2891) target = $region168
        $region167: #{tpu_custom_call.1} parent=143 // pred_region
          %s2895 = ssub.s32 32, 32
          %2896 = vsyncadd %s2825, %s2895
          %s2897 = smul.addr %s99, 32
          %s2898 = scalar_lea.hbm %s71, %s2897
          %s2900 = sshll.u32 %s2828, 4
          %s2901 = int_to_ptr.vmem [resolvable:$true] %s2900
          %2903 = dma.vmem_to_hbm [thread:$0]  %s2901, 32, %s2898, %s2825
        $region168: #{tpu_custom_call.1} parent=143 // pred_fallthru
          _
        // Predicated region
        $region169: #{tpu_custom_call.1} parent=143 // pred_check
          %p2904 = pneg %p924
        $region170: #{tpu_custom_call.1} parent=143 // pred_check_branch
          %2906 = sbr.rel (%p2904) target = $region172
        $region171: #{tpu_custom_call.1} parent=143 // pred_region
          %s2908 = ssub.s32 32, 32
          %2909 = vsyncadd %s2830, %s2908
          %s2910 = smul.addr %s99, 32
          %s2911 = scalar_lea.hbm %s73, %s2910
          %s2913 = sshll.u32 %s2833, 4
          %s2914 = int_to_ptr.vmem [resolvable:$true] %s2913
          %2916 = dma.vmem_to_hbm [thread:$0]  %s2914, 32, %s2911, %s2830
        $region172: #{tpu_custom_call.1} parent=143 // pred_fallthru
          _
        // Predicated region
        $region173: #{tpu_custom_call.1} parent=143 // pred_check
          %p2917 = pneg %p950
        $region174: #{tpu_custom_call.1} parent=143 // pred_check_branch
          %2919 = sbr.rel (%p2917) target = $region176
        $region175: #{tpu_custom_call.1} parent=143 // pred_region
          %s2921 = ssub.s32 32, 32
          %2922 = vsyncadd %s2835, %s2921
          %s2923 = smul.addr %s99, 32
          %s2924 = scalar_lea.hbm %s75, %s2923
          %s2926 = sshll.u32 %s2838, 4
          %s2927 = int_to_ptr.vmem [resolvable:$true] %s2926
          %2929 = dma.vmem_to_hbm [thread:$0]  %s2927, 32, %s2924, %s2835
        $region176: #{tpu_custom_call.1} parent=143 // pred_fallthru
          _
      $region144: #{tpu_custom_call.1} parent=5 // pred_fallthru
        _
      %p2930 = scmp.le.s32.totalorder 2, %s94
      // Predicated region
      $region177: #{tpu_custom_call.1} parent=5 // pred_check
        %p2931 = pneg %p2930
      $region178: #{tpu_custom_call.1} parent=5 // pred_check_branch
        %2933 = sbr.rel (%p2931) target = $region180
      $region179: #{tpu_custom_call.1} parent=5 // pred_region
        %s2934 = ssub.s32 %s94, 2
        // Predicated region
        $region181: #{tpu_custom_call.1} parent=179 // pred_check
          %p2935 = pneg %p800
        $region182: #{tpu_custom_call.1} parent=179 // pred_check_branch
          %2937 = sbr.rel (%p2935) target = $region184
        $region183: #{tpu_custom_call.1} parent=179 // pred_region
          %s2938 = sand.u32 %s785, 1
          %s2939 = scalar_lea.sflag [#allocation18], %s2938
          %s2940 = sand.u32 %s785, 1
          %s2941 = smul.addr %s2940, 8
          %s2942 = scalar_lea.vmem [#allocation17], %s2941
          %2943 = dma.done %s2939, 128
        $region184: #{tpu_custom_call.1} parent=179 // pred_fallthru
          _
        // Predicated region
        $region185: #{tpu_custom_call.1} parent=179 // pred_check
          %p2944 = pneg %p826
        $region186: #{tpu_custom_call.1} parent=179 // pred_check_branch
          %2946 = sbr.rel (%p2944) target = $region188
        $region187: #{tpu_custom_call.1} parent=179 // pred_region
          %s2947 = sand.u32 %s100, 1
          %s2948 = scalar_lea.sflag [#allocation20], %s2947
          %s2949 = sand.u32 %s811, 1
          %s2950 = smul.addr %s2949, 8
          %s2951 = scalar_lea.vmem [#allocation19], %s2950
          %2952 = dma.done %s2948, 128
        $region188: #{tpu_custom_call.1} parent=179 // pred_fallthru
          _
        // Predicated region
        $region189: #{tpu_custom_call.1} parent=179 // pred_check
          %p2953 = pneg %p852
        $region190: #{tpu_custom_call.1} parent=179 // pred_check_branch
          %2955 = sbr.rel (%p2953) target = $region192
        $region191: #{tpu_custom_call.1} parent=179 // pred_region
          %s2956 = sand.u32 %s100, 1
          %s2957 = scalar_lea.sflag [#allocation20], %s2956
          %s2958 = sand.u32 %s837, 1
          %s2959 = smul.addr %s2958, 2
          %s2960 = scalar_lea.vmem [#allocation21], %s2959
          %2961 = dma.done %s2957, 32
        $region192: #{tpu_custom_call.1} parent=179 // pred_fallthru
          _
        // Predicated region
        $region193: #{tpu_custom_call.1} parent=179 // pred_check
          %p2962 = pneg %p878
        $region194: #{tpu_custom_call.1} parent=179 // pred_check_branch
          %2964 = sbr.rel (%p2962) target = $region196
        $region195: #{tpu_custom_call.1} parent=179 // pred_region
          %s2965 = sand.u32 %s100, 1
          %s2966 = scalar_lea.sflag [#allocation23], %s2965
          %s2967 = sand.u32 %s863, 1
          %s2968 = smul.addr %s2967, 2
          %s2969 = scalar_lea.vmem [#allocation22], %s2968
          %2970 = dma.done %s2966, 32
        $region196: #{tpu_custom_call.1} parent=179 // pred_fallthru
          _
        // Predicated region
        $region197: #{tpu_custom_call.1} parent=179 // pred_check
          %p2971 = pneg %p904
        $region198: #{tpu_custom_call.1} parent=179 // pred_check_branch
          %2973 = sbr.rel (%p2971) target = $region200
        $region199: #{tpu_custom_call.1} parent=179 // pred_region
          %s2974 = sand.u32 %s100, 1
          %s2975 = scalar_lea.sflag [#allocation23], %s2974
          %s2976 = sand.u32 %s889, 1
          %s2977 = smul.addr %s2976, 2
          %s2978 = scalar_lea.vmem [#allocation24], %s2977
          %2979 = dma.done %s2975, 32
        $region200: #{tpu_custom_call.1} parent=179 // pred_fallthru
          _
        // Predicated region
        $region201: #{tpu_custom_call.1} parent=179 // pred_check
          %p2980 = pneg %p930
        $region202: #{tpu_custom_call.1} parent=179 // pred_check_branch
          %2982 = sbr.rel (%p2980) target = $region204
        $region203: #{tpu_custom_call.1} parent=179 // pred_region
          %s2983 = sand.u32 %s100, 1
          %s2984 = scalar_lea.sflag [#allocation26], %s2983
          %s2985 = sand.u32 %s915, 1
          %s2986 = smul.addr %s2985, 2
          %s2987 = scalar_lea.vmem [#allocation25], %s2986
          %2988 = dma.done %s2984, 32
        $region204: #{tpu_custom_call.1} parent=179 // pred_fallthru
          _
        // Predicated region
        $region205: #{tpu_custom_call.1} parent=179 // pred_check
          %p2989 = pneg %p956
        $region206: #{tpu_custom_call.1} parent=179 // pred_check_branch
          %2991 = sbr.rel (%p2989) target = $region208
        $region207: #{tpu_custom_call.1} parent=179 // pred_region
          %s2992 = sand.u32 %s100, 1
          %s2993 = scalar_lea.sflag [#allocation26], %s2992
          %s2994 = sand.u32 %s941, 1
          %s2995 = smul.addr %s2994, 2
          %s2996 = scalar_lea.vmem [#allocation27], %s2995
          %2997 = dma.done %s2993, 32
        $region208: #{tpu_custom_call.1} parent=179 // pred_fallthru
          _
      $region180: #{tpu_custom_call.1} parent=5 // pred_fallthru
        _
    $region6: #{tpu_custom_call.1} parent=1 // loop_footer
      %s98 = sadd.s32 1, %s94
    $region7: #{tpu_custom_call.1} parent=1 // loop_footer_branch
      %93 = sbr.rel target = $region3
    $region8: #{tpu_custom_call.1} parent=1 // loop_exit
      _
    %2998 = vsyncpa [#allocation18], 1
    %s2999 = scalar_lea.sflag [#allocation18], 1
    %3000 = vsyncpa %s2999, 1
    %3001 = vsyncpa [#allocation20], 1
    %s3002 = scalar_lea.sflag [#allocation20], 1
    %3003 = vsyncpa %s3002, 1
    %3004 = vsyncpa [#allocation23], 1
    %s3005 = scalar_lea.sflag [#allocation23], 1
    %3006 = vsyncpa %s3005, 1
    %3007 = vsyncpa [#allocation26], 1
    %s3008 = scalar_lea.sflag [#allocation26], 1
    %3009 = vsyncpa %s3008, 1

</llo_original>
